<compile_context>
chip_gen: v7x
topology: tpu7x:2x2x1
jax: 0.10.0
libtpu: 0.0.40
codegen_flags: <defaults>
</compile_context>

<pallas_src>
import math

import jax
import jax.numpy as jnp
import numpy as np
from jax.experimental import pallas as pl
from jax.experimental.pallas import tpu as pltpu


# ----------------------------------------------------------------------------
# Bilinear x2 (align_corners=True) resize operators.
# ----------------------------------------------------------------------------
def upsample_matrix(n_in: int, n_out: int) -> np.ndarray:
    """(n_out, n_in) 1-D bilinear resize matrix, align_corners=True
    (matches torch.nn.Upsample(scale_factor=2, mode='bilinear', align_corners=True))."""
    if n_in == 1:
        return np.ones((n_out, 1), np.float32)
    pos = np.arange(n_out, dtype=np.float64) * (n_in - 1) / (n_out - 1)
    lo = np.minimum(np.floor(pos).astype(np.int64), n_in - 2)
    fr = pos - lo
    U = np.zeros((n_out, n_in), np.float64)
    U[np.arange(n_out), lo] += 1.0 - fr
    U[np.arange(n_out), lo + 1] += fr
    return U.astype(np.float32)


def _h_taps(n_in: int, n_out: int):
    """Static (lo, hi, frac) 2-tap coefficients for the H-direction lerp."""
    taps = []
    for o in range(n_out):
        if n_in == 1:
            taps.append((0, 0, 0.0))
            continue
        pos = o * (n_in - 1) / (n_out - 1)
        lo = min(int(math.floor(pos)), n_in - 2)
        taps.append((lo, lo + 1, float(pos - lo)))
    return taps


# ----------------------------------------------------------------------------
# Kernel.
# ----------------------------------------------------------------------------
def make_famca_kernel(bt: int, C: int, H: int, W: int):
    Ho, Wo = 2 * H, 2 * W
    taps = _h_taps(H, Ho)
    f32 = jnp.float32
    inv_hw = 1.0 / float(Ho * Wo)

    def lerp_relu(u_sc, lo, hi, fr):
        # Static leading-dim slices of a VMEM ref: zero-cost addressing.
        if fr == 0.0:
            row = u_sc[:, lo]
        elif fr == 1.0:
            row = u_sc[:, hi]
        else:
            row = u_sc[:, lo] * (1.0 - fr) + u_sc[:, hi] * fr
        return jnp.maximum(row, 0.0)                       # (bt, C, Wo), lane = Wo

    def kernel(x_ref, wct_ref, uwt_ref, w1t_ref, w2t_ref, o_ref, u_sc):
        # x_ref  : (bt*H*W, C)      f32  input rows (b, h, w) x channels
        # wct_ref: (C, C)           f32  1x1 conv weight, transposed (in, out)
        # uwt_ref: (W, Wo)          f32  W-direction bilinear resize matrix^T
        # w1t_ref: (C, C//4)        f32  fc.0 weight^T
        # w2t_ref: (C//4, C)        f32  fc.2 weight^T
        # o_ref  : (bt, C, Ho, Wo)       output block, NCHW, lane = Wo
        # u_sc   : (bt, H, C, Wo)   f32  VMEM scratch: W-resized conv output

        # --- 1x1 conv BEFORE the upsample (conv and bilinear resize commute):
        #     one (bt*H*W, C) @ (C, C) matmul on the 4x-smaller slab.
        v = jnp.dot(x_ref[...], wct_ref[...], preferred_element_type=f32)

        # --- channels<->width relayout on the small tensor (VMEM/XLU only),
        #     then the W-direction resize as a single weight-stationary matmul.
        vt = jnp.transpose(v.reshape(bt * H, W, C), (0, 2, 1))      # (bt*H, C, W)
        u = jnp.dot(vt.reshape(bt * H * C, W), uwt_ref[...],
                    preferred_element_type=f32)                     # (bt*H*C, Wo)
        u_sc[...] = u.reshape(bt, H, C, Wo)

        # --- pass 1: H-direction 2-tap lerp + ReLU, accumulate GAP sum only
        #     (no stores, no read-back of o_ref later).
        y_acc = jnp.zeros((bt, C, Wo), f32)
        for (lo, hi, fr) in taps:
            y_acc = y_acc + lerp_relu(u_sc, lo, hi, fr)
        y = jnp.sum(y_acc, axis=-1) * inv_hw                        # (bt, C)

        # --- SE gate: Linear -> ReLU -> Linear -> Sigmoid (tiny matmuls).
        h1 = jnp.maximum(jnp.dot(y, w1t_ref[...], preferred_element_type=f32), 0.0)
        s = jax.nn.sigmoid(jnp.dot(h1, w2t_ref[...], preferred_element_type=f32))
        s_full = jnp.broadcast_to(s[:, :, None], (bt, C, Wo))       # hoisted once

        # --- pass 2: recompute each output row and write gate * relu(row)
        #     exactly once (lane-dense along Wo, single store per element).
        for o, (lo, hi, fr) in enumerate(taps):
            z = lerp_relu(u_sc, lo, hi, fr)
            o_ref[:, :, o, :] = (z * s_full).astype(o_ref.dtype)

    return kernel


# ----------------------------------------------------------------------------
# VMEM sizing helpers (padded to (8, 128) tiles, per review).
# ----------------------------------------------------------------------------
def _round_up(x, m):
    return (x + m - 1) // m * m


def _padded_bytes(shape, itemsize=4):
    if len(shape) == 1:
        return _round_up(shape[0], 128) * 8 * itemsize
    *lead, s, l = shape
    n_lead = int(np.prod(lead)) if lead else 1
    return n_lead * _round_up(s, 8) * _round_up(l, 128) * itemsize


def _vmem_estimate(bt, C, H, W, C4):
    Ho, Wo = 2 * H, 2 * W
    est = 0
    est += 2 * _padded_bytes((bt * H * W, C))          # x block (double-buffered)
    est += 2 * _padded_bytes((bt, C, Ho, Wo))          # out block (double-buffered)
    est += _padded_bytes((C, C)) + _padded_bytes((W, Wo))
    est += _padded_bytes((C, C4)) + _padded_bytes((C4, C))   # single-buffered consts
    est += _padded_bytes((bt, H, C, Wo))               # u_sc scratch
    est += 3 * _padded_bytes((bt * H * C, max(W, Wo)))  # in-flight matmul values
    est += _padded_bytes((bt, C, Wo))                  # GAP accumulator
    return int(est * 1.5)                              # Mosaic internal scratch headroom


# ----------------------------------------------------------------------------
# Wrapper.
# ----------------------------------------------------------------------------
def famca_single(x_nchw, wc, w1, w2, *, batch_tile=None, out_dtype=jnp.float32):
    """x_nchw: (B, C, H, W) float32.  Returns (B, C, 2H, 2W) NCHW in out_dtype."""
    B, C, H, W = map(int, x_nchw.shape)
    Ho, Wo = 2 * H, 2 * W
    C4 = int(w1.shape[0])

    # VMEM budget: ~75% of the device's physical VMEM (128 MiB on v5e/v6e,
    # 64 MiB on v7x); conservative fallback if the query is unavailable.
    try:
        vmem_cap = int(pltpu.get_tpu_info().vmem_capacity_bytes)
    except Exception:
        vmem_cap = 64 << 20
    budget = int(vmem_cap * 0.75)

    # Batch tile: prefer >= 2 grid steps (two TensorCores on v7x; pipeline
    # overlap everywhere), shrinking until padded double-buffered blocks fit.
    if batch_tile is None:
        divisors = [d for d in range(B, 0, -1) if B % d == 0]
        prefer = [d for d in divisors if B // d >= 2] or divisors
        bt = next((d for d in prefer if _vmem_estimate(d, C, H, W, C4) <= budget),
                  prefer[-1])
    else:
        bt = int(batch_tile)
    assert B % bt == 0, "batch must be divisible by batch_tile"

    est = _vmem_estimate(bt, C, H, W, C4)
    vmem_limit = int(min(budget, max(32 << 20, 2 * est)))

    # Input relayout only (input-sized -> ~8x less HBM traffic than the output
    # transpose this kernel no longer needs): rows = (b, h, w), lane = C.
    x_rows = (jnp.transpose(x_nchw, (0, 2, 3, 1))
              .reshape(B * H * W, C).astype(jnp.float32))
    wct = jnp.asarray(wc, jnp.float32).T                       # (Cin, Cout)
    uwt = jnp.asarray(upsample_matrix(W, Wo), jnp.float32).T   # (W, Wo)
    w1t = jnp.asarray(w1, jnp.float32).T                       # (C, C4)
    w2t = jnp.asarray(w2, jnp.float32).T                       # (C4, C)

    kernel = make_famca_kernel(bt, C, H, W)

    def _const_spec(shape):
        index_map = lambda b: (0,) * len(shape)
        try:
            # Constants never change across grid steps -> single pipeline buffer.
            return pl.BlockSpec(shape, index_map, pipeline_mode=pl.Buffered(1))
        except (TypeError, AttributeError):
            return pl.BlockSpec(shape, index_map)

    flops = (2 * B * H * W * C * C            # 1x1 conv
             + 2 * B * H * C * W * Wo         # W-direction resize matmul
             + 2 * 5 * B * C * Ho * Wo        # two lerp+relu passes + gating
             + 4 * B * C * C4)                # SE gate matmuls
    bytes_accessed = (B * H * W * C * 4
                      + B * C * Ho * Wo * jnp.dtype(out_dtype).itemsize
                      + (C * C + W * Wo + 2 * C * C4) * 4)

    out = pl.pallas_call(
        kernel,
        out_shape=jax.ShapeDtypeStruct((B, C, Ho, Wo), out_dtype),
        grid_spec=pltpu.PrefetchScalarGridSpec(
            num_scalar_prefetch=0,
            grid=(B // bt,),
            in_specs=[
                pl.BlockSpec((bt * H * W, C), lambda b: (b, 0)),
                _const_spec((C, C)),
                _const_spec((W, Wo)),
                _const_spec((C, C4)),
                _const_spec((C4, C)),
            ],
            out_specs=pl.BlockSpec((bt, C, Ho, Wo), lambda b: (b, 0, 0, 0)),
            scratch_shapes=[pltpu.VMEM((bt, H, C, Wo), jnp.float32)],
        ),
        compiler_params=pltpu.CompilerParams(
            dimension_semantics=("parallel",),
            vmem_limit_bytes=vmem_limit),
        cost_estimate=pl.CostEstimate(
            flops=flops, transcendentals=B * C, bytes_accessed=bytes_accessed),
    )(x_rows, wct, uwt, w1t, w2t)

    return out  # already NCHW: no post-kernel transpose


# ----------------------------------------------------------------------------
# Pure-JAX reference (same math as the PyTorch module).
# ----------------------------------------------------------------------------
def ref_forward(x, wc, w1, w2):
    B, C, H, W = x.shape
    Uh = jnp.asarray(upsample_matrix(H, 2 * H))
    Uw = jnp.asarray(upsample_matrix(W, 2 * W))
    xu = jnp.einsum("oh,bchw->bcow", Uh, x)
    xu = jnp.einsum("pw,bchw->bchp", Uw, xu)
    z = jnp.maximum(jnp.einsum("oc,bchw->bohw", wc, xu), 0.0)
    y = z.mean(axis=(2, 3))
    h1 = jnp.maximum(y @ w1.T, 0.0)
    s = jax.nn.sigmoid(h1 @ w2.T)
    return z * s[:, :, None, None]


if __name__ == "__main__":
    B, C, H, W = 2, 8, 16, 16  # small demo shapes; C // 4 == 2

    key = jax.random.PRNGKey(0)
    kx, kc, k1, k2 = jax.random.split(key, 4)
    x = jax.random.normal(kx, (B, C, H, W), dtype=jnp.float32)
    # Synthetic parameters matching the module (all bias=False in forward()).
    wc = jax.random.normal(kc, (C, C), dtype=jnp.float32) * 0.2       # Conv2d(C, C, 1)
    w1 = jax.random.normal(k1, (C // 4, C), dtype=jnp.float32) * 0.2  # Linear(C, C//4)
    w2 = jax.random.normal(k2, (C, C // 4), dtype=jnp.float32) * 0.2  # Linear(C//4, C)

    out = jax.block_until_ready(famca_single(x, wc, w1, w2))
    ref = jax.block_until_ready(ref_forward(x, wc, w1, w2))

    assert out.shape == (B, C, 2 * H, 2 * W)
    # f32 throughout; tolerance covers default MXU matmul precision on both sides.
    assert jnp.allclose(out, ref, atol=2e-2, rtol=2e-2), \
        f"max abs err {jnp.max(jnp.abs(out - ref))}"

    print("KERNEL_OK")
</pallas_src>

<mosaic_0001>
module attributes {stable_mosaic.version = 11 : i64} {
  func.func @kernel(%arg0: i32, %arg1: memref<256x8xf32, #tpu.memory_space<vmem>>, %arg2: memref<8x8xf32, #tpu.memory_space<vmem>>, %arg3: memref<16x32xf32, #tpu.memory_space<vmem>>, %arg4: memref<8x2xf32, #tpu.memory_space<vmem>>, %arg5: memref<2x8xf32, #tpu.memory_space<vmem>>, %arg6: memref<1x8x32x32xf32, #tpu.memory_space<vmem>>, %arg7: memref<1x16x8x32xf32, #tpu.memory_space<vmem>>) attributes {dimension_semantics = [#tpu.dimension_semantics<parallel>], iteration_bounds = array<i64: 2>, scalar_prefetch = 0 : i64, scratch_operands = 1 : i64, tpu.core_type = #tpu.core_type<tc>, window_params = [{transform_indices = @transform_0, window_bounds = array<i64: 256, 8>}, {pipeline_mode = #tpu.pipeline_mode<synchronous>, transform_indices = @transform_1, window_bounds = array<i64: 8, 8>}, {pipeline_mode = #tpu.pipeline_mode<synchronous>, transform_indices = @transform_2, window_bounds = array<i64: 16, 32>}, {pipeline_mode = #tpu.pipeline_mode<synchronous>, transform_indices = @transform_3, window_bounds = array<i64: 8, 2>}, {pipeline_mode = #tpu.pipeline_mode<synchronous>, transform_indices = @transform_4, window_bounds = array<i64: 2, 8>}, {transform_indices = @transform_5, window_bounds = array<i64: 1, 8, 32, 32>}]} {
    %c0 = arith.constant 0 : index
    %c0_0 = arith.constant 0 : index
    %0 = vector.load %arg1[%c0, %c0_0] : memref<256x8xf32, #tpu.memory_space<vmem>>, vector<256x8xf32>
    %c0_1 = arith.constant 0 : index
    %c0_2 = arith.constant 0 : index
    %1 = vector.load %arg2[%c0_1, %c0_2] : memref<8x8xf32, #tpu.memory_space<vmem>>, vector<8x8xf32>
    %cst = arith.constant dense<0.000000e+00> : vector<256x8xf32>
    %2 = tpu.matmul %0, %1, %cst {dimension_numbers = #tpu.dot_dimension_numbers<[1], [0], [0], [1], [0, 0, 1, 1], [], []>} : vector<256x8xf32>, vector<8x8xf32>, vector<256x8xf32> -> vector<256x8xf32>
    %3 = vector.shape_cast %2 : vector<256x8xf32> to vector<16x16x8xf32>
    %4 = tpu.transpose %3, [0, 2, 1] : vector<16x16x8xf32> -> vector<16x8x16xf32>
    %5 = vector.shape_cast %4 : vector<16x8x16xf32> to vector<128x16xf32>
    %c0_3 = arith.constant 0 : index
    %c0_4 = arith.constant 0 : index
    %6 = vector.load %arg3[%c0_3, %c0_4] : memref<16x32xf32, #tpu.memory_space<vmem>>, vector<16x32xf32>
    %cst_5 = arith.constant dense<0.000000e+00> : vector<128x32xf32>
    %7 = tpu.matmul %5, %6, %cst_5 {dimension_numbers = #tpu.dot_dimension_numbers<[1], [0], [0], [1], [0, 0, 1, 1], [], []>} : vector<128x16xf32>, vector<16x32xf32>, vector<128x32xf32> -> vector<128x32xf32>
    %8 = vector.shape_cast %7 : vector<128x32xf32> to vector<1x16x8x32xf32>
    %c0_6 = arith.constant 0 : index
    %c0_7 = arith.constant 0 : index
    %c0_8 = arith.constant 0 : index
    %c0_9 = arith.constant 0 : index
    %9 = vector.load %arg7[%c0_6, %c0_7, %c0_8, %c0_9] : memref<1x16x8x32xf32, #tpu.memory_space<vmem>>, vector<1x16x8x32xf32>
    tpu.vector_store %arg7[%c0_6, %c0_7, %c0_8, %c0_9], %8 {strides = array<i32>} : memref<1x16x8x32xf32, #tpu.memory_space<vmem>>, vector<1x16x8x32xf32>,
    %cst_10 = arith.constant 0.000000e+00 : f32
    %10 = vector.broadcast %cst_10 : f32 to vector<1x8x32xf32>
    %c0_11 = arith.constant 0 : index
    %c0_12 = arith.constant 0 : index
    %c0_13 = arith.constant 0 : index
    %c0_14 = arith.constant 0 : index
    %11 = vector.load %arg7[%c0_11, %c0_12, %c0_13, %c0_14] : memref<1x16x8x32xf32, #tpu.memory_space<vmem>>, vector<1x1x8x32xf32>
    %12 = vector.shape_cast %11 : vector<1x1x8x32xf32> to vector<1x8x32xf32>
    %cst_15 = arith.constant 0.000000e+00 : f32
    %13 = vector.broadcast %cst_15 : f32 to vector<1x8x32xf32>
    %14 = arith.maximumf %12, %13 : vector<1x8x32xf32>
    %15 = arith.addf %10, %14 : vector<1x8x32xf32>
    %c0_16 = arith.constant 0 : index
    %c0_17 = arith.constant 0 : index
    %c0_18 = arith.constant 0 : index
    %c0_19 = arith.constant 0 : index
    %16 = vector.load %arg7[%c0_16, %c0_17, %c0_18, %c0_19] : memref<1x16x8x32xf32, #tpu.memory_space<vmem>>, vector<1x1x8x32xf32>
    %17 = vector.shape_cast %16 : vector<1x1x8x32xf32> to vector<1x8x32xf32>
    %cst_20 = arith.constant 5.161290e-01 : f32
    %18 = vector.broadcast %cst_20 : f32 to vector<1x8x32xf32>
    %19 = arith.mulf %17, %18 : vector<1x8x32xf32>
    %c0_21 = arith.constant 0 : index
    %c1 = arith.constant 1 : index
    %c0_22 = arith.constant 0 : index
    %c0_23 = arith.constant 0 : index
    %20 = vector.load %arg7[%c0_21, %c1, %c0_22, %c0_23] : memref<1x16x8x32xf32, #tpu.memory_space<vmem>>, vector<1x1x8x32xf32>
    %21 = vector.shape_cast %20 : vector<1x1x8x32xf32> to vector<1x8x32xf32>
    %cst_24 = arith.constant 0.483870953 : f32
    %22 = vector.broadcast %cst_24 : f32 to vector<1x8x32xf32>
    %23 = arith.mulf %21, %22 : vector<1x8x32xf32>
    %24 = arith.addf %19, %23 : vector<1x8x32xf32>
    %cst_25 = arith.constant 0.000000e+00 : f32
    %25 = vector.broadcast %cst_25 : f32 to vector<1x8x32xf32>
    %26 = arith.maximumf %24, %25 : vector<1x8x32xf32>
    %27 = arith.addf %15, %26 : vector<1x8x32xf32>
    %c0_26 = arith.constant 0 : index
    %c0_27 = arith.constant 0 : index
    %c0_28 = arith.constant 0 : index
    %c0_29 = arith.constant 0 : index
    %28 = vector.load %arg7[%c0_26, %c0_27, %c0_28, %c0_29] : memref<1x16x8x32xf32, #tpu.memory_space<vmem>>, vector<1x1x8x32xf32>
    %29 = vector.shape_cast %28 : vector<1x1x8x32xf32> to vector<1x8x32xf32>
    %cst_30 = arith.constant 0.0322580636 : f32
    %30 = vector.broadcast %cst_30 : f32 to vector<1x8x32xf32>
    %31 = arith.mulf %29, %30 : vector<1x8x32xf32>
    %c0_31 = arith.constant 0 : index
    %c1_32 = arith.constant 1 : index
    %c0_33 = arith.constant 0 : index
    %c0_34 = arith.constant 0 : index
    %32 = vector.load %arg7[%c0_31, %c1_32, %c0_33, %c0_34] : memref<1x16x8x32xf32, #tpu.memory_space<vmem>>, vector<1x1x8x32xf32>
    %33 = vector.shape_cast %32 : vector<1x1x8x32xf32> to vector<1x8x32xf32>
    %cst_35 = arith.constant 0.967741906 : f32
    %34 = vector.broadcast %cst_35 : f32 to vector<1x8x32xf32>
    %35 = arith.mulf %33, %34 : vector<1x8x32xf32>
    %36 = arith.addf %31, %35 : vector<1x8x32xf32>
    %cst_36 = arith.constant 0.000000e+00 : f32
    %37 = vector.broadcast %cst_36 : f32 to vector<1x8x32xf32>
    %38 = arith.maximumf %36, %37 : vector<1x8x32xf32>
    %39 = arith.addf %27, %38 : vector<1x8x32xf32>
    %c0_37 = arith.constant 0 : index
    %c1_38 = arith.constant 1 : index
    %c0_39 = arith.constant 0 : index
    %c0_40 = arith.constant 0 : index
    %40 = vector.load %arg7[%c0_37, %c1_38, %c0_39, %c0_40] : memref<1x16x8x32xf32, #tpu.memory_space<vmem>>, vector<1x1x8x32xf32>
    %41 = vector.shape_cast %40 : vector<1x1x8x32xf32> to vector<1x8x32xf32>
    %cst_41 = arith.constant 0.54838711 : f32
    %42 = vector.broadcast %cst_41 : f32 to vector<1x8x32xf32>
    %43 = arith.mulf %41, %42 : vector<1x8x32xf32>
    %c0_42 = arith.constant 0 : index
    %c2 = arith.constant 2 : index
    %c0_43 = arith.constant 0 : index
    %c0_44 = arith.constant 0 : index
    %44 = vector.load %arg7[%c0_42, %c2, %c0_43, %c0_44] : memref<1x16x8x32xf32, #tpu.memory_space<vmem>>, vector<1x1x8x32xf32>
    %45 = vector.shape_cast %44 : vector<1x1x8x32xf32> to vector<1x8x32xf32>
    %cst_45 = arith.constant 0.45161289 : f32
    %46 = vector.broadcast %cst_45 : f32 to vector<1x8x32xf32>
    %47 = arith.mulf %45, %46 : vector<1x8x32xf32>
    %48 = arith.addf %43, %47 : vector<1x8x32xf32>
    %cst_46 = arith.constant 0.000000e+00 : f32
    %49 = vector.broadcast %cst_46 : f32 to vector<1x8x32xf32>
    %50 = arith.maximumf %48, %49 : vector<1x8x32xf32>
    %51 = arith.addf %39, %50 : vector<1x8x32xf32>
    %c0_47 = arith.constant 0 : index
    %c1_48 = arith.constant 1 : index
    %c0_49 = arith.constant 0 : index
    %c0_50 = arith.constant 0 : index
    %52 = vector.load %arg7[%c0_47, %c1_48, %c0_49, %c0_50] : memref<1x16x8x32xf32, #tpu.memory_space<vmem>>, vector<1x1x8x32xf32>
    %53 = vector.shape_cast %52 : vector<1x1x8x32xf32> to vector<1x8x32xf32>
    %cst_51 = arith.constant 0.0645161271 : f32
    %54 = vector.broadcast %cst_51 : f32 to vector<1x8x32xf32>
    %55 = arith.mulf %53, %54 : vector<1x8x32xf32>
    %c0_52 = arith.constant 0 : index
    %c2_53 = arith.constant 2 : index
    %c0_54 = arith.constant 0 : index
    %c0_55 = arith.constant 0 : index
    %56 = vector.load %arg7[%c0_52, %c2_53, %c0_54, %c0_55] : memref<1x16x8x32xf32, #tpu.memory_space<vmem>>, vector<1x1x8x32xf32>
    %57 = vector.shape_cast %56 : vector<1x1x8x32xf32> to vector<1x8x32xf32>
    %cst_56 = arith.constant 0.935483872 : f32
    %58 = vector.broadcast %cst_56 : f32 to vector<1x8x32xf32>
    %59 = arith.mulf %57, %58 : vector<1x8x32xf32>
    %60 = arith.addf %55, %59 : vector<1x8x32xf32>
    %cst_57 = arith.constant 0.000000e+00 : f32
    %61 = vector.broadcast %cst_57 : f32 to vector<1x8x32xf32>
    %62 = arith.maximumf %60, %61 : vector<1x8x32xf32>
    %63 = arith.addf %51, %62 : vector<1x8x32xf32>
    %c0_58 = arith.constant 0 : index
    %c2_59 = arith.constant 2 : index
    %c0_60 = arith.constant 0 : index
    %c0_61 = arith.constant 0 : index
    %64 = vector.load %arg7[%c0_58, %c2_59, %c0_60, %c0_61] : memref<1x16x8x32xf32, #tpu.memory_space<vmem>>, vector<1x1x8x32xf32>
    %65 = vector.shape_cast %64 : vector<1x1x8x32xf32> to vector<1x8x32xf32>
    %cst_62 = arith.constant 0.580645144 : f32
    %66 = vector.broadcast %cst_62 : f32 to vector<1x8x32xf32>
    %67 = arith.mulf %65, %66 : vector<1x8x32xf32>
    %c0_63 = arith.constant 0 : index
    %c3 = arith.constant 3 : index
    %c0_64 = arith.constant 0 : index
    %c0_65 = arith.constant 0 : index
    %68 = vector.load %arg7[%c0_63, %c3, %c0_64, %c0_65] : memref<1x16x8x32xf32, #tpu.memory_space<vmem>>, vector<1x1x8x32xf32>
    %69 = vector.shape_cast %68 : vector<1x1x8x32xf32> to vector<1x8x32xf32>
    %cst_66 = arith.constant 0.419354826 : f32
    %70 = vector.broadcast %cst_66 : f32 to vector<1x8x32xf32>
    %71 = arith.mulf %69, %70 : vector<1x8x32xf32>
    %72 = arith.addf %67, %71 : vector<1x8x32xf32>
    %cst_67 = arith.constant 0.000000e+00 : f32
    %73 = vector.broadcast %cst_67 : f32 to vector<1x8x32xf32>
    %74 = arith.maximumf %72, %73 : vector<1x8x32xf32>
    %75 = arith.addf %63, %74 : vector<1x8x32xf32>
    %c0_68 = arith.constant 0 : index
    %c2_69 = arith.constant 2 : index
    %c0_70 = arith.constant 0 : index
    %c0_71 = arith.constant 0 : index
    %76 = vector.load %arg7[%c0_68, %c2_69, %c0_70, %c0_71] : memref<1x16x8x32xf32, #tpu.memory_space<vmem>>, vector<1x1x8x32xf32>
    %77 = vector.shape_cast %76 : vector<1x1x8x32xf32> to vector<1x8x32xf32>
    %cst_72 = arith.constant 0.0967741906 : f32
    %78 = vector.broadcast %cst_72 : f32 to vector<1x8x32xf32>
    %79 = arith.mulf %77, %78 : vector<1x8x32xf32>
    %c0_73 = arith.constant 0 : index
    %c3_74 = arith.constant 3 : index
    %c0_75 = arith.constant 0 : index
    %c0_76 = arith.constant 0 : index
    %80 = vector.load %arg7[%c0_73, %c3_74, %c0_75, %c0_76] : memref<1x16x8x32xf32, #tpu.memory_space<vmem>>, vector<1x1x8x32xf32>
    %81 = vector.shape_cast %80 : vector<1x1x8x32xf32> to vector<1x8x32xf32>
    %cst_77 = arith.constant 0.903225779 : f32
    %82 = vector.broadcast %cst_77 : f32 to vector<1x8x32xf32>
    %83 = arith.mulf %81, %82 : vector<1x8x32xf32>
    %84 = arith.addf %79, %83 : vector<1x8x32xf32>
    %cst_78 = arith.constant 0.000000e+00 : f32
    %85 = vector.broadcast %cst_78 : f32 to vector<1x8x32xf32>
    %86 = arith.maximumf %84, %85 : vector<1x8x32xf32>
    %87 = arith.addf %75, %86 : vector<1x8x32xf32>
    %c0_79 = arith.constant 0 : index
    %c3_80 = arith.constant 3 : index
    %c0_81 = arith.constant 0 : index
    %c0_82 = arith.constant 0 : index
    %88 = vector.load %arg7[%c0_79, %c3_80, %c0_81, %c0_82] : memref<1x16x8x32xf32, #tpu.memory_space<vmem>>, vector<1x1x8x32xf32>
    %89 = vector.shape_cast %88 : vector<1x1x8x32xf32> to vector<1x8x32xf32>
    %cst_83 = arith.constant 0.612903237 : f32
    %90 = vector.broadcast %cst_83 : f32 to vector<1x8x32xf32>
    %91 = arith.mulf %89, %90 : vector<1x8x32xf32>
    %c0_84 = arith.constant 0 : index
    %c4 = arith.constant 4 : index
    %c0_85 = arith.constant 0 : index
    %c0_86 = arith.constant 0 : index
    %92 = vector.load %arg7[%c0_84, %c4, %c0_85, %c0_86] : memref<1x16x8x32xf32, #tpu.memory_space<vmem>>, vector<1x1x8x32xf32>
    %93 = vector.shape_cast %92 : vector<1x1x8x32xf32> to vector<1x8x32xf32>
    %cst_87 = arith.constant 0.387096763 : f32
    %94 = vector.broadcast %cst_87 : f32 to vector<1x8x32xf32>
    %95 = arith.mulf %93, %94 : vector<1x8x32xf32>
    %96 = arith.addf %91, %95 : vector<1x8x32xf32>
    %cst_88 = arith.constant 0.000000e+00 : f32
    %97 = vector.broadcast %cst_88 : f32 to vector<1x8x32xf32>
    %98 = arith.maximumf %96, %97 : vector<1x8x32xf32>
    %99 = arith.addf %87, %98 : vector<1x8x32xf32>
    %c0_89 = arith.constant 0 : index
    %c3_90 = arith.constant 3 : index
    %c0_91 = arith.constant 0 : index
    %c0_92 = arith.constant 0 : index
    %100 = vector.load %arg7[%c0_89, %c3_90, %c0_91, %c0_92] : memref<1x16x8x32xf32, #tpu.memory_space<vmem>>, vector<1x1x8x32xf32>
    %101 = vector.shape_cast %100 : vector<1x1x8x32xf32> to vector<1x8x32xf32>
    %cst_93 = arith.constant 0.129032254 : f32
    %102 = vector.broadcast %cst_93 : f32 to vector<1x8x32xf32>
    %103 = arith.mulf %101, %102 : vector<1x8x32xf32>
    %c0_94 = arith.constant 0 : index
    %c4_95 = arith.constant 4 : index
    %c0_96 = arith.constant 0 : index
    %c0_97 = arith.constant 0 : index
    %104 = vector.load %arg7[%c0_94, %c4_95, %c0_96, %c0_97] : memref<1x16x8x32xf32, #tpu.memory_space<vmem>>, vector<1x1x8x32xf32>
    %105 = vector.shape_cast %104 : vector<1x1x8x32xf32> to vector<1x8x32xf32>
    %cst_98 = arith.constant 0.870967745 : f32
    %106 = vector.broadcast %cst_98 : f32 to vector<1x8x32xf32>
    %107 = arith.mulf %105, %106 : vector<1x8x32xf32>
    %108 = arith.addf %103, %107 : vector<1x8x32xf32>
    %cst_99 = arith.constant 0.000000e+00 : f32
    %109 = vector.broadcast %cst_99 : f32 to vector<1x8x32xf32>
    %110 = arith.maximumf %108, %109 : vector<1x8x32xf32>
    %111 = arith.addf %99, %110 : vector<1x8x32xf32>
    %c0_100 = arith.constant 0 : index
    %c4_101 = arith.constant 4 : index
    %c0_102 = arith.constant 0 : index
    %c0_103 = arith.constant 0 : index
    %112 = vector.load %arg7[%c0_100, %c4_101, %c0_102, %c0_103] : memref<1x16x8x32xf32, #tpu.memory_space<vmem>>, vector<1x1x8x32xf32>
    %113 = vector.shape_cast %112 : vector<1x1x8x32xf32> to vector<1x8x32xf32>
    %cst_104 = arith.constant 0.645161271 : f32
    %114 = vector.broadcast %cst_104 : f32 to vector<1x8x32xf32>
    %115 = arith.mulf %113, %114 : vector<1x8x32xf32>
    %c0_105 = arith.constant 0 : index
    %c5 = arith.constant 5 : index
    %c0_106 = arith.constant 0 : index
    %c0_107 = arith.constant 0 : index
    %116 = vector.load %arg7[%c0_105, %c5, %c0_106, %c0_107] : memref<1x16x8x32xf32, #tpu.memory_space<vmem>>, vector<1x1x8x32xf32>
    %117 = vector.shape_cast %116 : vector<1x1x8x32xf32> to vector<1x8x32xf32>
    %cst_108 = arith.constant 0.354838699 : f32
    %118 = vector.broadcast %cst_108 : f32 to vector<1x8x32xf32>
    %119 = arith.mulf %117, %118 : vector<1x8x32xf32>
    %120 = arith.addf %115, %119 : vector<1x8x32xf32>
    %cst_109 = arith.constant 0.000000e+00 : f32
    %121 = vector.broadcast %cst_109 : f32 to vector<1x8x32xf32>
    %122 = arith.maximumf %120, %121 : vector<1x8x32xf32>
    %123 = arith.addf %111, %122 : vector<1x8x32xf32>
    %c0_110 = arith.constant 0 : index
    %c4_111 = arith.constant 4 : index
    %c0_112 = arith.constant 0 : index
    %c0_113 = arith.constant 0 : index
    %124 = vector.load %arg7[%c0_110, %c4_111, %c0_112, %c0_113] : memref<1x16x8x32xf32, #tpu.memory_space<vmem>>, vector<1x1x8x32xf32>
    %125 = vector.shape_cast %124 : vector<1x1x8x32xf32> to vector<1x8x32xf32>
    %cst_114 = arith.constant 0.161290318 : f32
    %126 = vector.broadcast %cst_114 : f32 to vector<1x8x32xf32>
    %127 = arith.mulf %125, %126 : vector<1x8x32xf32>
    %c0_115 = arith.constant 0 : index
    %c5_116 = arith.constant 5 : index
    %c0_117 = arith.constant 0 : index
    %c0_118 = arith.constant 0 : index
    %128 = vector.load %arg7[%c0_115, %c5_116, %c0_117, %c0_118] : memref<1x16x8x32xf32, #tpu.memory_space<vmem>>, vector<1x1x8x32xf32>
    %129 = vector.shape_cast %128 : vector<1x1x8x32xf32> to vector<1x8x32xf32>
    %cst_119 = arith.constant 0.838709652 : f32
    %130 = vector.broadcast %cst_119 : f32 to vector<1x8x32xf32>
    %131 = arith.mulf %129, %130 : vector<1x8x32xf32>
    %132 = arith.addf %127, %131 : vector<1x8x32xf32>
    %cst_120 = arith.constant 0.000000e+00 : f32
    %133 = vector.broadcast %cst_120 : f32 to vector<1x8x32xf32>
    %134 = arith.maximumf %132, %133 : vector<1x8x32xf32>
    %135 = arith.addf %123, %134 : vector<1x8x32xf32>
    %c0_121 = arith.constant 0 : index
    %c5_122 = arith.constant 5 : index
    %c0_123 = arith.constant 0 : index
    %c0_124 = arith.constant 0 : index
    %136 = vector.load %arg7[%c0_121, %c5_122, %c0_123, %c0_124] : memref<1x16x8x32xf32, #tpu.memory_space<vmem>>, vector<1x1x8x32xf32>
    %137 = vector.shape_cast %136 : vector<1x1x8x32xf32> to vector<1x8x32xf32>
    %cst_125 = arith.constant 0.677419364 : f32
    %138 = vector.broadcast %cst_125 : f32 to vector<1x8x32xf32>
    %139 = arith.mulf %137, %138 : vector<1x8x32xf32>
    %c0_126 = arith.constant 0 : index
    %c6 = arith.constant 6 : index
    %c0_127 = arith.constant 0 : index
    %c0_128 = arith.constant 0 : index
    %140 = vector.load %arg7[%c0_126, %c6, %c0_127, %c0_128] : memref<1x16x8x32xf32, #tpu.memory_space<vmem>>, vector<1x1x8x32xf32>
    %141 = vector.shape_cast %140 : vector<1x1x8x32xf32> to vector<1x8x32xf32>
    %cst_129 = arith.constant 0.322580636 : f32
    %142 = vector.broadcast %cst_129 : f32 to vector<1x8x32xf32>
    %143 = arith.mulf %141, %142 : vector<1x8x32xf32>
    %144 = arith.addf %139, %143 : vector<1x8x32xf32>
    %cst_130 = arith.constant 0.000000e+00 : f32
    %145 = vector.broadcast %cst_130 : f32 to vector<1x8x32xf32>
    %146 = arith.maximumf %144, %145 : vector<1x8x32xf32>
    %147 = arith.addf %135, %146 : vector<1x8x32xf32>
    %c0_131 = arith.constant 0 : index
    %c5_132 = arith.constant 5 : index
    %c0_133 = arith.constant 0 : index
    %c0_134 = arith.constant 0 : index
    %148 = vector.load %arg7[%c0_131, %c5_132, %c0_133, %c0_134] : memref<1x16x8x32xf32, #tpu.memory_space<vmem>>, vector<1x1x8x32xf32>
    %149 = vector.shape_cast %148 : vector<1x1x8x32xf32> to vector<1x8x32xf32>
    %cst_135 = arith.constant 0.193548381 : f32
    %150 = vector.broadcast %cst_135 : f32 to vector<1x8x32xf32>
    %151 = arith.mulf %149, %150 : vector<1x8x32xf32>
    %c0_136 = arith.constant 0 : index
    %c6_137 = arith.constant 6 : index
    %c0_138 = arith.constant 0 : index
    %c0_139 = arith.constant 0 : index
    %152 = vector.load %arg7[%c0_136, %c6_137, %c0_138, %c0_139] : memref<1x16x8x32xf32, #tpu.memory_space<vmem>>, vector<1x1x8x32xf32>
    %153 = vector.shape_cast %152 : vector<1x1x8x32xf32> to vector<1x8x32xf32>
    %cst_140 = arith.constant 0.806451618 : f32
    %154 = vector.broadcast %cst_140 : f32 to vector<1x8x32xf32>
    %155 = arith.mulf %153, %154 : vector<1x8x32xf32>
    %156 = arith.addf %151, %155 : vector<1x8x32xf32>
    %cst_141 = arith.constant 0.000000e+00 : f32
    %157 = vector.broadcast %cst_141 : f32 to vector<1x8x32xf32>
    %158 = arith.maximumf %156, %157 : vector<1x8x32xf32>
    %159 = arith.addf %147, %158 : vector<1x8x32xf32>
    %c0_142 = arith.constant 0 : index
    %c6_143 = arith.constant 6 : index
    %c0_144 = arith.constant 0 : index
    %c0_145 = arith.constant 0 : index
    %160 = vector.load %arg7[%c0_142, %c6_143, %c0_144, %c0_145] : memref<1x16x8x32xf32, #tpu.memory_space<vmem>>, vector<1x1x8x32xf32>
    %161 = vector.shape_cast %160 : vector<1x1x8x32xf32> to vector<1x8x32xf32>
    %cst_146 = arith.constant 0.709677398 : f32
    %162 = vector.broadcast %cst_146 : f32 to vector<1x8x32xf32>
    %163 = arith.mulf %161, %162 : vector<1x8x32xf32>
    %c0_147 = arith.constant 0 : index
    %c7 = arith.constant 7 : index
    %c0_148 = arith.constant 0 : index
    %c0_149 = arith.constant 0 : index
    %164 = vector.load %arg7[%c0_147, %c7, %c0_148, %c0_149] : memref<1x16x8x32xf32, #tpu.memory_space<vmem>>, vector<1x1x8x32xf32>
    %165 = vector.shape_cast %164 : vector<1x1x8x32xf32> to vector<1x8x32xf32>
    %cst_150 = arith.constant 0.290322572 : f32
    %166 = vector.broadcast %cst_150 : f32 to vector<1x8x32xf32>
    %167 = arith.mulf %165, %166 : vector<1x8x32xf32>
    %168 = arith.addf %163, %167 : vector<1x8x32xf32>
    %cst_151 = arith.constant 0.000000e+00 : f32
    %169 = vector.broadcast %cst_151 : f32 to vector<1x8x32xf32>
    %170 = arith.maximumf %168, %169 : vector<1x8x32xf32>
    %171 = arith.addf %159, %170 : vector<1x8x32xf32>
    %c0_152 = arith.constant 0 : index
    %c6_153 = arith.constant 6 : index
    %c0_154 = arith.constant 0 : index
    %c0_155 = arith.constant 0 : index
    %172 = vector.load %arg7[%c0_152, %c6_153, %c0_154, %c0_155] : memref<1x16x8x32xf32, #tpu.memory_space<vmem>>, vector<1x1x8x32xf32>
    %173 = vector.shape_cast %172 : vector<1x1x8x32xf32> to vector<1x8x32xf32>
    %cst_156 = arith.constant 0.225806445 : f32
    %174 = vector.broadcast %cst_156 : f32 to vector<1x8x32xf32>
    %175 = arith.mulf %173, %174 : vector<1x8x32xf32>
    %c0_157 = arith.constant 0 : index
    %c7_158 = arith.constant 7 : index
    %c0_159 = arith.constant 0 : index
    %c0_160 = arith.constant 0 : index
    %176 = vector.load %arg7[%c0_157, %c7_158, %c0_159, %c0_160] : memref<1x16x8x32xf32, #tpu.memory_space<vmem>>, vector<1x1x8x32xf32>
    %177 = vector.shape_cast %176 : vector<1x1x8x32xf32> to vector<1x8x32xf32>
    %cst_161 = arith.constant 0.774193525 : f32
    %178 = vector.broadcast %cst_161 : f32 to vector<1x8x32xf32>
    %179 = arith.mulf %177, %178 : vector<1x8x32xf32>
    %180 = arith.addf %175, %179 : vector<1x8x32xf32>
    %cst_162 = arith.constant 0.000000e+00 : f32
    %181 = vector.broadcast %cst_162 : f32 to vector<1x8x32xf32>
    %182 = arith.maximumf %180, %181 : vector<1x8x32xf32>
    %183 = arith.addf %171, %182 : vector<1x8x32xf32>
    %c0_163 = arith.constant 0 : index
    %c7_164 = arith.constant 7 : index
    %c0_165 = arith.constant 0 : index
    %c0_166 = arith.constant 0 : index
    %184 = vector.load %arg7[%c0_163, %c7_164, %c0_165, %c0_166] : memref<1x16x8x32xf32, #tpu.memory_space<vmem>>, vector<1x1x8x32xf32>
    %185 = vector.shape_cast %184 : vector<1x1x8x32xf32> to vector<1x8x32xf32>
    %cst_167 = arith.constant 0.741935492 : f32
    %186 = vector.broadcast %cst_167 : f32 to vector<1x8x32xf32>
    %187 = arith.mulf %185, %186 : vector<1x8x32xf32>
    %c0_168 = arith.constant 0 : index
    %c8 = arith.constant 8 : index
    %c0_169 = arith.constant 0 : index
    %c0_170 = arith.constant 0 : index
    %188 = vector.load %arg7[%c0_168, %c8, %c0_169, %c0_170] : memref<1x16x8x32xf32, #tpu.memory_space<vmem>>, vector<1x1x8x32xf32>
    %189 = vector.shape_cast %188 : vector<1x1x8x32xf32> to vector<1x8x32xf32>
    %cst_171 = arith.constant 0.258064508 : f32
    %190 = vector.broadcast %cst_171 : f32 to vector<1x8x32xf32>
    %191 = arith.mulf %189, %190 : vector<1x8x32xf32>
    %192 = arith.addf %187, %191 : vector<1x8x32xf32>
    %cst_172 = arith.constant 0.000000e+00 : f32
    %193 = vector.broadcast %cst_172 : f32 to vector<1x8x32xf32>
    %194 = arith.maximumf %192, %193 : vector<1x8x32xf32>
    %195 = arith.addf %183, %194 : vector<1x8x32xf32>
    %c0_173 = arith.constant 0 : index
    %c7_174 = arith.constant 7 : index
    %c0_175 = arith.constant 0 : index
    %c0_176 = arith.constant 0 : index
    %196 = vector.load %arg7[%c0_173, %c7_174, %c0_175, %c0_176] : memref<1x16x8x32xf32, #tpu.memory_space<vmem>>, vector<1x1x8x32xf32>
    %197 = vector.shape_cast %196 : vector<1x1x8x32xf32> to vector<1x8x32xf32>
    %cst_177 = arith.constant 0.258064508 : f32
    %198 = vector.broadcast %cst_177 : f32 to vector<1x8x32xf32>
    %199 = arith.mulf %197, %198 : vector<1x8x32xf32>
    %c0_178 = arith.constant 0 : index
    %c8_179 = arith.constant 8 : index
    %c0_180 = arith.constant 0 : index
    %c0_181 = arith.constant 0 : index
    %200 = vector.load %arg7[%c0_178, %c8_179, %c0_180, %c0_181] : memref<1x16x8x32xf32, #tpu.memory_space<vmem>>, vector<1x1x8x32xf32>
    %201 = vector.shape_cast %200 : vector<1x1x8x32xf32> to vector<1x8x32xf32>
    %cst_182 = arith.constant 0.741935492 : f32
    %202 = vector.broadcast %cst_182 : f32 to vector<1x8x32xf32>
    %203 = arith.mulf %201, %202 : vector<1x8x32xf32>
    %204 = arith.addf %199, %203 : vector<1x8x32xf32>
    %cst_183 = arith.constant 0.000000e+00 : f32
    %205 = vector.broadcast %cst_183 : f32 to vector<1x8x32xf32>
    %206 = arith.maximumf %204, %205 : vector<1x8x32xf32>
    %207 = arith.addf %195, %206 : vector<1x8x32xf32>
    %c0_184 = arith.constant 0 : index
    %c8_185 = arith.constant 8 : index
    %c0_186 = arith.constant 0 : index
    %c0_187 = arith.constant 0 : index
    %208 = vector.load %arg7[%c0_184, %c8_185, %c0_186, %c0_187] : memref<1x16x8x32xf32, #tpu.memory_space<vmem>>, vector<1x1x8x32xf32>
    %209 = vector.shape_cast %208 : vector<1x1x8x32xf32> to vector<1x8x32xf32>
    %cst_188 = arith.constant 0.774193525 : f32
    %210 = vector.broadcast %cst_188 : f32 to vector<1x8x32xf32>
    %211 = arith.mulf %209, %210 : vector<1x8x32xf32>
    %c0_189 = arith.constant 0 : index
    %c9 = arith.constant 9 : index
    %c0_190 = arith.constant 0 : index
    %c0_191 = arith.constant 0 : index
    %212 = vector.load %arg7[%c0_189, %c9, %c0_190, %c0_191] : memref<1x16x8x32xf32, #tpu.memory_space<vmem>>, vector<1x1x8x32xf32>
    %213 = vector.shape_cast %212 : vector<1x1x8x32xf32> to vector<1x8x32xf32>
    %cst_192 = arith.constant 0.225806445 : f32
    %214 = vector.broadcast %cst_192 : f32 to vector<1x8x32xf32>
    %215 = arith.mulf %213, %214 : vector<1x8x32xf32>
    %216 = arith.addf %211, %215 : vector<1x8x32xf32>
    %cst_193 = arith.constant 0.000000e+00 : f32
    %217 = vector.broadcast %cst_193 : f32 to vector<1x8x32xf32>
    %218 = arith.maximumf %216, %217 : vector<1x8x32xf32>
    %219 = arith.addf %207, %218 : vector<1x8x32xf32>
    %c0_194 = arith.constant 0 : index
    %c8_195 = arith.constant 8 : index
    %c0_196 = arith.constant 0 : index
    %c0_197 = arith.constant 0 : index
    %220 = vector.load %arg7[%c0_194, %c8_195, %c0_196, %c0_197] : memref<1x16x8x32xf32, #tpu.memory_space<vmem>>, vector<1x1x8x32xf32>
    %221 = vector.shape_cast %220 : vector<1x1x8x32xf32> to vector<1x8x32xf32>
    %cst_198 = arith.constant 0.290322572 : f32
    %222 = vector.broadcast %cst_198 : f32 to vector<1x8x32xf32>
    %223 = arith.mulf %221, %222 : vector<1x8x32xf32>
    %c0_199 = arith.constant 0 : index
    %c9_200 = arith.constant 9 : index
    %c0_201 = arith.constant 0 : index
    %c0_202 = arith.constant 0 : index
    %224 = vector.load %arg7[%c0_199, %c9_200, %c0_201, %c0_202] : memref<1x16x8x32xf32, #tpu.memory_space<vmem>>, vector<1x1x8x32xf32>
    %225 = vector.shape_cast %224 : vector<1x1x8x32xf32> to vector<1x8x32xf32>
    %cst_203 = arith.constant 0.709677398 : f32
    %226 = vector.broadcast %cst_203 : f32 to vector<1x8x32xf32>
    %227 = arith.mulf %225, %226 : vector<1x8x32xf32>
    %228 = arith.addf %223, %227 : vector<1x8x32xf32>
    %cst_204 = arith.constant 0.000000e+00 : f32
    %229 = vector.broadcast %cst_204 : f32 to vector<1x8x32xf32>
    %230 = arith.maximumf %228, %229 : vector<1x8x32xf32>
    %231 = arith.addf %219, %230 : vector<1x8x32xf32>
    %c0_205 = arith.constant 0 : index
    %c9_206 = arith.constant 9 : index
    %c0_207 = arith.constant 0 : index
    %c0_208 = arith.constant 0 : index
    %232 = vector.load %arg7[%c0_205, %c9_206, %c0_207, %c0_208] : memref<1x16x8x32xf32, #tpu.memory_space<vmem>>, vector<1x1x8x32xf32>
    %233 = vector.shape_cast %232 : vector<1x1x8x32xf32> to vector<1x8x32xf32>
    %cst_209 = arith.constant 0.806451618 : f32
    %234 = vector.broadcast %cst_209 : f32 to vector<1x8x32xf32>
    %235 = arith.mulf %233, %234 : vector<1x8x32xf32>
    %c0_210 = arith.constant 0 : index
    %c10 = arith.constant 10 : index
    %c0_211 = arith.constant 0 : index
    %c0_212 = arith.constant 0 : index
    %236 = vector.load %arg7[%c0_210, %c10, %c0_211, %c0_212] : memref<1x16x8x32xf32, #tpu.memory_space<vmem>>, vector<1x1x8x32xf32>
    %237 = vector.shape_cast %236 : vector<1x1x8x32xf32> to vector<1x8x32xf32>
    %cst_213 = arith.constant 0.193548381 : f32
    %238 = vector.broadcast %cst_213 : f32 to vector<1x8x32xf32>
    %239 = arith.mulf %237, %238 : vector<1x8x32xf32>
    %240 = arith.addf %235, %239 : vector<1x8x32xf32>
    %cst_214 = arith.constant 0.000000e+00 : f32
    %241 = vector.broadcast %cst_214 : f32 to vector<1x8x32xf32>
    %242 = arith.maximumf %240, %241 : vector<1x8x32xf32>
    %243 = arith.addf %231, %242 : vector<1x8x32xf32>
    %c0_215 = arith.constant 0 : index
    %c9_216 = arith.constant 9 : index
    %c0_217 = arith.constant 0 : index
    %c0_218 = arith.constant 0 : index
    %244 = vector.load %arg7[%c0_215, %c9_216, %c0_217, %c0_218] : memref<1x16x8x32xf32, #tpu.memory_space<vmem>>, vector<1x1x8x32xf32>
    %245 = vector.shape_cast %244 : vector<1x1x8x32xf32> to vector<1x8x32xf32>
    %cst_219 = arith.constant 0.322580636 : f32
    %246 = vector.broadcast %cst_219 : f32 to vector<1x8x32xf32>
    %247 = arith.mulf %245, %246 : vector<1x8x32xf32>
    %c0_220 = arith.constant 0 : index
    %c10_221 = arith.constant 10 : index
    %c0_222 = arith.constant 0 : index
    %c0_223 = arith.constant 0 : index
    %248 = vector.load %arg7[%c0_220, %c10_221, %c0_222, %c0_223] : memref<1x16x8x32xf32, #tpu.memory_space<vmem>>, vector<1x1x8x32xf32>
    %249 = vector.shape_cast %248 : vector<1x1x8x32xf32> to vector<1x8x32xf32>
    %cst_224 = arith.constant 0.677419364 : f32
    %250 = vector.broadcast %cst_224 : f32 to vector<1x8x32xf32>
    %251 = arith.mulf %249, %250 : vector<1x8x32xf32>
    %252 = arith.addf %247, %251 : vector<1x8x32xf32>
    %cst_225 = arith.constant 0.000000e+00 : f32
    %253 = vector.broadcast %cst_225 : f32 to vector<1x8x32xf32>
    %254 = arith.maximumf %252, %253 : vector<1x8x32xf32>
    %255 = arith.addf %243, %254 : vector<1x8x32xf32>
    %c0_226 = arith.constant 0 : index
    %c10_227 = arith.constant 10 : index
    %c0_228 = arith.constant 0 : index
    %c0_229 = arith.constant 0 : index
    %256 = vector.load %arg7[%c0_226, %c10_227, %c0_228, %c0_229] : memref<1x16x8x32xf32, #tpu.memory_space<vmem>>, vector<1x1x8x32xf32>
    %257 = vector.shape_cast %256 : vector<1x1x8x32xf32> to vector<1x8x32xf32>
    %cst_230 = arith.constant 0.838709652 : f32
    %258 = vector.broadcast %cst_230 : f32 to vector<1x8x32xf32>
    %259 = arith.mulf %257, %258 : vector<1x8x32xf32>
    %c0_231 = arith.constant 0 : index
    %c11 = arith.constant 11 : index
    %c0_232 = arith.constant 0 : index
    %c0_233 = arith.constant 0 : index
    %260 = vector.load %arg7[%c0_231, %c11, %c0_232, %c0_233] : memref<1x16x8x32xf32, #tpu.memory_space<vmem>>, vector<1x1x8x32xf32>
    %261 = vector.shape_cast %260 : vector<1x1x8x32xf32> to vector<1x8x32xf32>
    %cst_234 = arith.constant 0.161290318 : f32
    %262 = vector.broadcast %cst_234 : f32 to vector<1x8x32xf32>
    %263 = arith.mulf %261, %262 : vector<1x8x32xf32>
    %264 = arith.addf %259, %263 : vector<1x8x32xf32>
    %cst_235 = arith.constant 0.000000e+00 : f32
    %265 = vector.broadcast %cst_235 : f32 to vector<1x8x32xf32>
    %266 = arith.maximumf %264, %265 : vector<1x8x32xf32>
    %267 = arith.addf %255, %266 : vector<1x8x32xf32>
    %c0_236 = arith.constant 0 : index
    %c10_237 = arith.constant 10 : index
    %c0_238 = arith.constant 0 : index
    %c0_239 = arith.constant 0 : index
    %268 = vector.load %arg7[%c0_236, %c10_237, %c0_238, %c0_239] : memref<1x16x8x32xf32, #tpu.memory_space<vmem>>, vector<1x1x8x32xf32>
    %269 = vector.shape_cast %268 : vector<1x1x8x32xf32> to vector<1x8x32xf32>
    %cst_240 = arith.constant 0.354838699 : f32
    %270 = vector.broadcast %cst_240 : f32 to vector<1x8x32xf32>
    %271 = arith.mulf %269, %270 : vector<1x8x32xf32>
    %c0_241 = arith.constant 0 : index
    %c11_242 = arith.constant 11 : index
    %c0_243 = arith.constant 0 : index
    %c0_244 = arith.constant 0 : index
    %272 = vector.load %arg7[%c0_241, %c11_242, %c0_243, %c0_244] : memref<1x16x8x32xf32, #tpu.memory_space<vmem>>, vector<1x1x8x32xf32>
    %273 = vector.shape_cast %272 : vector<1x1x8x32xf32> to vector<1x8x32xf32>
    %cst_245 = arith.constant 0.645161271 : f32
    %274 = vector.broadcast %cst_245 : f32 to vector<1x8x32xf32>
    %275 = arith.mulf %273, %274 : vector<1x8x32xf32>
    %276 = arith.addf %271, %275 : vector<1x8x32xf32>
    %cst_246 = arith.constant 0.000000e+00 : f32
    %277 = vector.broadcast %cst_246 : f32 to vector<1x8x32xf32>
    %278 = arith.maximumf %276, %277 : vector<1x8x32xf32>
    %279 = arith.addf %267, %278 : vector<1x8x32xf32>
    %c0_247 = arith.constant 0 : index
    %c11_248 = arith.constant 11 : index
    %c0_249 = arith.constant 0 : index
    %c0_250 = arith.constant 0 : index
    %280 = vector.load %arg7[%c0_247, %c11_248, %c0_249, %c0_250] : memref<1x16x8x32xf32, #tpu.memory_space<vmem>>, vector<1x1x8x32xf32>
    %281 = vector.shape_cast %280 : vector<1x1x8x32xf32> to vector<1x8x32xf32>
    %cst_251 = arith.constant 0.870967745 : f32
    %282 = vector.broadcast %cst_251 : f32 to vector<1x8x32xf32>
    %283 = arith.mulf %281, %282 : vector<1x8x32xf32>
    %c0_252 = arith.constant 0 : index
    %c12 = arith.constant 12 : index
    %c0_253 = arith.constant 0 : index
    %c0_254 = arith.constant 0 : index
    %284 = vector.load %arg7[%c0_252, %c12, %c0_253, %c0_254] : memref<1x16x8x32xf32, #tpu.memory_space<vmem>>, vector<1x1x8x32xf32>
    %285 = vector.shape_cast %284 : vector<1x1x8x32xf32> to vector<1x8x32xf32>
    %cst_255 = arith.constant 0.129032254 : f32
    %286 = vector.broadcast %cst_255 : f32 to vector<1x8x32xf32>
    %287 = arith.mulf %285, %286 : vector<1x8x32xf32>
    %288 = arith.addf %283, %287 : vector<1x8x32xf32>
    %cst_256 = arith.constant 0.000000e+00 : f32
    %289 = vector.broadcast %cst_256 : f32 to vector<1x8x32xf32>
    %290 = arith.maximumf %288, %289 : vector<1x8x32xf32>
    %291 = arith.addf %279, %290 : vector<1x8x32xf32>
    %c0_257 = arith.constant 0 : index
    %c11_258 = arith.constant 11 : index
    %c0_259 = arith.constant 0 : index
    %c0_260 = arith.constant 0 : index
    %292 = vector.load %arg7[%c0_257, %c11_258, %c0_259, %c0_260] : memref<1x16x8x32xf32, #tpu.memory_space<vmem>>, vector<1x1x8x32xf32>
    %293 = vector.shape_cast %292 : vector<1x1x8x32xf32> to vector<1x8x32xf32>
    %cst_261 = arith.constant 0.387096763 : f32
    %294 = vector.broadcast %cst_261 : f32 to vector<1x8x32xf32>
    %295 = arith.mulf %293, %294 : vector<1x8x32xf32>
    %c0_262 = arith.constant 0 : index
    %c12_263 = arith.constant 12 : index
    %c0_264 = arith.constant 0 : index
    %c0_265 = arith.constant 0 : index
    %296 = vector.load %arg7[%c0_262, %c12_263, %c0_264, %c0_265] : memref<1x16x8x32xf32, #tpu.memory_space<vmem>>, vector<1x1x8x32xf32>
    %297 = vector.shape_cast %296 : vector<1x1x8x32xf32> to vector<1x8x32xf32>
    %cst_266 = arith.constant 0.612903237 : f32
    %298 = vector.broadcast %cst_266 : f32 to vector<1x8x32xf32>
    %299 = arith.mulf %297, %298 : vector<1x8x32xf32>
    %300 = arith.addf %295, %299 : vector<1x8x32xf32>
    %cst_267 = arith.constant 0.000000e+00 : f32
    %301 = vector.broadcast %cst_267 : f32 to vector<1x8x32xf32>
    %302 = arith.maximumf %300, %301 : vector<1x8x32xf32>
    %303 = arith.addf %291, %302 : vector<1x8x32xf32>
    %c0_268 = arith.constant 0 : index
    %c12_269 = arith.constant 12 : index
    %c0_270 = arith.constant 0 : index
    %c0_271 = arith.constant 0 : index
    %304 = vector.load %arg7[%c0_268, %c12_269, %c0_270, %c0_271] : memref<1x16x8x32xf32, #tpu.memory_space<vmem>>, vector<1x1x8x32xf32>
    %305 = vector.shape_cast %304 : vector<1x1x8x32xf32> to vector<1x8x32xf32>
    %cst_272 = arith.constant 0.903225779 : f32
    %306 = vector.broadcast %cst_272 : f32 to vector<1x8x32xf32>
    %307 = arith.mulf %305, %306 : vector<1x8x32xf32>
    %c0_273 = arith.constant 0 : index
    %c13 = arith.constant 13 : index
    %c0_274 = arith.constant 0 : index
    %c0_275 = arith.constant 0 : index
    %308 = vector.load %arg7[%c0_273, %c13, %c0_274, %c0_275] : memref<1x16x8x32xf32, #tpu.memory_space<vmem>>, vector<1x1x8x32xf32>
    %309 = vector.shape_cast %308 : vector<1x1x8x32xf32> to vector<1x8x32xf32>
    %cst_276 = arith.constant 0.0967741906 : f32
    %310 = vector.broadcast %cst_276 : f32 to vector<1x8x32xf32>
    %311 = arith.mulf %309, %310 : vector<1x8x32xf32>
    %312 = arith.addf %307, %311 : vector<1x8x32xf32>
    %cst_277 = arith.constant 0.000000e+00 : f32
    %313 = vector.broadcast %cst_277 : f32 to vector<1x8x32xf32>
    %314 = arith.maximumf %312, %313 : vector<1x8x32xf32>
    %315 = arith.addf %303, %314 : vector<1x8x32xf32>
    %c0_278 = arith.constant 0 : index
    %c12_279 = arith.constant 12 : index
    %c0_280 = arith.constant 0 : index
    %c0_281 = arith.constant 0 : index
    %316 = vector.load %arg7[%c0_278, %c12_279, %c0_280, %c0_281] : memref<1x16x8x32xf32, #tpu.memory_space<vmem>>, vector<1x1x8x32xf32>
    %317 = vector.shape_cast %316 : vector<1x1x8x32xf32> to vector<1x8x32xf32>
    %cst_282 = arith.constant 0.419354826 : f32
    %318 = vector.broadcast %cst_282 : f32 to vector<1x8x32xf32>
    %319 = arith.mulf %317, %318 : vector<1x8x32xf32>
    %c0_283 = arith.constant 0 : index
    %c13_284 = arith.constant 13 : index
    %c0_285 = arith.constant 0 : index
    %c0_286 = arith.constant 0 : index
    %320 = vector.load %arg7[%c0_283, %c13_284, %c0_285, %c0_286] : memref<1x16x8x32xf32, #tpu.memory_space<vmem>>, vector<1x1x8x32xf32>
    %321 = vector.shape_cast %320 : vector<1x1x8x32xf32> to vector<1x8x32xf32>
    %cst_287 = arith.constant 0.580645144 : f32
    %322 = vector.broadcast %cst_287 : f32 to vector<1x8x32xf32>
    %323 = arith.mulf %321, %322 : vector<1x8x32xf32>
    %324 = arith.addf %319, %323 : vector<1x8x32xf32>
    %cst_288 = arith.constant 0.000000e+00 : f32
    %325 = vector.broadcast %cst_288 : f32 to vector<1x8x32xf32>
    %326 = arith.maximumf %324, %325 : vector<1x8x32xf32>
    %327 = arith.addf %315, %326 : vector<1x8x32xf32>
    %c0_289 = arith.constant 0 : index
    %c13_290 = arith.constant 13 : index
    %c0_291 = arith.constant 0 : index
    %c0_292 = arith.constant 0 : index
    %328 = vector.load %arg7[%c0_289, %c13_290, %c0_291, %c0_292] : memref<1x16x8x32xf32, #tpu.memory_space<vmem>>, vector<1x1x8x32xf32>
    %329 = vector.shape_cast %328 : vector<1x1x8x32xf32> to vector<1x8x32xf32>
    %cst_293 = arith.constant 0.935483872 : f32
    %330 = vector.broadcast %cst_293 : f32 to vector<1x8x32xf32>
    %331 = arith.mulf %329, %330 : vector<1x8x32xf32>
    %c0_294 = arith.constant 0 : index
    %c14 = arith.constant 14 : index
    %c0_295 = arith.constant 0 : index
    %c0_296 = arith.constant 0 : index
    %332 = vector.load %arg7[%c0_294, %c14, %c0_295, %c0_296] : memref<1x16x8x32xf32, #tpu.memory_space<vmem>>, vector<1x1x8x32xf32>
    %333 = vector.shape_cast %332 : vector<1x1x8x32xf32> to vector<1x8x32xf32>
    %cst_297 = arith.constant 0.0645161271 : f32
    %334 = vector.broadcast %cst_297 : f32 to vector<1x8x32xf32>
    %335 = arith.mulf %333, %334 : vector<1x8x32xf32>
    %336 = arith.addf %331, %335 : vector<1x8x32xf32>
    %cst_298 = arith.constant 0.000000e+00 : f32
    %337 = vector.broadcast %cst_298 : f32 to vector<1x8x32xf32>
    %338 = arith.maximumf %336, %337 : vector<1x8x32xf32>
    %339 = arith.addf %327, %338 : vector<1x8x32xf32>
    %c0_299 = arith.constant 0 : index
    %c13_300 = arith.constant 13 : index
    %c0_301 = arith.constant 0 : index
    %c0_302 = arith.constant 0 : index
    %340 = vector.load %arg7[%c0_299, %c13_300, %c0_301, %c0_302] : memref<1x16x8x32xf32, #tpu.memory_space<vmem>>, vector<1x1x8x32xf32>
    %341 = vector.shape_cast %340 : vector<1x1x8x32xf32> to vector<1x8x32xf32>
    %cst_303 = arith.constant 0.45161289 : f32
    %342 = vector.broadcast %cst_303 : f32 to vector<1x8x32xf32>
    %343 = arith.mulf %341, %342 : vector<1x8x32xf32>
    %c0_304 = arith.constant 0 : index
    %c14_305 = arith.constant 14 : index
    %c0_306 = arith.constant 0 : index
    %c0_307 = arith.constant 0 : index
    %344 = vector.load %arg7[%c0_304, %c14_305, %c0_306, %c0_307] : memref<1x16x8x32xf32, #tpu.memory_space<vmem>>, vector<1x1x8x32xf32>
    %345 = vector.shape_cast %344 : vector<1x1x8x32xf32> to vector<1x8x32xf32>
    %cst_308 = arith.constant 0.54838711 : f32
    %346 = vector.broadcast %cst_308 : f32 to vector<1x8x32xf32>
    %347 = arith.mulf %345, %346 : vector<1x8x32xf32>
    %348 = arith.addf %343, %347 : vector<1x8x32xf32>
    %cst_309 = arith.constant 0.000000e+00 : f32
    %349 = vector.broadcast %cst_309 : f32 to vector<1x8x32xf32>
    %350 = arith.maximumf %348, %349 : vector<1x8x32xf32>
    %351 = arith.addf %339, %350 : vector<1x8x32xf32>
    %c0_310 = arith.constant 0 : index
    %c14_311 = arith.constant 14 : index
    %c0_312 = arith.constant 0 : index
    %c0_313 = arith.constant 0 : index
    %352 = vector.load %arg7[%c0_310, %c14_311, %c0_312, %c0_313] : memref<1x16x8x32xf32, #tpu.memory_space<vmem>>, vector<1x1x8x32xf32>
    %353 = vector.shape_cast %352 : vector<1x1x8x32xf32> to vector<1x8x32xf32>
    %cst_314 = arith.constant 0.967741906 : f32
    %354 = vector.broadcast %cst_314 : f32 to vector<1x8x32xf32>
    %355 = arith.mulf %353, %354 : vector<1x8x32xf32>
    %c0_315 = arith.constant 0 : index
    %c15 = arith.constant 15 : index
    %c0_316 = arith.constant 0 : index
    %c0_317 = arith.constant 0 : index
    %356 = vector.load %arg7[%c0_315, %c15, %c0_316, %c0_317] : memref<1x16x8x32xf32, #tpu.memory_space<vmem>>, vector<1x1x8x32xf32>
    %357 = vector.shape_cast %356 : vector<1x1x8x32xf32> to vector<1x8x32xf32>
    %cst_318 = arith.constant 0.0322580636 : f32
    %358 = vector.broadcast %cst_318 : f32 to vector<1x8x32xf32>
    %359 = arith.mulf %357, %358 : vector<1x8x32xf32>
    %360 = arith.addf %355, %359 : vector<1x8x32xf32>
    %cst_319 = arith.constant 0.000000e+00 : f32
    %361 = vector.broadcast %cst_319 : f32 to vector<1x8x32xf32>
    %362 = arith.maximumf %360, %361 : vector<1x8x32xf32>
    %363 = arith.addf %351, %362 : vector<1x8x32xf32>
    %c0_320 = arith.constant 0 : index
    %c14_321 = arith.constant 14 : index
    %c0_322 = arith.constant 0 : index
    %c0_323 = arith.constant 0 : index
    %364 = vector.load %arg7[%c0_320, %c14_321, %c0_322, %c0_323] : memref<1x16x8x32xf32, #tpu.memory_space<vmem>>, vector<1x1x8x32xf32>
    %365 = vector.shape_cast %364 : vector<1x1x8x32xf32> to vector<1x8x32xf32>
    %cst_324 = arith.constant 0.483870953 : f32
    %366 = vector.broadcast %cst_324 : f32 to vector<1x8x32xf32>
    %367 = arith.mulf %365, %366 : vector<1x8x32xf32>
    %c0_325 = arith.constant 0 : index
    %c15_326 = arith.constant 15 : index
    %c0_327 = arith.constant 0 : index
    %c0_328 = arith.constant 0 : index
    %368 = vector.load %arg7[%c0_325, %c15_326, %c0_327, %c0_328] : memref<1x16x8x32xf32, #tpu.memory_space<vmem>>, vector<1x1x8x32xf32>
    %369 = vector.shape_cast %368 : vector<1x1x8x32xf32> to vector<1x8x32xf32>
    %cst_329 = arith.constant 5.161290e-01 : f32
    %370 = vector.broadcast %cst_329 : f32 to vector<1x8x32xf32>
    %371 = arith.mulf %369, %370 : vector<1x8x32xf32>
    %372 = arith.addf %367, %371 : vector<1x8x32xf32>
    %cst_330 = arith.constant 0.000000e+00 : f32
    %373 = vector.broadcast %cst_330 : f32 to vector<1x8x32xf32>
    %374 = arith.maximumf %372, %373 : vector<1x8x32xf32>
    %375 = arith.addf %363, %374 : vector<1x8x32xf32>
    %c0_331 = arith.constant 0 : index
    %c15_332 = arith.constant 15 : index
    %c0_333 = arith.constant 0 : index
    %c0_334 = arith.constant 0 : index
    %376 = vector.load %arg7[%c0_331, %c15_332, %c0_333, %c0_334] : memref<1x16x8x32xf32, #tpu.memory_space<vmem>>, vector<1x1x8x32xf32>
    %377 = vector.shape_cast %376 : vector<1x1x8x32xf32> to vector<1x8x32xf32>
    %cst_335 = arith.constant 0.000000e+00 : f32
    %378 = vector.broadcast %cst_335 : f32 to vector<1x8x32xf32>
    %379 = arith.maximumf %377, %378 : vector<1x8x32xf32>
    %380 = arith.addf %375, %379 : vector<1x8x32xf32>
    %cst_336 = arith.constant dense<0.000000e+00> : vector<1x8xf32>
    %381 = vector.multi_reduction <add>, %380, %cst_336 [2] : vector<1x8x32xf32> to vector<1x8xf32>
    %cst_337 = arith.constant 9.765625E-4 : f32
    %382 = vector.broadcast %cst_337 : f32 to vector<1x8xf32>
    %383 = arith.mulf %381, %382 : vector<1x8xf32>
    %c0_338 = arith.constant 0 : index
    %c0_339 = arith.constant 0 : index
    %384 = vector.load %arg4[%c0_338, %c0_339] : memref<8x2xf32, #tpu.memory_space<vmem>>, vector<8x2xf32>
    %cst_340 = arith.constant dense<0.000000e+00> : vector<1x2xf32>
    %385 = tpu.matmul %383, %384, %cst_340 {dimension_numbers = #tpu.dot_dimension_numbers<[1], [0], [0], [1], [0, 0, 1, 1], [], []>} : vector<1x8xf32>, vector<8x2xf32>, vector<1x2xf32> -> vector<1x2xf32>
    %cst_341 = arith.constant 0.000000e+00 : f32
    %386 = vector.broadcast %cst_341 : f32 to vector<1x2xf32>
    %387 = arith.maximumf %385, %386 : vector<1x2xf32>
    %c0_342 = arith.constant 0 : index
    %c0_343 = arith.constant 0 : index
    %388 = vector.load %arg5[%c0_342, %c0_343] : memref<2x8xf32, #tpu.memory_space<vmem>>, vector<2x8xf32>
    %cst_344 = arith.constant dense<0.000000e+00> : vector<1x8xf32>
    %389 = tpu.matmul %387, %388, %cst_344 {dimension_numbers = #tpu.dot_dimension_numbers<[1], [0], [0], [1], [0, 0, 1, 1], [], []>} : vector<1x2xf32>, vector<2x8xf32>, vector<1x8xf32> -> vector<1x8xf32>
    %390 = arith.negf %389 : vector<1x8xf32>
    %391 = math.exp %390 : vector<1x8xf32>
    %cst_345 = arith.constant 1.000000e+00 : f32
    %392 = vector.broadcast %cst_345 : f32 to vector<1x8xf32>
    %393 = arith.addf %392, %391 : vector<1x8xf32>
    %394 = arith.divf %392, %393 : vector<1x8xf32>
    %395 = vector.shape_cast %394 : vector<1x8xf32> to vector<1x8x1xf32>
    %396 = vector.shape_cast %395 : vector<1x8x1xf32> to vector<1x8x1xf32>
    %397 = vector.broadcast %396 : vector<1x8x1xf32> to vector<1x8x32xf32>
    %c0_346 = arith.constant 0 : index
    %c0_347 = arith.constant 0 : index
    %c0_348 = arith.constant 0 : index
    %c0_349 = arith.constant 0 : index
    %398 = vector.load %arg7[%c0_346, %c0_347, %c0_348, %c0_349] : memref<1x16x8x32xf32, #tpu.memory_space<vmem>>, vector<1x1x8x32xf32>
    %399 = vector.shape_cast %398 : vector<1x1x8x32xf32> to vector<1x8x32xf32>
    %cst_350 = arith.constant 0.000000e+00 : f32
    %400 = vector.broadcast %cst_350 : f32 to vector<1x8x32xf32>
    %401 = arith.maximumf %399, %400 : vector<1x8x32xf32>
    %402 = arith.mulf %401, %397 : vector<1x8x32xf32>
    %c0_351 = arith.constant 0 : index
    %c0_352 = arith.constant 0 : index
    %c0_353 = arith.constant 0 : index
    %c0_354 = arith.constant 0 : index
    %403 = vector.load %arg6[%c0_351, %c0_352, %c0_353, %c0_354] : memref<1x8x32x32xf32, #tpu.memory_space<vmem>>, vector<1x8x1x32xf32>
    %404 = vector.shape_cast %403 : vector<1x8x1x32xf32> to vector<1x8x32xf32>
    %405 = vector.shape_cast %402 : vector<1x8x32xf32> to vector<1x8x1x32xf32>
    tpu.vector_store %arg6[%c0_351, %c0_352, %c0_353, %c0_354], %405 {strides = array<i32>} : memref<1x8x32x32xf32, #tpu.memory_space<vmem>>, vector<1x8x1x32xf32>,
    %c0_355 = arith.constant 0 : index
    %c0_356 = arith.constant 0 : index
    %c0_357 = arith.constant 0 : index
    %c0_358 = arith.constant 0 : index
    %406 = vector.load %arg7[%c0_355, %c0_356, %c0_357, %c0_358] : memref<1x16x8x32xf32, #tpu.memory_space<vmem>>, vector<1x1x8x32xf32>
    %407 = vector.shape_cast %406 : vector<1x1x8x32xf32> to vector<1x8x32xf32>
    %cst_359 = arith.constant 5.161290e-01 : f32
    %408 = vector.broadcast %cst_359 : f32 to vector<1x8x32xf32>
    %409 = arith.mulf %407, %408 : vector<1x8x32xf32>
    %c0_360 = arith.constant 0 : index
    %c1_361 = arith.constant 1 : index
    %c0_362 = arith.constant 0 : index
    %c0_363 = arith.constant 0 : index
    %410 = vector.load %arg7[%c0_360, %c1_361, %c0_362, %c0_363] : memref<1x16x8x32xf32, #tpu.memory_space<vmem>>, vector<1x1x8x32xf32>
    %411 = vector.shape_cast %410 : vector<1x1x8x32xf32> to vector<1x8x32xf32>
    %cst_364 = arith.constant 0.483870953 : f32
    %412 = vector.broadcast %cst_364 : f32 to vector<1x8x32xf32>
    %413 = arith.mulf %411, %412 : vector<1x8x32xf32>
    %414 = arith.addf %409, %413 : vector<1x8x32xf32>
    %cst_365 = arith.constant 0.000000e+00 : f32
    %415 = vector.broadcast %cst_365 : f32 to vector<1x8x32xf32>
    %416 = arith.maximumf %414, %415 : vector<1x8x32xf32>
    %417 = arith.mulf %416, %397 : vector<1x8x32xf32>
    %c0_366 = arith.constant 0 : index
    %c0_367 = arith.constant 0 : index
    %c1_368 = arith.constant 1 : index
    %c0_369 = arith.constant 0 : index
    %418 = vector.load %arg6[%c0_366, %c0_367, %c1_368, %c0_369] : memref<1x8x32x32xf32, #tpu.memory_space<vmem>>, vector<1x8x1x32xf32>
    %419 = vector.shape_cast %418 : vector<1x8x1x32xf32> to vector<1x8x32xf32>
    %420 = vector.shape_cast %417 : vector<1x8x32xf32> to vector<1x8x1x32xf32>
    tpu.vector_store %arg6[%c0_366, %c0_367, %c1_368, %c0_369], %420 {strides = array<i32>} : memref<1x8x32x32xf32, #tpu.memory_space<vmem>>, vector<1x8x1x32xf32>,
    %c0_370 = arith.constant 0 : index
    %c0_371 = arith.constant 0 : index
    %c0_372 = arith.constant 0 : index
    %c0_373 = arith.constant 0 : index
    %421 = vector.load %arg7[%c0_370, %c0_371, %c0_372, %c0_373] : memref<1x16x8x32xf32, #tpu.memory_space<vmem>>, vector<1x1x8x32xf32>
    %422 = vector.shape_cast %421 : vector<1x1x8x32xf32> to vector<1x8x32xf32>
    %cst_374 = arith.constant 0.0322580636 : f32
    %423 = vector.broadcast %cst_374 : f32 to vector<1x8x32xf32>
    %424 = arith.mulf %422, %423 : vector<1x8x32xf32>
    %c0_375 = arith.constant 0 : index
    %c1_376 = arith.constant 1 : index
    %c0_377 = arith.constant 0 : index
    %c0_378 = arith.constant 0 : index
    %425 = vector.load %arg7[%c0_375, %c1_376, %c0_377, %c0_378] : memref<1x16x8x32xf32, #tpu.memory_space<vmem>>, vector<1x1x8x32xf32>
    %426 = vector.shape_cast %425 : vector<1x1x8x32xf32> to vector<1x8x32xf32>
    %cst_379 = arith.constant 0.967741906 : f32
    %427 = vector.broadcast %cst_379 : f32 to vector<1x8x32xf32>
    %428 = arith.mulf %426, %427 : vector<1x8x32xf32>
    %429 = arith.addf %424, %428 : vector<1x8x32xf32>
    %cst_380 = arith.constant 0.000000e+00 : f32
    %430 = vector.broadcast %cst_380 : f32 to vector<1x8x32xf32>
    %431 = arith.maximumf %429, %430 : vector<1x8x32xf32>
    %432 = arith.mulf %431, %397 : vector<1x8x32xf32>
    %c0_381 = arith.constant 0 : index
    %c0_382 = arith.constant 0 : index
    %c2_383 = arith.constant 2 : index
    %c0_384 = arith.constant 0 : index
    %433 = vector.load %arg6[%c0_381, %c0_382, %c2_383, %c0_384] : memref<1x8x32x32xf32, #tpu.memory_space<vmem>>, vector<1x8x1x32xf32>
    %434 = vector.shape_cast %433 : vector<1x8x1x32xf32> to vector<1x8x32xf32>
    %435 = vector.shape_cast %432 : vector<1x8x32xf32> to vector<1x8x1x32xf32>
    tpu.vector_store %arg6[%c0_381, %c0_382, %c2_383, %c0_384], %435 {strides = array<i32>} : memref<1x8x32x32xf32, #tpu.memory_space<vmem>>, vector<1x8x1x32xf32>,
    %c0_385 = arith.constant 0 : index
    %c1_386 = arith.constant 1 : index
    %c0_387 = arith.constant 0 : index
    %c0_388 = arith.constant 0 : index
    %436 = vector.load %arg7[%c0_385, %c1_386, %c0_387, %c0_388] : memref<1x16x8x32xf32, #tpu.memory_space<vmem>>, vector<1x1x8x32xf32>
    %437 = vector.shape_cast %436 : vector<1x1x8x32xf32> to vector<1x8x32xf32>
    %cst_389 = arith.constant 0.54838711 : f32
    %438 = vector.broadcast %cst_389 : f32 to vector<1x8x32xf32>
    %439 = arith.mulf %437, %438 : vector<1x8x32xf32>
    %c0_390 = arith.constant 0 : index
    %c2_391 = arith.constant 2 : index
    %c0_392 = arith.constant 0 : index
    %c0_393 = arith.constant 0 : index
    %440 = vector.load %arg7[%c0_390, %c2_391, %c0_392, %c0_393] : memref<1x16x8x32xf32, #tpu.memory_space<vmem>>, vector<1x1x8x32xf32>
    %441 = vector.shape_cast %440 : vector<1x1x8x32xf32> to vector<1x8x32xf32>
    %cst_394 = arith.constant 0.45161289 : f32
    %442 = vector.broadcast %cst_394 : f32 to vector<1x8x32xf32>
    %443 = arith.mulf %441, %442 : vector<1x8x32xf32>
    %444 = arith.addf %439, %443 : vector<1x8x32xf32>
    %cst_395 = arith.constant 0.000000e+00 : f32
    %445 = vector.broadcast %cst_395 : f32 to vector<1x8x32xf32>
    %446 = arith.maximumf %444, %445 : vector<1x8x32xf32>
    %447 = arith.mulf %446, %397 : vector<1x8x32xf32>
    %c0_396 = arith.constant 0 : index
    %c0_397 = arith.constant 0 : index
    %c3_398 = arith.constant 3 : index
    %c0_399 = arith.constant 0 : index
    %448 = vector.load %arg6[%c0_396, %c0_397, %c3_398, %c0_399] : memref<1x8x32x32xf32, #tpu.memory_space<vmem>>, vector<1x8x1x32xf32>
    %449 = vector.shape_cast %448 : vector<1x8x1x32xf32> to vector<1x8x32xf32>
    %450 = vector.shape_cast %447 : vector<1x8x32xf32> to vector<1x8x1x32xf32>
    tpu.vector_store %arg6[%c0_396, %c0_397, %c3_398, %c0_399], %450 {strides = array<i32>} : memref<1x8x32x32xf32, #tpu.memory_space<vmem>>, vector<1x8x1x32xf32>,
    %c0_400 = arith.constant 0 : index
    %c1_401 = arith.constant 1 : index
    %c0_402 = arith.constant 0 : index
    %c0_403 = arith.constant 0 : index
    %451 = vector.load %arg7[%c0_400, %c1_401, %c0_402, %c0_403] : memref<1x16x8x32xf32, #tpu.memory_space<vmem>>, vector<1x1x8x32xf32>
    %452 = vector.shape_cast %451 : vector<1x1x8x32xf32> to vector<1x8x32xf32>
    %cst_404 = arith.constant 0.0645161271 : f32
    %453 = vector.broadcast %cst_404 : f32 to vector<1x8x32xf32>
    %454 = arith.mulf %452, %453 : vector<1x8x32xf32>
    %c0_405 = arith.constant 0 : index
    %c2_406 = arith.constant 2 : index
    %c0_407 = arith.constant 0 : index
    %c0_408 = arith.constant 0 : index
    %455 = vector.load %arg7[%c0_405, %c2_406, %c0_407, %c0_408] : memref<1x16x8x32xf32, #tpu.memory_space<vmem>>, vector<1x1x8x32xf32>
    %456 = vector.shape_cast %455 : vector<1x1x8x32xf32> to vector<1x8x32xf32>
    %cst_409 = arith.constant 0.935483872 : f32
    %457 = vector.broadcast %cst_409 : f32 to vector<1x8x32xf32>
    %458 = arith.mulf %456, %457 : vector<1x8x32xf32>
    %459 = arith.addf %454, %458 : vector<1x8x32xf32>
    %cst_410 = arith.constant 0.000000e+00 : f32
    %460 = vector.broadcast %cst_410 : f32 to vector<1x8x32xf32>
    %461 = arith.maximumf %459, %460 : vector<1x8x32xf32>
    %462 = arith.mulf %461, %397 : vector<1x8x32xf32>
    %c0_411 = arith.constant 0 : index
    %c0_412 = arith.constant 0 : index
    %c4_413 = arith.constant 4 : index
    %c0_414 = arith.constant 0 : index
    %463 = vector.load %arg6[%c0_411, %c0_412, %c4_413, %c0_414] : memref<1x8x32x32xf32, #tpu.memory_space<vmem>>, vector<1x8x1x32xf32>
    %464 = vector.shape_cast %463 : vector<1x8x1x32xf32> to vector<1x8x32xf32>
    %465 = vector.shape_cast %462 : vector<1x8x32xf32> to vector<1x8x1x32xf32>
    tpu.vector_store %arg6[%c0_411, %c0_412, %c4_413, %c0_414], %465 {strides = array<i32>} : memref<1x8x32x32xf32, #tpu.memory_space<vmem>>, vector<1x8x1x32xf32>,
    %c0_415 = arith.constant 0 : index
    %c2_416 = arith.constant 2 : index
    %c0_417 = arith.constant 0 : index
    %c0_418 = arith.constant 0 : index
    %466 = vector.load %arg7[%c0_415, %c2_416, %c0_417, %c0_418] : memref<1x16x8x32xf32, #tpu.memory_space<vmem>>, vector<1x1x8x32xf32>
    %467 = vector.shape_cast %466 : vector<1x1x8x32xf32> to vector<1x8x32xf32>
    %cst_419 = arith.constant 0.580645144 : f32
    %468 = vector.broadcast %cst_419 : f32 to vector<1x8x32xf32>
    %469 = arith.mulf %467, %468 : vector<1x8x32xf32>
    %c0_420 = arith.constant 0 : index
    %c3_421 = arith.constant 3 : index
    %c0_422 = arith.constant 0 : index
    %c0_423 = arith.constant 0 : index
    %470 = vector.load %arg7[%c0_420, %c3_421, %c0_422, %c0_423] : memref<1x16x8x32xf32, #tpu.memory_space<vmem>>, vector<1x1x8x32xf32>
    %471 = vector.shape_cast %470 : vector<1x1x8x32xf32> to vector<1x8x32xf32>
    %cst_424 = arith.constant 0.419354826 : f32
    %472 = vector.broadcast %cst_424 : f32 to vector<1x8x32xf32>
    %473 = arith.mulf %471, %472 : vector<1x8x32xf32>
    %474 = arith.addf %469, %473 : vector<1x8x32xf32>
    %cst_425 = arith.constant 0.000000e+00 : f32
    %475 = vector.broadcast %cst_425 : f32 to vector<1x8x32xf32>
    %476 = arith.maximumf %474, %475 : vector<1x8x32xf32>
    %477 = arith.mulf %476, %397 : vector<1x8x32xf32>
    %c0_426 = arith.constant 0 : index
    %c0_427 = arith.constant 0 : index
    %c5_428 = arith.constant 5 : index
    %c0_429 = arith.constant 0 : index
    %478 = vector.load %arg6[%c0_426, %c0_427, %c5_428, %c0_429] : memref<1x8x32x32xf32, #tpu.memory_space<vmem>>, vector<1x8x1x32xf32>
    %479 = vector.shape_cast %478 : vector<1x8x1x32xf32> to vector<1x8x32xf32>
    %480 = vector.shape_cast %477 : vector<1x8x32xf32> to vector<1x8x1x32xf32>
    tpu.vector_store %arg6[%c0_426, %c0_427, %c5_428, %c0_429], %480 {strides = array<i32>} : memref<1x8x32x32xf32, #tpu.memory_space<vmem>>, vector<1x8x1x32xf32>,
    %c0_430 = arith.constant 0 : index
    %c2_431 = arith.constant 2 : index
    %c0_432 = arith.constant 0 : index
    %c0_433 = arith.constant 0 : index
    %481 = vector.load %arg7[%c0_430, %c2_431, %c0_432, %c0_433] : memref<1x16x8x32xf32, #tpu.memory_space<vmem>>, vector<1x1x8x32xf32>
    %482 = vector.shape_cast %481 : vector<1x1x8x32xf32> to vector<1x8x32xf32>
    %cst_434 = arith.constant 0.0967741906 : f32
    %483 = vector.broadcast %cst_434 : f32 to vector<1x8x32xf32>
    %484 = arith.mulf %482, %483 : vector<1x8x32xf32>
    %c0_435 = arith.constant 0 : index
    %c3_436 = arith.constant 3 : index
    %c0_437 = arith.constant 0 : index
    %c0_438 = arith.constant 0 : index
    %485 = vector.load %arg7[%c0_435, %c3_436, %c0_437, %c0_438] : memref<1x16x8x32xf32, #tpu.memory_space<vmem>>, vector<1x1x8x32xf32>
    %486 = vector.shape_cast %485 : vector<1x1x8x32xf32> to vector<1x8x32xf32>
    %cst_439 = arith.constant 0.903225779 : f32
    %487 = vector.broadcast %cst_439 : f32 to vector<1x8x32xf32>
    %488 = arith.mulf %486, %487 : vector<1x8x32xf32>
    %489 = arith.addf %484, %488 : vector<1x8x32xf32>
    %cst_440 = arith.constant 0.000000e+00 : f32
    %490 = vector.broadcast %cst_440 : f32 to vector<1x8x32xf32>
    %491 = arith.maximumf %489, %490 : vector<1x8x32xf32>
    %492 = arith.mulf %491, %397 : vector<1x8x32xf32>
    %c0_441 = arith.constant 0 : index
    %c0_442 = arith.constant 0 : index
    %c6_443 = arith.constant 6 : index
    %c0_444 = arith.constant 0 : index
    %493 = vector.load %arg6[%c0_441, %c0_442, %c6_443, %c0_444] : memref<1x8x32x32xf32, #tpu.memory_space<vmem>>, vector<1x8x1x32xf32>
    %494 = vector.shape_cast %493 : vector<1x8x1x32xf32> to vector<1x8x32xf32>
    %495 = vector.shape_cast %492 : vector<1x8x32xf32> to vector<1x8x1x32xf32>
    tpu.vector_store %arg6[%c0_441, %c0_442, %c6_443, %c0_444], %495 {strides = array<i32>} : memref<1x8x32x32xf32, #tpu.memory_space<vmem>>, vector<1x8x1x32xf32>,
    %c0_445 = arith.constant 0 : index
    %c3_446 = arith.constant 3 : index
    %c0_447 = arith.constant 0 : index
    %c0_448 = arith.constant 0 : index
    %496 = vector.load %arg7[%c0_445, %c3_446, %c0_447, %c0_448] : memref<1x16x8x32xf32, #tpu.memory_space<vmem>>, vector<1x1x8x32xf32>
    %497 = vector.shape_cast %496 : vector<1x1x8x32xf32> to vector<1x8x32xf32>
    %cst_449 = arith.constant 0.612903237 : f32
    %498 = vector.broadcast %cst_449 : f32 to vector<1x8x32xf32>
    %499 = arith.mulf %497, %498 : vector<1x8x32xf32>
    %c0_450 = arith.constant 0 : index
    %c4_451 = arith.constant 4 : index
    %c0_452 = arith.constant 0 : index
    %c0_453 = arith.constant 0 : index
    %500 = vector.load %arg7[%c0_450, %c4_451, %c0_452, %c0_453] : memref<1x16x8x32xf32, #tpu.memory_space<vmem>>, vector<1x1x8x32xf32>
    %501 = vector.shape_cast %500 : vector<1x1x8x32xf32> to vector<1x8x32xf32>
    %cst_454 = arith.constant 0.387096763 : f32
    %502 = vector.broadcast %cst_454 : f32 to vector<1x8x32xf32>
    %503 = arith.mulf %501, %502 : vector<1x8x32xf32>
    %504 = arith.addf %499, %503 : vector<1x8x32xf32>
    %cst_455 = arith.constant 0.000000e+00 : f32
    %505 = vector.broadcast %cst_455 : f32 to vector<1x8x32xf32>
    %506 = arith.maximumf %504, %505 : vector<1x8x32xf32>
    %507 = arith.mulf %506, %397 : vector<1x8x32xf32>
    %c0_456 = arith.constant 0 : index
    %c0_457 = arith.constant 0 : index
    %c7_458 = arith.constant 7 : index
    %c0_459 = arith.constant 0 : index
    %508 = vector.load %arg6[%c0_456, %c0_457, %c7_458, %c0_459] : memref<1x8x32x32xf32, #tpu.memory_space<vmem>>, vector<1x8x1x32xf32>
    %509 = vector.shape_cast %508 : vector<1x8x1x32xf32> to vector<1x8x32xf32>
    %510 = vector.shape_cast %507 : vector<1x8x32xf32> to vector<1x8x1x32xf32>
    tpu.vector_store %arg6[%c0_456, %c0_457, %c7_458, %c0_459], %510 {strides = array<i32>} : memref<1x8x32x32xf32, #tpu.memory_space<vmem>>, vector<1x8x1x32xf32>,
    %c0_460 = arith.constant 0 : index
    %c3_461 = arith.constant 3 : index
    %c0_462 = arith.constant 0 : index
    %c0_463 = arith.constant 0 : index
    %511 = vector.load %arg7[%c0_460, %c3_461, %c0_462, %c0_463] : memref<1x16x8x32xf32, #tpu.memory_space<vmem>>, vector<1x1x8x32xf32>
    %512 = vector.shape_cast %511 : vector<1x1x8x32xf32> to vector<1x8x32xf32>
    %cst_464 = arith.constant 0.129032254 : f32
    %513 = vector.broadcast %cst_464 : f32 to vector<1x8x32xf32>
    %514 = arith.mulf %512, %513 : vector<1x8x32xf32>
    %c0_465 = arith.constant 0 : index
    %c4_466 = arith.constant 4 : index
    %c0_467 = arith.constant 0 : index
    %c0_468 = arith.constant 0 : index
    %515 = vector.load %arg7[%c0_465, %c4_466, %c0_467, %c0_468] : memref<1x16x8x32xf32, #tpu.memory_space<vmem>>, vector<1x1x8x32xf32>
    %516 = vector.shape_cast %515 : vector<1x1x8x32xf32> to vector<1x8x32xf32>
    %cst_469 = arith.constant 0.870967745 : f32
    %517 = vector.broadcast %cst_469 : f32 to vector<1x8x32xf32>
    %518 = arith.mulf %516, %517 : vector<1x8x32xf32>
    %519 = arith.addf %514, %518 : vector<1x8x32xf32>
    %cst_470 = arith.constant 0.000000e+00 : f32
    %520 = vector.broadcast %cst_470 : f32 to vector<1x8x32xf32>
    %521 = arith.maximumf %519, %520 : vector<1x8x32xf32>
    %522 = arith.mulf %521, %397 : vector<1x8x32xf32>
    %c0_471 = arith.constant 0 : index
    %c0_472 = arith.constant 0 : index
    %c8_473 = arith.constant 8 : index
    %c0_474 = arith.constant 0 : index
    %523 = vector.load %arg6[%c0_471, %c0_472, %c8_473, %c0_474] : memref<1x8x32x32xf32, #tpu.memory_space<vmem>>, vector<1x8x1x32xf32>
    %524 = vector.shape_cast %523 : vector<1x8x1x32xf32> to vector<1x8x32xf32>
    %525 = vector.shape_cast %522 : vector<1x8x32xf32> to vector<1x8x1x32xf32>
    tpu.vector_store %arg6[%c0_471, %c0_472, %c8_473, %c0_474], %525 {strides = array<i32>} : memref<1x8x32x32xf32, #tpu.memory_space<vmem>>, vector<1x8x1x32xf32>,
    %c0_475 = arith.constant 0 : index
    %c4_476 = arith.constant 4 : index
    %c0_477 = arith.constant 0 : index
    %c0_478 = arith.constant 0 : index
    %526 = vector.load %arg7[%c0_475, %c4_476, %c0_477, %c0_478] : memref<1x16x8x32xf32, #tpu.memory_space<vmem>>, vector<1x1x8x32xf32>
    %527 = vector.shape_cast %526 : vector<1x1x8x32xf32> to vector<1x8x32xf32>
    %cst_479 = arith.constant 0.645161271 : f32
    %528 = vector.broadcast %cst_479 : f32 to vector<1x8x32xf32>
    %529 = arith.mulf %527, %528 : vector<1x8x32xf32>
    %c0_480 = arith.constant 0 : index
    %c5_481 = arith.constant 5 : index
    %c0_482 = arith.constant 0 : index
    %c0_483 = arith.constant 0 : index
    %530 = vector.load %arg7[%c0_480, %c5_481, %c0_482, %c0_483] : memref<1x16x8x32xf32, #tpu.memory_space<vmem>>, vector<1x1x8x32xf32>
    %531 = vector.shape_cast %530 : vector<1x1x8x32xf32> to vector<1x8x32xf32>
    %cst_484 = arith.constant 0.354838699 : f32
    %532 = vector.broadcast %cst_484 : f32 to vector<1x8x32xf32>
    %533 = arith.mulf %531, %532 : vector<1x8x32xf32>
    %534 = arith.addf %529, %533 : vector<1x8x32xf32>
    %cst_485 = arith.constant 0.000000e+00 : f32
    %535 = vector.broadcast %cst_485 : f32 to vector<1x8x32xf32>
    %536 = arith.maximumf %534, %535 : vector<1x8x32xf32>
    %537 = arith.mulf %536, %397 : vector<1x8x32xf32>
    %c0_486 = arith.constant 0 : index
    %c0_487 = arith.constant 0 : index
    %c9_488 = arith.constant 9 : index
    %c0_489 = arith.constant 0 : index
    %538 = vector.load %arg6[%c0_486, %c0_487, %c9_488, %c0_489] : memref<1x8x32x32xf32, #tpu.memory_space<vmem>>, vector<1x8x1x32xf32>
    %539 = vector.shape_cast %538 : vector<1x8x1x32xf32> to vector<1x8x32xf32>
    %540 = vector.shape_cast %537 : vector<1x8x32xf32> to vector<1x8x1x32xf32>
    tpu.vector_store %arg6[%c0_486, %c0_487, %c9_488, %c0_489], %540 {strides = array<i32>} : memref<1x8x32x32xf32, #tpu.memory_space<vmem>>, vector<1x8x1x32xf32>,
    %c0_490 = arith.constant 0 : index
    %c4_491 = arith.constant 4 : index
    %c0_492 = arith.constant 0 : index
    %c0_493 = arith.constant 0 : index
    %541 = vector.load %arg7[%c0_490, %c4_491, %c0_492, %c0_493] : memref<1x16x8x32xf32, #tpu.memory_space<vmem>>, vector<1x1x8x32xf32>
    %542 = vector.shape_cast %541 : vector<1x1x8x32xf32> to vector<1x8x32xf32>
    %cst_494 = arith.constant 0.161290318 : f32
    %543 = vector.broadcast %cst_494 : f32 to vector<1x8x32xf32>
    %544 = arith.mulf %542, %543 : vector<1x8x32xf32>
    %c0_495 = arith.constant 0 : index
    %c5_496 = arith.constant 5 : index
    %c0_497 = arith.constant 0 : index
    %c0_498 = arith.constant 0 : index
    %545 = vector.load %arg7[%c0_495, %c5_496, %c0_497, %c0_498] : memref<1x16x8x32xf32, #tpu.memory_space<vmem>>, vector<1x1x8x32xf32>
    %546 = vector.shape_cast %545 : vector<1x1x8x32xf32> to vector<1x8x32xf32>
    %cst_499 = arith.constant 0.838709652 : f32
    %547 = vector.broadcast %cst_499 : f32 to vector<1x8x32xf32>
    %548 = arith.mulf %546, %547 : vector<1x8x32xf32>
    %549 = arith.addf %544, %548 : vector<1x8x32xf32>
    %cst_500 = arith.constant 0.000000e+00 : f32
    %550 = vector.broadcast %cst_500 : f32 to vector<1x8x32xf32>
    %551 = arith.maximumf %549, %550 : vector<1x8x32xf32>
    %552 = arith.mulf %551, %397 : vector<1x8x32xf32>
    %c0_501 = arith.constant 0 : index
    %c0_502 = arith.constant 0 : index
    %c10_503 = arith.constant 10 : index
    %c0_504 = arith.constant 0 : index
    %553 = vector.load %arg6[%c0_501, %c0_502, %c10_503, %c0_504] : memref<1x8x32x32xf32, #tpu.memory_space<vmem>>, vector<1x8x1x32xf32>
    %554 = vector.shape_cast %553 : vector<1x8x1x32xf32> to vector<1x8x32xf32>
    %555 = vector.shape_cast %552 : vector<1x8x32xf32> to vector<1x8x1x32xf32>
    tpu.vector_store %arg6[%c0_501, %c0_502, %c10_503, %c0_504], %555 {strides = array<i32>} : memref<1x8x32x32xf32, #tpu.memory_space<vmem>>, vector<1x8x1x32xf32>,
    %c0_505 = arith.constant 0 : index
    %c5_506 = arith.constant 5 : index
    %c0_507 = arith.constant 0 : index
    %c0_508 = arith.constant 0 : index
    %556 = vector.load %arg7[%c0_505, %c5_506, %c0_507, %c0_508] : memref<1x16x8x32xf32, #tpu.memory_space<vmem>>, vector<1x1x8x32xf32>
    %557 = vector.shape_cast %556 : vector<1x1x8x32xf32> to vector<1x8x32xf32>
    %cst_509 = arith.constant 0.677419364 : f32
    %558 = vector.broadcast %cst_509 : f32 to vector<1x8x32xf32>
    %559 = arith.mulf %557, %558 : vector<1x8x32xf32>
    %c0_510 = arith.constant 0 : index
    %c6_511 = arith.constant 6 : index
    %c0_512 = arith.constant 0 : index
    %c0_513 = arith.constant 0 : index
    %560 = vector.load %arg7[%c0_510, %c6_511, %c0_512, %c0_513] : memref<1x16x8x32xf32, #tpu.memory_space<vmem>>, vector<1x1x8x32xf32>
    %561 = vector.shape_cast %560 : vector<1x1x8x32xf32> to vector<1x8x32xf32>
    %cst_514 = arith.constant 0.322580636 : f32
    %562 = vector.broadcast %cst_514 : f32 to vector<1x8x32xf32>
    %563 = arith.mulf %561, %562 : vector<1x8x32xf32>
    %564 = arith.addf %559, %563 : vector<1x8x32xf32>
    %cst_515 = arith.constant 0.000000e+00 : f32
    %565 = vector.broadcast %cst_515 : f32 to vector<1x8x32xf32>
    %566 = arith.maximumf %564, %565 : vector<1x8x32xf32>
    %567 = arith.mulf %566, %397 : vector<1x8x32xf32>
    %c0_516 = arith.constant 0 : index
    %c0_517 = arith.constant 0 : index
    %c11_518 = arith.constant 11 : index
    %c0_519 = arith.constant 0 : index
    %568 = vector.load %arg6[%c0_516, %c0_517, %c11_518, %c0_519] : memref<1x8x32x32xf32, #tpu.memory_space<vmem>>, vector<1x8x1x32xf32>
    %569 = vector.shape_cast %568 : vector<1x8x1x32xf32> to vector<1x8x32xf32>
    %570 = vector.shape_cast %567 : vector<1x8x32xf32> to vector<1x8x1x32xf32>
    tpu.vector_store %arg6[%c0_516, %c0_517, %c11_518, %c0_519], %570 {strides = array<i32>} : memref<1x8x32x32xf32, #tpu.memory_space<vmem>>, vector<1x8x1x32xf32>,
    %c0_520 = arith.constant 0 : index
    %c5_521 = arith.constant 5 : index
    %c0_522 = arith.constant 0 : index
    %c0_523 = arith.constant 0 : index
    %571 = vector.load %arg7[%c0_520, %c5_521, %c0_522, %c0_523] : memref<1x16x8x32xf32, #tpu.memory_space<vmem>>, vector<1x1x8x32xf32>
    %572 = vector.shape_cast %571 : vector<1x1x8x32xf32> to vector<1x8x32xf32>
    %cst_524 = arith.constant 0.193548381 : f32
    %573 = vector.broadcast %cst_524 : f32 to vector<1x8x32xf32>
    %574 = arith.mulf %572, %573 : vector<1x8x32xf32>
    %c0_525 = arith.constant 0 : index
    %c6_526 = arith.constant 6 : index
    %c0_527 = arith.constant 0 : index
    %c0_528 = arith.constant 0 : index
    %575 = vector.load %arg7[%c0_525, %c6_526, %c0_527, %c0_528] : memref<1x16x8x32xf32, #tpu.memory_space<vmem>>, vector<1x1x8x32xf32>
    %576 = vector.shape_cast %575 : vector<1x1x8x32xf32> to vector<1x8x32xf32>
    %cst_529 = arith.constant 0.806451618 : f32
    %577 = vector.broadcast %cst_529 : f32 to vector<1x8x32xf32>
    %578 = arith.mulf %576, %577 : vector<1x8x32xf32>
    %579 = arith.addf %574, %578 : vector<1x8x32xf32>
    %cst_530 = arith.constant 0.000000e+00 : f32
    %580 = vector.broadcast %cst_530 : f32 to vector<1x8x32xf32>
    %581 = arith.maximumf %579, %580 : vector<1x8x32xf32>
    %582 = arith.mulf %581, %397 : vector<1x8x32xf32>
    %c0_531 = arith.constant 0 : index
    %c0_532 = arith.constant 0 : index
    %c12_533 = arith.constant 12 : index
    %c0_534 = arith.constant 0 : index
    %583 = vector.load %arg6[%c0_531, %c0_532, %c12_533, %c0_534] : memref<1x8x32x32xf32, #tpu.memory_space<vmem>>, vector<1x8x1x32xf32>
    %584 = vector.shape_cast %583 : vector<1x8x1x32xf32> to vector<1x8x32xf32>
    %585 = vector.shape_cast %582 : vector<1x8x32xf32> to vector<1x8x1x32xf32>
    tpu.vector_store %arg6[%c0_531, %c0_532, %c12_533, %c0_534], %585 {strides = array<i32>} : memref<1x8x32x32xf32, #tpu.memory_space<vmem>>, vector<1x8x1x32xf32>,
    %c0_535 = arith.constant 0 : index
    %c6_536 = arith.constant 6 : index
    %c0_537 = arith.constant 0 : index
    %c0_538 = arith.constant 0 : index
    %586 = vector.load %arg7[%c0_535, %c6_536, %c0_537, %c0_538] : memref<1x16x8x32xf32, #tpu.memory_space<vmem>>, vector<1x1x8x32xf32>
    %587 = vector.shape_cast %586 : vector<1x1x8x32xf32> to vector<1x8x32xf32>
    %cst_539 = arith.constant 0.709677398 : f32
    %588 = vector.broadcast %cst_539 : f32 to vector<1x8x32xf32>
    %589 = arith.mulf %587, %588 : vector<1x8x32xf32>
    %c0_540 = arith.constant 0 : index
    %c7_541 = arith.constant 7 : index
    %c0_542 = arith.constant 0 : index
    %c0_543 = arith.constant 0 : index
    %590 = vector.load %arg7[%c0_540, %c7_541, %c0_542, %c0_543] : memref<1x16x8x32xf32, #tpu.memory_space<vmem>>, vector<1x1x8x32xf32>
    %591 = vector.shape_cast %590 : vector<1x1x8x32xf32> to vector<1x8x32xf32>
    %cst_544 = arith.constant 0.290322572 : f32
    %592 = vector.broadcast %cst_544 : f32 to vector<1x8x32xf32>
    %593 = arith.mulf %591, %592 : vector<1x8x32xf32>
    %594 = arith.addf %589, %593 : vector<1x8x32xf32>
    %cst_545 = arith.constant 0.000000e+00 : f32
    %595 = vector.broadcast %cst_545 : f32 to vector<1x8x32xf32>
    %596 = arith.maximumf %594, %595 : vector<1x8x32xf32>
    %597 = arith.mulf %596, %397 : vector<1x8x32xf32>
    %c0_546 = arith.constant 0 : index
    %c0_547 = arith.constant 0 : index
    %c13_548 = arith.constant 13 : index
    %c0_549 = arith.constant 0 : index
    %598 = vector.load %arg6[%c0_546, %c0_547, %c13_548, %c0_549] : memref<1x8x32x32xf32, #tpu.memory_space<vmem>>, vector<1x8x1x32xf32>
    %599 = vector.shape_cast %598 : vector<1x8x1x32xf32> to vector<1x8x32xf32>
    %600 = vector.shape_cast %597 : vector<1x8x32xf32> to vector<1x8x1x32xf32>
    tpu.vector_store %arg6[%c0_546, %c0_547, %c13_548, %c0_549], %600 {strides = array<i32>} : memref<1x8x32x32xf32, #tpu.memory_space<vmem>>, vector<1x8x1x32xf32>,
    %c0_550 = arith.constant 0 : index
    %c6_551 = arith.constant 6 : index
    %c0_552 = arith.constant 0 : index
    %c0_553 = arith.constant 0 : index
    %601 = vector.load %arg7[%c0_550, %c6_551, %c0_552, %c0_553] : memref<1x16x8x32xf32, #tpu.memory_space<vmem>>, vector<1x1x8x32xf32>
    %602 = vector.shape_cast %601 : vector<1x1x8x32xf32> to vector<1x8x32xf32>
    %cst_554 = arith.constant 0.225806445 : f32
    %603 = vector.broadcast %cst_554 : f32 to vector<1x8x32xf32>
    %604 = arith.mulf %602, %603 : vector<1x8x32xf32>
    %c0_555 = arith.constant 0 : index
    %c7_556 = arith.constant 7 : index
    %c0_557 = arith.constant 0 : index
    %c0_558 = arith.constant 0 : index
    %605 = vector.load %arg7[%c0_555, %c7_556, %c0_557, %c0_558] : memref<1x16x8x32xf32, #tpu.memory_space<vmem>>, vector<1x1x8x32xf32>
    %606 = vector.shape_cast %605 : vector<1x1x8x32xf32> to vector<1x8x32xf32>
    %cst_559 = arith.constant 0.774193525 : f32
    %607 = vector.broadcast %cst_559 : f32 to vector<1x8x32xf32>
    %608 = arith.mulf %606, %607 : vector<1x8x32xf32>
    %609 = arith.addf %604, %608 : vector<1x8x32xf32>
    %cst_560 = arith.constant 0.000000e+00 : f32
    %610 = vector.broadcast %cst_560 : f32 to vector<1x8x32xf32>
    %611 = arith.maximumf %609, %610 : vector<1x8x32xf32>
    %612 = arith.mulf %611, %397 : vector<1x8x32xf32>
    %c0_561 = arith.constant 0 : index
    %c0_562 = arith.constant 0 : index
    %c14_563 = arith.constant 14 : index
    %c0_564 = arith.constant 0 : index
    %613 = vector.load %arg6[%c0_561, %c0_562, %c14_563, %c0_564] : memref<1x8x32x32xf32, #tpu.memory_space<vmem>>, vector<1x8x1x32xf32>
    %614 = vector.shape_cast %613 : vector<1x8x1x32xf32> to vector<1x8x32xf32>
    %615 = vector.shape_cast %612 : vector<1x8x32xf32> to vector<1x8x1x32xf32>
    tpu.vector_store %arg6[%c0_561, %c0_562, %c14_563, %c0_564], %615 {strides = array<i32>} : memref<1x8x32x32xf32, #tpu.memory_space<vmem>>, vector<1x8x1x32xf32>,
    %c0_565 = arith.constant 0 : index
    %c7_566 = arith.constant 7 : index
    %c0_567 = arith.constant 0 : index
    %c0_568 = arith.constant 0 : index
    %616 = vector.load %arg7[%c0_565, %c7_566, %c0_567, %c0_568] : memref<1x16x8x32xf32, #tpu.memory_space<vmem>>, vector<1x1x8x32xf32>
    %617 = vector.shape_cast %616 : vector<1x1x8x32xf32> to vector<1x8x32xf32>
    %cst_569 = arith.constant 0.741935492 : f32
    %618 = vector.broadcast %cst_569 : f32 to vector<1x8x32xf32>
    %619 = arith.mulf %617, %618 : vector<1x8x32xf32>
    %c0_570 = arith.constant 0 : index
    %c8_571 = arith.constant 8 : index
    %c0_572 = arith.constant 0 : index
    %c0_573 = arith.constant 0 : index
    %620 = vector.load %arg7[%c0_570, %c8_571, %c0_572, %c0_573] : memref<1x16x8x32xf32, #tpu.memory_space<vmem>>, vector<1x1x8x32xf32>
    %621 = vector.shape_cast %620 : vector<1x1x8x32xf32> to vector<1x8x32xf32>
    %cst_574 = arith.constant 0.258064508 : f32
    %622 = vector.broadcast %cst_574 : f32 to vector<1x8x32xf32>
    %623 = arith.mulf %621, %622 : vector<1x8x32xf32>
    %624 = arith.addf %619, %623 : vector<1x8x32xf32>
    %cst_575 = arith.constant 0.000000e+00 : f32
    %625 = vector.broadcast %cst_575 : f32 to vector<1x8x32xf32>
    %626 = arith.maximumf %624, %625 : vector<1x8x32xf32>
    %627 = arith.mulf %626, %397 : vector<1x8x32xf32>
    %c0_576 = arith.constant 0 : index
    %c0_577 = arith.constant 0 : index
    %c15_578 = arith.constant 15 : index
    %c0_579 = arith.constant 0 : index
    %628 = vector.load %arg6[%c0_576, %c0_577, %c15_578, %c0_579] : memref<1x8x32x32xf32, #tpu.memory_space<vmem>>, vector<1x8x1x32xf32>
    %629 = vector.shape_cast %628 : vector<1x8x1x32xf32> to vector<1x8x32xf32>
    %630 = vector.shape_cast %627 : vector<1x8x32xf32> to vector<1x8x1x32xf32>
    tpu.vector_store %arg6[%c0_576, %c0_577, %c15_578, %c0_579], %630 {strides = array<i32>} : memref<1x8x32x32xf32, #tpu.memory_space<vmem>>, vector<1x8x1x32xf32>,
    %c0_580 = arith.constant 0 : index
    %c7_581 = arith.constant 7 : index
    %c0_582 = arith.constant 0 : index
    %c0_583 = arith.constant 0 : index
    %631 = vector.load %arg7[%c0_580, %c7_581, %c0_582, %c0_583] : memref<1x16x8x32xf32, #tpu.memory_space<vmem>>, vector<1x1x8x32xf32>
    %632 = vector.shape_cast %631 : vector<1x1x8x32xf32> to vector<1x8x32xf32>
    %cst_584 = arith.constant 0.258064508 : f32
    %633 = vector.broadcast %cst_584 : f32 to vector<1x8x32xf32>
    %634 = arith.mulf %632, %633 : vector<1x8x32xf32>
    %c0_585 = arith.constant 0 : index
    %c8_586 = arith.constant 8 : index
    %c0_587 = arith.constant 0 : index
    %c0_588 = arith.constant 0 : index
    %635 = vector.load %arg7[%c0_585, %c8_586, %c0_587, %c0_588] : memref<1x16x8x32xf32, #tpu.memory_space<vmem>>, vector<1x1x8x32xf32>
    %636 = vector.shape_cast %635 : vector<1x1x8x32xf32> to vector<1x8x32xf32>
    %cst_589 = arith.constant 0.741935492 : f32
    %637 = vector.broadcast %cst_589 : f32 to vector<1x8x32xf32>
    %638 = arith.mulf %636, %637 : vector<1x8x32xf32>
    %639 = arith.addf %634, %638 : vector<1x8x32xf32>
    %cst_590 = arith.constant 0.000000e+00 : f32
    %640 = vector.broadcast %cst_590 : f32 to vector<1x8x32xf32>
    %641 = arith.maximumf %639, %640 : vector<1x8x32xf32>
    %642 = arith.mulf %641, %397 : vector<1x8x32xf32>
    %c0_591 = arith.constant 0 : index
    %c0_592 = arith.constant 0 : index
    %c16 = arith.constant 16 : index
    %c0_593 = arith.constant 0 : index
    %643 = vector.load %arg6[%c0_591, %c0_592, %c16, %c0_593] : memref<1x8x32x32xf32, #tpu.memory_space<vmem>>, vector<1x8x1x32xf32>
    %644 = vector.shape_cast %643 : vector<1x8x1x32xf32> to vector<1x8x32xf32>
    %645 = vector.shape_cast %642 : vector<1x8x32xf32> to vector<1x8x1x32xf32>
    tpu.vector_store %arg6[%c0_591, %c0_592, %c16, %c0_593], %645 {strides = array<i32>} : memref<1x8x32x32xf32, #tpu.memory_space<vmem>>, vector<1x8x1x32xf32>,
    %c0_594 = arith.constant 0 : index
    %c8_595 = arith.constant 8 : index
    %c0_596 = arith.constant 0 : index
    %c0_597 = arith.constant 0 : index
    %646 = vector.load %arg7[%c0_594, %c8_595, %c0_596, %c0_597] : memref<1x16x8x32xf32, #tpu.memory_space<vmem>>, vector<1x1x8x32xf32>
    %647 = vector.shape_cast %646 : vector<1x1x8x32xf32> to vector<1x8x32xf32>
    %cst_598 = arith.constant 0.774193525 : f32
    %648 = vector.broadcast %cst_598 : f32 to vector<1x8x32xf32>
    %649 = arith.mulf %647, %648 : vector<1x8x32xf32>
    %c0_599 = arith.constant 0 : index
    %c9_600 = arith.constant 9 : index
    %c0_601 = arith.constant 0 : index
    %c0_602 = arith.constant 0 : index
    %650 = vector.load %arg7[%c0_599, %c9_600, %c0_601, %c0_602] : memref<1x16x8x32xf32, #tpu.memory_space<vmem>>, vector<1x1x8x32xf32>
    %651 = vector.shape_cast %650 : vector<1x1x8x32xf32> to vector<1x8x32xf32>
    %cst_603 = arith.constant 0.225806445 : f32
    %652 = vector.broadcast %cst_603 : f32 to vector<1x8x32xf32>
    %653 = arith.mulf %651, %652 : vector<1x8x32xf32>
    %654 = arith.addf %649, %653 : vector<1x8x32xf32>
    %cst_604 = arith.constant 0.000000e+00 : f32
    %655 = vector.broadcast %cst_604 : f32 to vector<1x8x32xf32>
    %656 = arith.maximumf %654, %655 : vector<1x8x32xf32>
    %657 = arith.mulf %656, %397 : vector<1x8x32xf32>
    %c0_605 = arith.constant 0 : index
    %c0_606 = arith.constant 0 : index
    %c17 = arith.constant 17 : index
    %c0_607 = arith.constant 0 : index
    %658 = vector.load %arg6[%c0_605, %c0_606, %c17, %c0_607] : memref<1x8x32x32xf32, #tpu.memory_space<vmem>>, vector<1x8x1x32xf32>
    %659 = vector.shape_cast %658 : vector<1x8x1x32xf32> to vector<1x8x32xf32>
    %660 = vector.shape_cast %657 : vector<1x8x32xf32> to vector<1x8x1x32xf32>
    tpu.vector_store %arg6[%c0_605, %c0_606, %c17, %c0_607], %660 {strides = array<i32>} : memref<1x8x32x32xf32, #tpu.memory_space<vmem>>, vector<1x8x1x32xf32>,
    %c0_608 = arith.constant 0 : index
    %c8_609 = arith.constant 8 : index
    %c0_610 = arith.constant 0 : index
    %c0_611 = arith.constant 0 : index
    %661 = vector.load %arg7[%c0_608, %c8_609, %c0_610, %c0_611] : memref<1x16x8x32xf32, #tpu.memory_space<vmem>>, vector<1x1x8x32xf32>
    %662 = vector.shape_cast %661 : vector<1x1x8x32xf32> to vector<1x8x32xf32>
    %cst_612 = arith.constant 0.290322572 : f32
    %663 = vector.broadcast %cst_612 : f32 to vector<1x8x32xf32>
    %664 = arith.mulf %662, %663 : vector<1x8x32xf32>
    %c0_613 = arith.constant 0 : index
    %c9_614 = arith.constant 9 : index
    %c0_615 = arith.constant 0 : index
    %c0_616 = arith.constant 0 : index
    %665 = vector.load %arg7[%c0_613, %c9_614, %c0_615, %c0_616] : memref<1x16x8x32xf32, #tpu.memory_space<vmem>>, vector<1x1x8x32xf32>
    %666 = vector.shape_cast %665 : vector<1x1x8x32xf32> to vector<1x8x32xf32>
    %cst_617 = arith.constant 0.709677398 : f32
    %667 = vector.broadcast %cst_617 : f32 to vector<1x8x32xf32>
    %668 = arith.mulf %666, %667 : vector<1x8x32xf32>
    %669 = arith.addf %664, %668 : vector<1x8x32xf32>
    %cst_618 = arith.constant 0.000000e+00 : f32
    %670 = vector.broadcast %cst_618 : f32 to vector<1x8x32xf32>
    %671 = arith.maximumf %669, %670 : vector<1x8x32xf32>
    %672 = arith.mulf %671, %397 : vector<1x8x32xf32>
    %c0_619 = arith.constant 0 : index
    %c0_620 = arith.constant 0 : index
    %c18 = arith.constant 18 : index
    %c0_621 = arith.constant 0 : index
    %673 = vector.load %arg6[%c0_619, %c0_620, %c18, %c0_621] : memref<1x8x32x32xf32, #tpu.memory_space<vmem>>, vector<1x8x1x32xf32>
    %674 = vector.shape_cast %673 : vector<1x8x1x32xf32> to vector<1x8x32xf32>
    %675 = vector.shape_cast %672 : vector<1x8x32xf32> to vector<1x8x1x32xf32>
    tpu.vector_store %arg6[%c0_619, %c0_620, %c18, %c0_621], %675 {strides = array<i32>} : memref<1x8x32x32xf32, #tpu.memory_space<vmem>>, vector<1x8x1x32xf32>,
    %c0_622 = arith.constant 0 : index
    %c9_623 = arith.constant 9 : index
    %c0_624 = arith.constant 0 : index
    %c0_625 = arith.constant 0 : index
    %676 = vector.load %arg7[%c0_622, %c9_623, %c0_624, %c0_625] : memref<1x16x8x32xf32, #tpu.memory_space<vmem>>, vector<1x1x8x32xf32>
    %677 = vector.shape_cast %676 : vector<1x1x8x32xf32> to vector<1x8x32xf32>
    %cst_626 = arith.constant 0.806451618 : f32
    %678 = vector.broadcast %cst_626 : f32 to vector<1x8x32xf32>
    %679 = arith.mulf %677, %678 : vector<1x8x32xf32>
    %c0_627 = arith.constant 0 : index
    %c10_628 = arith.constant 10 : index
    %c0_629 = arith.constant 0 : index
    %c0_630 = arith.constant 0 : index
    %680 = vector.load %arg7[%c0_627, %c10_628, %c0_629, %c0_630] : memref<1x16x8x32xf32, #tpu.memory_space<vmem>>, vector<1x1x8x32xf32>
    %681 = vector.shape_cast %680 : vector<1x1x8x32xf32> to vector<1x8x32xf32>
    %cst_631 = arith.constant 0.193548381 : f32
    %682 = vector.broadcast %cst_631 : f32 to vector<1x8x32xf32>
    %683 = arith.mulf %681, %682 : vector<1x8x32xf32>
    %684 = arith.addf %679, %683 : vector<1x8x32xf32>
    %cst_632 = arith.constant 0.000000e+00 : f32
    %685 = vector.broadcast %cst_632 : f32 to vector<1x8x32xf32>
    %686 = arith.maximumf %684, %685 : vector<1x8x32xf32>
    %687 = arith.mulf %686, %397 : vector<1x8x32xf32>
    %c0_633 = arith.constant 0 : index
    %c0_634 = arith.constant 0 : index
    %c19 = arith.constant 19 : index
    %c0_635 = arith.constant 0 : index
    %688 = vector.load %arg6[%c0_633, %c0_634, %c19, %c0_635] : memref<1x8x32x32xf32, #tpu.memory_space<vmem>>, vector<1x8x1x32xf32>
    %689 = vector.shape_cast %688 : vector<1x8x1x32xf32> to vector<1x8x32xf32>
    %690 = vector.shape_cast %687 : vector<1x8x32xf32> to vector<1x8x1x32xf32>
    tpu.vector_store %arg6[%c0_633, %c0_634, %c19, %c0_635], %690 {strides = array<i32>} : memref<1x8x32x32xf32, #tpu.memory_space<vmem>>, vector<1x8x1x32xf32>,
    %c0_636 = arith.constant 0 : index
    %c9_637 = arith.constant 9 : index
    %c0_638 = arith.constant 0 : index
    %c0_639 = arith.constant 0 : index
    %691 = vector.load %arg7[%c0_636, %c9_637, %c0_638, %c0_639] : memref<1x16x8x32xf32, #tpu.memory_space<vmem>>, vector<1x1x8x32xf32>
    %692 = vector.shape_cast %691 : vector<1x1x8x32xf32> to vector<1x8x32xf32>
    %cst_640 = arith.constant 0.322580636 : f32
    %693 = vector.broadcast %cst_640 : f32 to vector<1x8x32xf32>
    %694 = arith.mulf %692, %693 : vector<1x8x32xf32>
    %c0_641 = arith.constant 0 : index
    %c10_642 = arith.constant 10 : index
    %c0_643 = arith.constant 0 : index
    %c0_644 = arith.constant 0 : index
    %695 = vector.load %arg7[%c0_641, %c10_642, %c0_643, %c0_644] : memref<1x16x8x32xf32, #tpu.memory_space<vmem>>, vector<1x1x8x32xf32>
    %696 = vector.shape_cast %695 : vector<1x1x8x32xf32> to vector<1x8x32xf32>
    %cst_645 = arith.constant 0.677419364 : f32
    %697 = vector.broadcast %cst_645 : f32 to vector<1x8x32xf32>
    %698 = arith.mulf %696, %697 : vector<1x8x32xf32>
    %699 = arith.addf %694, %698 : vector<1x8x32xf32>
    %cst_646 = arith.constant 0.000000e+00 : f32
    %700 = vector.broadcast %cst_646 : f32 to vector<1x8x32xf32>
    %701 = arith.maximumf %699, %700 : vector<1x8x32xf32>
    %702 = arith.mulf %701, %397 : vector<1x8x32xf32>
    %c0_647 = arith.constant 0 : index
    %c0_648 = arith.constant 0 : index
    %c20 = arith.constant 20 : index
    %c0_649 = arith.constant 0 : index
    %703 = vector.load %arg6[%c0_647, %c0_648, %c20, %c0_649] : memref<1x8x32x32xf32, #tpu.memory_space<vmem>>, vector<1x8x1x32xf32>
    %704 = vector.shape_cast %703 : vector<1x8x1x32xf32> to vector<1x8x32xf32>
    %705 = vector.shape_cast %702 : vector<1x8x32xf32> to vector<1x8x1x32xf32>
    tpu.vector_store %arg6[%c0_647, %c0_648, %c20, %c0_649], %705 {strides = array<i32>} : memref<1x8x32x32xf32, #tpu.memory_space<vmem>>, vector<1x8x1x32xf32>,
    %c0_650 = arith.constant 0 : index
    %c10_651 = arith.constant 10 : index
    %c0_652 = arith.constant 0 : index
    %c0_653 = arith.constant 0 : index
    %706 = vector.load %arg7[%c0_650, %c10_651, %c0_652, %c0_653] : memref<1x16x8x32xf32, #tpu.memory_space<vmem>>, vector<1x1x8x32xf32>
    %707 = vector.shape_cast %706 : vector<1x1x8x32xf32> to vector<1x8x32xf32>
    %cst_654 = arith.constant 0.838709652 : f32
    %708 = vector.broadcast %cst_654 : f32 to vector<1x8x32xf32>
    %709 = arith.mulf %707, %708 : vector<1x8x32xf32>
    %c0_655 = arith.constant 0 : index
    %c11_656 = arith.constant 11 : index
    %c0_657 = arith.constant 0 : index
    %c0_658 = arith.constant 0 : index
    %710 = vector.load %arg7[%c0_655, %c11_656, %c0_657, %c0_658] : memref<1x16x8x32xf32, #tpu.memory_space<vmem>>, vector<1x1x8x32xf32>
    %711 = vector.shape_cast %710 : vector<1x1x8x32xf32> to vector<1x8x32xf32>
    %cst_659 = arith.constant 0.161290318 : f32
    %712 = vector.broadcast %cst_659 : f32 to vector<1x8x32xf32>
    %713 = arith.mulf %711, %712 : vector<1x8x32xf32>
    %714 = arith.addf %709, %713 : vector<1x8x32xf32>
    %cst_660 = arith.constant 0.000000e+00 : f32
    %715 = vector.broadcast %cst_660 : f32 to vector<1x8x32xf32>
    %716 = arith.maximumf %714, %715 : vector<1x8x32xf32>
    %717 = arith.mulf %716, %397 : vector<1x8x32xf32>
    %c0_661 = arith.constant 0 : index
    %c0_662 = arith.constant 0 : index
    %c21 = arith.constant 21 : index
    %c0_663 = arith.constant 0 : index
    %718 = vector.load %arg6[%c0_661, %c0_662, %c21, %c0_663] : memref<1x8x32x32xf32, #tpu.memory_space<vmem>>, vector<1x8x1x32xf32>
    %719 = vector.shape_cast %718 : vector<1x8x1x32xf32> to vector<1x8x32xf32>
    %720 = vector.shape_cast %717 : vector<1x8x32xf32> to vector<1x8x1x32xf32>
    tpu.vector_store %arg6[%c0_661, %c0_662, %c21, %c0_663], %720 {strides = array<i32>} : memref<1x8x32x32xf32, #tpu.memory_space<vmem>>, vector<1x8x1x32xf32>,
    %c0_664 = arith.constant 0 : index
    %c10_665 = arith.constant 10 : index
    %c0_666 = arith.constant 0 : index
    %c0_667 = arith.constant 0 : index
    %721 = vector.load %arg7[%c0_664, %c10_665, %c0_666, %c0_667] : memref<1x16x8x32xf32, #tpu.memory_space<vmem>>, vector<1x1x8x32xf32>
    %722 = vector.shape_cast %721 : vector<1x1x8x32xf32> to vector<1x8x32xf32>
    %cst_668 = arith.constant 0.354838699 : f32
    %723 = vector.broadcast %cst_668 : f32 to vector<1x8x32xf32>
    %724 = arith.mulf %722, %723 : vector<1x8x32xf32>
    %c0_669 = arith.constant 0 : index
    %c11_670 = arith.constant 11 : index
    %c0_671 = arith.constant 0 : index
    %c0_672 = arith.constant 0 : index
    %725 = vector.load %arg7[%c0_669, %c11_670, %c0_671, %c0_672] : memref<1x16x8x32xf32, #tpu.memory_space<vmem>>, vector<1x1x8x32xf32>
    %726 = vector.shape_cast %725 : vector<1x1x8x32xf32> to vector<1x8x32xf32>
    %cst_673 = arith.constant 0.645161271 : f32
    %727 = vector.broadcast %cst_673 : f32 to vector<1x8x32xf32>
    %728 = arith.mulf %726, %727 : vector<1x8x32xf32>
    %729 = arith.addf %724, %728 : vector<1x8x32xf32>
    %cst_674 = arith.constant 0.000000e+00 : f32
    %730 = vector.broadcast %cst_674 : f32 to vector<1x8x32xf32>
    %731 = arith.maximumf %729, %730 : vector<1x8x32xf32>
    %732 = arith.mulf %731, %397 : vector<1x8x32xf32>
    %c0_675 = arith.constant 0 : index
    %c0_676 = arith.constant 0 : index
    %c22 = arith.constant 22 : index
    %c0_677 = arith.constant 0 : index
    %733 = vector.load %arg6[%c0_675, %c0_676, %c22, %c0_677] : memref<1x8x32x32xf32, #tpu.memory_space<vmem>>, vector<1x8x1x32xf32>
    %734 = vector.shape_cast %733 : vector<1x8x1x32xf32> to vector<1x8x32xf32>
    %735 = vector.shape_cast %732 : vector<1x8x32xf32> to vector<1x8x1x32xf32>
    tpu.vector_store %arg6[%c0_675, %c0_676, %c22, %c0_677], %735 {strides = array<i32>} : memref<1x8x32x32xf32, #tpu.memory_space<vmem>>, vector<1x8x1x32xf32>,
    %c0_678 = arith.constant 0 : index
    %c11_679 = arith.constant 11 : index
    %c0_680 = arith.constant 0 : index
    %c0_681 = arith.constant 0 : index
    %736 = vector.load %arg7[%c0_678, %c11_679, %c0_680, %c0_681] : memref<1x16x8x32xf32, #tpu.memory_space<vmem>>, vector<1x1x8x32xf32>
    %737 = vector.shape_cast %736 : vector<1x1x8x32xf32> to vector<1x8x32xf32>
    %cst_682 = arith.constant 0.870967745 : f32
    %738 = vector.broadcast %cst_682 : f32 to vector<1x8x32xf32>
    %739 = arith.mulf %737, %738 : vector<1x8x32xf32>
    %c0_683 = arith.constant 0 : index
    %c12_684 = arith.constant 12 : index
    %c0_685 = arith.constant 0 : index
    %c0_686 = arith.constant 0 : index
    %740 = vector.load %arg7[%c0_683, %c12_684, %c0_685, %c0_686] : memref<1x16x8x32xf32, #tpu.memory_space<vmem>>, vector<1x1x8x32xf32>
    %741 = vector.shape_cast %740 : vector<1x1x8x32xf32> to vector<1x8x32xf32>
    %cst_687 = arith.constant 0.129032254 : f32
    %742 = vector.broadcast %cst_687 : f32 to vector<1x8x32xf32>
    %743 = arith.mulf %741, %742 : vector<1x8x32xf32>
    %744 = arith.addf %739, %743 : vector<1x8x32xf32>
    %cst_688 = arith.constant 0.000000e+00 : f32
    %745 = vector.broadcast %cst_688 : f32 to vector<1x8x32xf32>
    %746 = arith.maximumf %744, %745 : vector<1x8x32xf32>
    %747 = arith.mulf %746, %397 : vector<1x8x32xf32>
    %c0_689 = arith.constant 0 : index
    %c0_690 = arith.constant 0 : index
    %c23 = arith.constant 23 : index
    %c0_691 = arith.constant 0 : index
    %748 = vector.load %arg6[%c0_689, %c0_690, %c23, %c0_691] : memref<1x8x32x32xf32, #tpu.memory_space<vmem>>, vector<1x8x1x32xf32>
    %749 = vector.shape_cast %748 : vector<1x8x1x32xf32> to vector<1x8x32xf32>
    %750 = vector.shape_cast %747 : vector<1x8x32xf32> to vector<1x8x1x32xf32>
    tpu.vector_store %arg6[%c0_689, %c0_690, %c23, %c0_691], %750 {strides = array<i32>} : memref<1x8x32x32xf32, #tpu.memory_space<vmem>>, vector<1x8x1x32xf32>,
    %c0_692 = arith.constant 0 : index
    %c11_693 = arith.constant 11 : index
    %c0_694 = arith.constant 0 : index
    %c0_695 = arith.constant 0 : index
    %751 = vector.load %arg7[%c0_692, %c11_693, %c0_694, %c0_695] : memref<1x16x8x32xf32, #tpu.memory_space<vmem>>, vector<1x1x8x32xf32>
    %752 = vector.shape_cast %751 : vector<1x1x8x32xf32> to vector<1x8x32xf32>
    %cst_696 = arith.constant 0.387096763 : f32
    %753 = vector.broadcast %cst_696 : f32 to vector<1x8x32xf32>
    %754 = arith.mulf %752, %753 : vector<1x8x32xf32>
    %c0_697 = arith.constant 0 : index
    %c12_698 = arith.constant 12 : index
    %c0_699 = arith.constant 0 : index
    %c0_700 = arith.constant 0 : index
    %755 = vector.load %arg7[%c0_697, %c12_698, %c0_699, %c0_700] : memref<1x16x8x32xf32, #tpu.memory_space<vmem>>, vector<1x1x8x32xf32>
    %756 = vector.shape_cast %755 : vector<1x1x8x32xf32> to vector<1x8x32xf32>
    %cst_701 = arith.constant 0.612903237 : f32
    %757 = vector.broadcast %cst_701 : f32 to vector<1x8x32xf32>
    %758 = arith.mulf %756, %757 : vector<1x8x32xf32>
    %759 = arith.addf %754, %758 : vector<1x8x32xf32>
    %cst_702 = arith.constant 0.000000e+00 : f32
    %760 = vector.broadcast %cst_702 : f32 to vector<1x8x32xf32>
    %761 = arith.maximumf %759, %760 : vector<1x8x32xf32>
    %762 = arith.mulf %761, %397 : vector<1x8x32xf32>
    %c0_703 = arith.constant 0 : index
    %c0_704 = arith.constant 0 : index
    %c24 = arith.constant 24 : index
    %c0_705 = arith.constant 0 : index
    %763 = vector.load %arg6[%c0_703, %c0_704, %c24, %c0_705] : memref<1x8x32x32xf32, #tpu.memory_space<vmem>>, vector<1x8x1x32xf32>
    %764 = vector.shape_cast %763 : vector<1x8x1x32xf32> to vector<1x8x32xf32>
    %765 = vector.shape_cast %762 : vector<1x8x32xf32> to vector<1x8x1x32xf32>
    tpu.vector_store %arg6[%c0_703, %c0_704, %c24, %c0_705], %765 {strides = array<i32>} : memref<1x8x32x32xf32, #tpu.memory_space<vmem>>, vector<1x8x1x32xf32>,
    %c0_706 = arith.constant 0 : index
    %c12_707 = arith.constant 12 : index
    %c0_708 = arith.constant 0 : index
    %c0_709 = arith.constant 0 : index
    %766 = vector.load %arg7[%c0_706, %c12_707, %c0_708, %c0_709] : memref<1x16x8x32xf32, #tpu.memory_space<vmem>>, vector<1x1x8x32xf32>
    %767 = vector.shape_cast %766 : vector<1x1x8x32xf32> to vector<1x8x32xf32>
    %cst_710 = arith.constant 0.903225779 : f32
    %768 = vector.broadcast %cst_710 : f32 to vector<1x8x32xf32>
    %769 = arith.mulf %767, %768 : vector<1x8x32xf32>
    %c0_711 = arith.constant 0 : index
    %c13_712 = arith.constant 13 : index
    %c0_713 = arith.constant 0 : index
    %c0_714 = arith.constant 0 : index
    %770 = vector.load %arg7[%c0_711, %c13_712, %c0_713, %c0_714] : memref<1x16x8x32xf32, #tpu.memory_space<vmem>>, vector<1x1x8x32xf32>
    %771 = vector.shape_cast %770 : vector<1x1x8x32xf32> to vector<1x8x32xf32>
    %cst_715 = arith.constant 0.0967741906 : f32
    %772 = vector.broadcast %cst_715 : f32 to vector<1x8x32xf32>
    %773 = arith.mulf %771, %772 : vector<1x8x32xf32>
    %774 = arith.addf %769, %773 : vector<1x8x32xf32>
    %cst_716 = arith.constant 0.000000e+00 : f32
    %775 = vector.broadcast %cst_716 : f32 to vector<1x8x32xf32>
    %776 = arith.maximumf %774, %775 : vector<1x8x32xf32>
    %777 = arith.mulf %776, %397 : vector<1x8x32xf32>
    %c0_717 = arith.constant 0 : index
    %c0_718 = arith.constant 0 : index
    %c25 = arith.constant 25 : index
    %c0_719 = arith.constant 0 : index
    %778 = vector.load %arg6[%c0_717, %c0_718, %c25, %c0_719] : memref<1x8x32x32xf32, #tpu.memory_space<vmem>>, vector<1x8x1x32xf32>
    %779 = vector.shape_cast %778 : vector<1x8x1x32xf32> to vector<1x8x32xf32>
    %780 = vector.shape_cast %777 : vector<1x8x32xf32> to vector<1x8x1x32xf32>
    tpu.vector_store %arg6[%c0_717, %c0_718, %c25, %c0_719], %780 {strides = array<i32>} : memref<1x8x32x32xf32, #tpu.memory_space<vmem>>, vector<1x8x1x32xf32>,
    %c0_720 = arith.constant 0 : index
    %c12_721 = arith.constant 12 : index
    %c0_722 = arith.constant 0 : index
    %c0_723 = arith.constant 0 : index
    %781 = vector.load %arg7[%c0_720, %c12_721, %c0_722, %c0_723] : memref<1x16x8x32xf32, #tpu.memory_space<vmem>>, vector<1x1x8x32xf32>
    %782 = vector.shape_cast %781 : vector<1x1x8x32xf32> to vector<1x8x32xf32>
    %cst_724 = arith.constant 0.419354826 : f32
    %783 = vector.broadcast %cst_724 : f32 to vector<1x8x32xf32>
    %784 = arith.mulf %782, %783 : vector<1x8x32xf32>
    %c0_725 = arith.constant 0 : index
    %c13_726 = arith.constant 13 : index
    %c0_727 = arith.constant 0 : index
    %c0_728 = arith.constant 0 : index
    %785 = vector.load %arg7[%c0_725, %c13_726, %c0_727, %c0_728] : memref<1x16x8x32xf32, #tpu.memory_space<vmem>>, vector<1x1x8x32xf32>
    %786 = vector.shape_cast %785 : vector<1x1x8x32xf32> to vector<1x8x32xf32>
    %cst_729 = arith.constant 0.580645144 : f32
    %787 = vector.broadcast %cst_729 : f32 to vector<1x8x32xf32>
    %788 = arith.mulf %786, %787 : vector<1x8x32xf32>
    %789 = arith.addf %784, %788 : vector<1x8x32xf32>
    %cst_730 = arith.constant 0.000000e+00 : f32
    %790 = vector.broadcast %cst_730 : f32 to vector<1x8x32xf32>
    %791 = arith.maximumf %789, %790 : vector<1x8x32xf32>
    %792 = arith.mulf %791, %397 : vector<1x8x32xf32>
    %c0_731 = arith.constant 0 : index
    %c0_732 = arith.constant 0 : index
    %c26 = arith.constant 26 : index
    %c0_733 = arith.constant 0 : index
    %793 = vector.load %arg6[%c0_731, %c0_732, %c26, %c0_733] : memref<1x8x32x32xf32, #tpu.memory_space<vmem>>, vector<1x8x1x32xf32>
    %794 = vector.shape_cast %793 : vector<1x8x1x32xf32> to vector<1x8x32xf32>
    %795 = vector.shape_cast %792 : vector<1x8x32xf32> to vector<1x8x1x32xf32>
    tpu.vector_store %arg6[%c0_731, %c0_732, %c26, %c0_733], %795 {strides = array<i32>} : memref<1x8x32x32xf32, #tpu.memory_space<vmem>>, vector<1x8x1x32xf32>,
    %c0_734 = arith.constant 0 : index
    %c13_735 = arith.constant 13 : index
    %c0_736 = arith.constant 0 : index
    %c0_737 = arith.constant 0 : index
    %796 = vector.load %arg7[%c0_734, %c13_735, %c0_736, %c0_737] : memref<1x16x8x32xf32, #tpu.memory_space<vmem>>, vector<1x1x8x32xf32>
    %797 = vector.shape_cast %796 : vector<1x1x8x32xf32> to vector<1x8x32xf32>
    %cst_738 = arith.constant 0.935483872 : f32
    %798 = vector.broadcast %cst_738 : f32 to vector<1x8x32xf32>
    %799 = arith.mulf %797, %798 : vector<1x8x32xf32>
    %c0_739 = arith.constant 0 : index
    %c14_740 = arith.constant 14 : index
    %c0_741 = arith.constant 0 : index
    %c0_742 = arith.constant 0 : index
    %800 = vector.load %arg7[%c0_739, %c14_740, %c0_741, %c0_742] : memref<1x16x8x32xf32, #tpu.memory_space<vmem>>, vector<1x1x8x32xf32>
    %801 = vector.shape_cast %800 : vector<1x1x8x32xf32> to vector<1x8x32xf32>
    %cst_743 = arith.constant 0.0645161271 : f32
    %802 = vector.broadcast %cst_743 : f32 to vector<1x8x32xf32>
    %803 = arith.mulf %801, %802 : vector<1x8x32xf32>
    %804 = arith.addf %799, %803 : vector<1x8x32xf32>
    %cst_744 = arith.constant 0.000000e+00 : f32
    %805 = vector.broadcast %cst_744 : f32 to vector<1x8x32xf32>
    %806 = arith.maximumf %804, %805 : vector<1x8x32xf32>
    %807 = arith.mulf %806, %397 : vector<1x8x32xf32>
    %c0_745 = arith.constant 0 : index
    %c0_746 = arith.constant 0 : index
    %c27 = arith.constant 27 : index
    %c0_747 = arith.constant 0 : index
    %808 = vector.load %arg6[%c0_745, %c0_746, %c27, %c0_747] : memref<1x8x32x32xf32, #tpu.memory_space<vmem>>, vector<1x8x1x32xf32>
    %809 = vector.shape_cast %808 : vector<1x8x1x32xf32> to vector<1x8x32xf32>
    %810 = vector.shape_cast %807 : vector<1x8x32xf32> to vector<1x8x1x32xf32>
    tpu.vector_store %arg6[%c0_745, %c0_746, %c27, %c0_747], %810 {strides = array<i32>} : memref<1x8x32x32xf32, #tpu.memory_space<vmem>>, vector<1x8x1x32xf32>,
    %c0_748 = arith.constant 0 : index
    %c13_749 = arith.constant 13 : index
    %c0_750 = arith.constant 0 : index
    %c0_751 = arith.constant 0 : index
    %811 = vector.load %arg7[%c0_748, %c13_749, %c0_750, %c0_751] : memref<1x16x8x32xf32, #tpu.memory_space<vmem>>, vector<1x1x8x32xf32>
    %812 = vector.shape_cast %811 : vector<1x1x8x32xf32> to vector<1x8x32xf32>
    %cst_752 = arith.constant 0.45161289 : f32
    %813 = vector.broadcast %cst_752 : f32 to vector<1x8x32xf32>
    %814 = arith.mulf %812, %813 : vector<1x8x32xf32>
    %c0_753 = arith.constant 0 : index
    %c14_754 = arith.constant 14 : index
    %c0_755 = arith.constant 0 : index
    %c0_756 = arith.constant 0 : index
    %815 = vector.load %arg7[%c0_753, %c14_754, %c0_755, %c0_756] : memref<1x16x8x32xf32, #tpu.memory_space<vmem>>, vector<1x1x8x32xf32>
    %816 = vector.shape_cast %815 : vector<1x1x8x32xf32> to vector<1x8x32xf32>
    %cst_757 = arith.constant 0.54838711 : f32
    %817 = vector.broadcast %cst_757 : f32 to vector<1x8x32xf32>
    %818 = arith.mulf %816, %817 : vector<1x8x32xf32>
    %819 = arith.addf %814, %818 : vector<1x8x32xf32>
    %cst_758 = arith.constant 0.000000e+00 : f32
    %820 = vector.broadcast %cst_758 : f32 to vector<1x8x32xf32>
    %821 = arith.maximumf %819, %820 : vector<1x8x32xf32>
    %822 = arith.mulf %821, %397 : vector<1x8x32xf32>
    %c0_759 = arith.constant 0 : index
    %c0_760 = arith.constant 0 : index
    %c28 = arith.constant 28 : index
    %c0_761 = arith.constant 0 : index
    %823 = vector.load %arg6[%c0_759, %c0_760, %c28, %c0_761] : memref<1x8x32x32xf32, #tpu.memory_space<vmem>>, vector<1x8x1x32xf32>
    %824 = vector.shape_cast %823 : vector<1x8x1x32xf32> to vector<1x8x32xf32>
    %825 = vector.shape_cast %822 : vector<1x8x32xf32> to vector<1x8x1x32xf32>
    tpu.vector_store %arg6[%c0_759, %c0_760, %c28, %c0_761], %825 {strides = array<i32>} : memref<1x8x32x32xf32, #tpu.memory_space<vmem>>, vector<1x8x1x32xf32>,
    %c0_762 = arith.constant 0 : index
    %c14_763 = arith.constant 14 : index
    %c0_764 = arith.constant 0 : index
    %c0_765 = arith.constant 0 : index
    %826 = vector.load %arg7[%c0_762, %c14_763, %c0_764, %c0_765] : memref<1x16x8x32xf32, #tpu.memory_space<vmem>>, vector<1x1x8x32xf32>
    %827 = vector.shape_cast %826 : vector<1x1x8x32xf32> to vector<1x8x32xf32>
    %cst_766 = arith.constant 0.967741906 : f32
    %828 = vector.broadcast %cst_766 : f32 to vector<1x8x32xf32>
    %829 = arith.mulf %827, %828 : vector<1x8x32xf32>
    %c0_767 = arith.constant 0 : index
    %c15_768 = arith.constant 15 : index
    %c0_769 = arith.constant 0 : index
    %c0_770 = arith.constant 0 : index
    %830 = vector.load %arg7[%c0_767, %c15_768, %c0_769, %c0_770] : memref<1x16x8x32xf32, #tpu.memory_space<vmem>>, vector<1x1x8x32xf32>
    %831 = vector.shape_cast %830 : vector<1x1x8x32xf32> to vector<1x8x32xf32>
    %cst_771 = arith.constant 0.0322580636 : f32
    %832 = vector.broadcast %cst_771 : f32 to vector<1x8x32xf32>
    %833 = arith.mulf %831, %832 : vector<1x8x32xf32>
    %834 = arith.addf %829, %833 : vector<1x8x32xf32>
    %cst_772 = arith.constant 0.000000e+00 : f32
    %835 = vector.broadcast %cst_772 : f32 to vector<1x8x32xf32>
    %836 = arith.maximumf %834, %835 : vector<1x8x32xf32>
    %837 = arith.mulf %836, %397 : vector<1x8x32xf32>
    %c0_773 = arith.constant 0 : index
    %c0_774 = arith.constant 0 : index
    %c29 = arith.constant 29 : index
    %c0_775 = arith.constant 0 : index
    %838 = vector.load %arg6[%c0_773, %c0_774, %c29, %c0_775] : memref<1x8x32x32xf32, #tpu.memory_space<vmem>>, vector<1x8x1x32xf32>
    %839 = vector.shape_cast %838 : vector<1x8x1x32xf32> to vector<1x8x32xf32>
    %840 = vector.shape_cast %837 : vector<1x8x32xf32> to vector<1x8x1x32xf32>
    tpu.vector_store %arg6[%c0_773, %c0_774, %c29, %c0_775], %840 {strides = array<i32>} : memref<1x8x32x32xf32, #tpu.memory_space<vmem>>, vector<1x8x1x32xf32>,
    %c0_776 = arith.constant 0 : index
    %c14_777 = arith.constant 14 : index
    %c0_778 = arith.constant 0 : index
    %c0_779 = arith.constant 0 : index
    %841 = vector.load %arg7[%c0_776, %c14_777, %c0_778, %c0_779] : memref<1x16x8x32xf32, #tpu.memory_space<vmem>>, vector<1x1x8x32xf32>
    %842 = vector.shape_cast %841 : vector<1x1x8x32xf32> to vector<1x8x32xf32>
    %cst_780 = arith.constant 0.483870953 : f32
    %843 = vector.broadcast %cst_780 : f32 to vector<1x8x32xf32>
    %844 = arith.mulf %842, %843 : vector<1x8x32xf32>
    %c0_781 = arith.constant 0 : index
    %c15_782 = arith.constant 15 : index
    %c0_783 = arith.constant 0 : index
    %c0_784 = arith.constant 0 : index
    %845 = vector.load %arg7[%c0_781, %c15_782, %c0_783, %c0_784] : memref<1x16x8x32xf32, #tpu.memory_space<vmem>>, vector<1x1x8x32xf32>
    %846 = vector.shape_cast %845 : vector<1x1x8x32xf32> to vector<1x8x32xf32>
    %cst_785 = arith.constant 5.161290e-01 : f32
    %847 = vector.broadcast %cst_785 : f32 to vector<1x8x32xf32>
    %848 = arith.mulf %846, %847 : vector<1x8x32xf32>
    %849 = arith.addf %844, %848 : vector<1x8x32xf32>
    %cst_786 = arith.constant 0.000000e+00 : f32
    %850 = vector.broadcast %cst_786 : f32 to vector<1x8x32xf32>
    %851 = arith.maximumf %849, %850 : vector<1x8x32xf32>
    %852 = arith.mulf %851, %397 : vector<1x8x32xf32>
    %c0_787 = arith.constant 0 : index
    %c0_788 = arith.constant 0 : index
    %c30 = arith.constant 30 : index
    %c0_789 = arith.constant 0 : index
    %853 = vector.load %arg6[%c0_787, %c0_788, %c30, %c0_789] : memref<1x8x32x32xf32, #tpu.memory_space<vmem>>, vector<1x8x1x32xf32>
    %854 = vector.shape_cast %853 : vector<1x8x1x32xf32> to vector<1x8x32xf32>
    %855 = vector.shape_cast %852 : vector<1x8x32xf32> to vector<1x8x1x32xf32>
    tpu.vector_store %arg6[%c0_787, %c0_788, %c30, %c0_789], %855 {strides = array<i32>} : memref<1x8x32x32xf32, #tpu.memory_space<vmem>>, vector<1x8x1x32xf32>,
    %c0_790 = arith.constant 0 : index
    %c15_791 = arith.constant 15 : index
    %c0_792 = arith.constant 0 : index
    %c0_793 = arith.constant 0 : index
    %856 = vector.load %arg7[%c0_790, %c15_791, %c0_792, %c0_793] : memref<1x16x8x32xf32, #tpu.memory_space<vmem>>, vector<1x1x8x32xf32>
    %857 = vector.shape_cast %856 : vector<1x1x8x32xf32> to vector<1x8x32xf32>
    %cst_794 = arith.constant 0.000000e+00 : f32
    %858 = vector.broadcast %cst_794 : f32 to vector<1x8x32xf32>
    %859 = arith.maximumf %857, %858 : vector<1x8x32xf32>
    %860 = arith.mulf %859, %397 : vector<1x8x32xf32>
    %c0_795 = arith.constant 0 : index
    %c0_796 = arith.constant 0 : index
    %c31 = arith.constant 31 : index
    %c0_797 = arith.constant 0 : index
    %861 = vector.load %arg6[%c0_795, %c0_796, %c31, %c0_797] : memref<1x8x32x32xf32, #tpu.memory_space<vmem>>, vector<1x8x1x32xf32>
    %862 = vector.shape_cast %861 : vector<1x8x1x32xf32> to vector<1x8x32xf32>
    %863 = vector.shape_cast %860 : vector<1x8x32xf32> to vector<1x8x1x32xf32>
    tpu.vector_store %arg6[%c0_795, %c0_796, %c31, %c0_797], %863 {strides = array<i32>} : memref<1x8x32x32xf32, #tpu.memory_space<vmem>>, vector<1x8x1x32xf32>,
    return
  }
  func.func @transform_0(%arg0: i32) -> (i32, i32) {
    %c0_i32 = arith.constant 0 : i32
    %c0_i32_0 = arith.constant 0 : i32
    return %arg0, %c0_i32 : i32, i32
  }
  func.func @transform_1(%arg0: i32) -> (i32, i32) {
    %c0_i32 = arith.constant 0 : i32
    %c0_i32_0 = arith.constant 0 : i32
    %c0_i32_1 = arith.constant 0 : i32
    return %c0_i32, %c0_i32_0 : i32, i32
  }
  func.func @transform_2(%arg0: i32) -> (i32, i32) {
    %c0_i32 = arith.constant 0 : i32
    %c0_i32_0 = arith.constant 0 : i32
    %c0_i32_1 = arith.constant 0 : i32
    return %c0_i32, %c0_i32_0 : i32, i32
  }
  func.func @transform_3(%arg0: i32) -> (i32, i32) {
    %c0_i32 = arith.constant 0 : i32
    %c0_i32_0 = arith.constant 0 : i32
    %c0_i32_1 = arith.constant 0 : i32
    return %c0_i32, %c0_i32_0 : i32, i32
  }
  func.func @transform_4(%arg0: i32) -> (i32, i32) {
    %c0_i32 = arith.constant 0 : i32
    %c0_i32_0 = arith.constant 0 : i32
    %c0_i32_1 = arith.constant 0 : i32
    return %c0_i32, %c0_i32_0 : i32, i32
  }
  func.func @transform_5(%arg0: i32) -> (i32, i32, i32, i32) {
    %c0_i32 = arith.constant 0 : i32
    %c0_i32_0 = arith.constant 0 : i32
    %c0_i32_1 = arith.constant 0 : i32
    %c0_i32_2 = arith.constant 0 : i32
    return %arg0, %c0_i32, %c0_i32_0, %c0_i32_1 : i32, i32, i32, i32
  }
}

</mosaic_0001>

<llo_original>
// kernel: tpu_custom_call.1
$region0: #{tpu_custom_call.1}
  #allocation0 [shape = 'u32[]', space=smem, size = 0x4, offset = 0x4, fixed_abs, tag = 'smem constant byte address 0x4 - core index']
  #allocation1 [shape = 'u32[144,128]{1,0:T(1,128)}', space=vmem, size = 0x12000, scoped, tag = 'internal scratch']
  #allocation2 [shape = 'f32[1,16,8,32]{3,2,1,0:T(8,128)}', space=vmem, size = 0x10000, scoped, tag = 'scratch operand']
  %s0 = inlined_call_operand.vmem [shape: f32[512,8], index: 0, kind: input, shape index: {}]
  %s1 = inlined_call_operand.vmem [shape: f32[8,8], index: 1, kind: input, shape index: {}]
  %s2 = inlined_call_operand.vmem [shape: f32[16,32], index: 2, kind: input, shape index: {}]
  %s3 = inlined_call_operand.vmem [shape: f32[8,2], index: 3, kind: input, shape index: {}]
  %s4 = inlined_call_operand.vmem [shape: f32[2,8], index: 4, kind: input, shape index: {}]
  %s5 = inlined_call_operand.hbm [shape: f32[2,8,32,32], index: 5, kind: output, shape index: {}]
  %s6 = sld [smem:[#allocation0]]
  $region53: #{tpu_custom_call.1} parent=0
    _
  %s8 = ssub.s32 1, %s6
  %s9 = scalar_select 0, %s8, %s6
  $region1: #{tpu_custom_call.1} parent=0
    #allocation3 [shape = 'u8[262144]{0}', space=vmem, size = 0x40000, scoped, tag = 'output window, operand 0']
    #allocation4 [shape = 's32[2]{0}', space=sflag, size = 0x8, scoped, tag = 'scoped memory for tpu_custom_call.1']
    %10 = vsyncpa [#allocation4], 0
    %s11 = scalar_lea.sflag [#allocation4], 1
    %12 = vsyncpa %s11, 0
    loop: start=0, step=1, limit=4
    $region2: #{tpu_custom_call.1} parent=1 // loop_pre_header
      _
    $region3: #{tpu_custom_call.1} parent=1 // loop_header
      %s14 = sphi 0, %s18
      %p15 = scmp.ge.s32.totalorder %s14, 4
      %s24 = sphi 0, %s26
      %s27 = sphi 0, %s24
      %s28 = sphi 0, %s27
      %s44 = sphi 0, %s28
      %s48 = sphi 0, %s48
      %s50 = sphi 0, %s48
      %s51 = sphi 0, %s50
      %s65 = sphi 0, %s51
      %s69 = sphi 0, %s69
      %s71 = sphi 0, %s69
      %s72 = sphi 0, %s71
      %s86 = sphi 0, %s72
      %s90 = sphi 0, %s90
      %s92 = sphi 0, %s90
      %s93 = sphi 0, %s92
      %s107 = sphi 0, %s93
      %s111 = sphi 0, %s111
      %s113 = sphi 0, %s111
      %s114 = sphi 0, %s113
      %s128 = sphi 0, %s114
      %s134 = sphi 0, %s136
      %s137 = sphi 0, %s134
      %s138 = sphi 0, %s137
      %s154 = sphi 0, %s138
    $region4: #{tpu_custom_call.1} parent=1 // loop_header_branch
      %17 = sbr.rel (%p15) target = $region8
    $region5: #{tpu_custom_call.1} parent=1 // loop_body
      %s19 = ssub.s32 %s14, 1
      %s20 = ssub.s32 %s14, 2
      %s21 = sadd.s32 %s14, 1
      %s22 = ssub.s32 %s14, %s21
      %p23 = scmp.eq.s32.totalorder %s22, 0
      %s25 = sadd.s32 %s24, 1
      %s26 = scalar_select %p23, %s24, %s25
      %p29 = pneg %p23
      %p30 = scmp.eq.s32.totalorder %s14, 1
      %p31 = por %p29, %p30
      %p32 = scmp.ne.s32.totalorder %s24, %s27
      %p33 = scmp.eq.s32.totalorder %s14, 0
      %p34 = por %p32, %p33
      %p35 = scmp.ne.s32.totalorder %s24, %s27
      %p36 = scmp.eq.s32.totalorder %s19, 1
      %p37 = por %p35, %p36
      %p38 = scmp.ne.s32.totalorder %s27, %s28
      %p39 = scmp.eq.s32.totalorder %s19, 0
      %p40 = por %p38, %p39
      %p41 = scmp.ne.s32.totalorder %s27, %s28
      %p42 = scmp.eq.s32.totalorder %s20, 1
      %p43 = por %p41, %p42
      %p45 = scmp.ne.s32.totalorder %s28, %s44
      %p46 = scmp.eq.s32.totalorder %s20, 0
      %p47 = por %p45, %p46
      %s49 = sadd.s32 %s48, 1
      %p52 = scmp.eq.s32.totalorder %s14, 1
      %p53 = scmp.ne.s32.totalorder %s48, %s50
      %p54 = scmp.eq.s32.totalorder %s14, 0
      %p55 = por %p53, %p54
      %p56 = scmp.ne.s32.totalorder %s48, %s50
      %p57 = scmp.eq.s32.totalorder %s19, 1
      %p58 = por %p56, %p57
      %p59 = scmp.ne.s32.totalorder %s50, %s51
      %p60 = scmp.eq.s32.totalorder %s19, 0
      %p61 = por %p59, %p60
      %p62 = scmp.ne.s32.totalorder %s50, %s51
      %p63 = scmp.eq.s32.totalorder %s20, 1
      %p64 = por %p62, %p63
      %p66 = scmp.ne.s32.totalorder %s51, %s65
      %p67 = scmp.eq.s32.totalorder %s20, 0
      %p68 = por %p66, %p67
      %s70 = sadd.s32 %s69, 1
      %p73 = scmp.eq.s32.totalorder %s14, 1
      %p74 = scmp.ne.s32.totalorder %s69, %s71
      %p75 = scmp.eq.s32.totalorder %s14, 0
      %p76 = por %p74, %p75
      %p77 = scmp.ne.s32.totalorder %s69, %s71
      %p78 = scmp.eq.s32.totalorder %s19, 1
      %p79 = por %p77, %p78
      %p80 = scmp.ne.s32.totalorder %s71, %s72
      %p81 = scmp.eq.s32.totalorder %s19, 0
      %p82 = por %p80, %p81
      %p83 = scmp.ne.s32.totalorder %s71, %s72
      %p84 = scmp.eq.s32.totalorder %s20, 1
      %p85 = por %p83, %p84
      %p87 = scmp.ne.s32.totalorder %s72, %s86
      %p88 = scmp.eq.s32.totalorder %s20, 0
      %p89 = por %p87, %p88
      %s91 = sadd.s32 %s90, 1
      %p94 = scmp.eq.s32.totalorder %s14, 1
      %p95 = scmp.ne.s32.totalorder %s90, %s92
      %p96 = scmp.eq.s32.totalorder %s14, 0
      %p97 = por %p95, %p96
      %p98 = scmp.ne.s32.totalorder %s90, %s92
      %p99 = scmp.eq.s32.totalorder %s19, 1
      %p100 = por %p98, %p99
      %p101 = scmp.ne.s32.totalorder %s92, %s93
      %p102 = scmp.eq.s32.totalorder %s19, 0
      %p103 = por %p101, %p102
      %p104 = scmp.ne.s32.totalorder %s92, %s93
      %p105 = scmp.eq.s32.totalorder %s20, 1
      %p106 = por %p104, %p105
      %p108 = scmp.ne.s32.totalorder %s93, %s107
      %p109 = scmp.eq.s32.totalorder %s20, 0
      %p110 = por %p108, %p109
      %s112 = sadd.s32 %s111, 1
      %p115 = scmp.eq.s32.totalorder %s14, 1
      %p116 = scmp.ne.s32.totalorder %s111, %s113
      %p117 = scmp.eq.s32.totalorder %s14, 0
      %p118 = por %p116, %p117
      %p119 = scmp.ne.s32.totalorder %s111, %s113
      %p120 = scmp.eq.s32.totalorder %s19, 1
      %p121 = por %p119, %p120
      %p122 = scmp.ne.s32.totalorder %s113, %s114
      %p123 = scmp.eq.s32.totalorder %s19, 0
      %p124 = por %p122, %p123
      %p125 = scmp.ne.s32.totalorder %s113, %s114
      %p126 = scmp.eq.s32.totalorder %s20, 1
      %p127 = por %p125, %p126
      %p129 = scmp.ne.s32.totalorder %s114, %s128
      %p130 = scmp.eq.s32.totalorder %s20, 0
      %p131 = por %p129, %p130
      %s132 = ssub.s32 %s14, %s21
      %p133 = scmp.eq.s32.totalorder %s132, 0
      %s135 = sadd.s32 %s134, 1
      %s136 = scalar_select %p133, %s134, %s135
      %p139 = pneg %p133
      %p140 = scmp.eq.s32.totalorder %s14, 1
      %p141 = por %p139, %p140
      %p142 = scmp.ne.s32.totalorder %s134, %s137
      %p143 = scmp.eq.s32.totalorder %s14, 0
      %p144 = por %p142, %p143
      %p145 = scmp.ne.s32.totalorder %s134, %s137
      %p146 = scmp.eq.s32.totalorder %s19, 1
      %p147 = por %p145, %p146
      %p148 = scmp.ne.s32.totalorder %s137, %s138
      %p149 = scmp.eq.s32.totalorder %s19, 0
      %p150 = por %p148, %p149
      %p151 = scmp.ne.s32.totalorder %s137, %s138
      %p152 = scmp.eq.s32.totalorder %s20, 1
      %p153 = por %p151, %p152
      %p155 = scmp.ne.s32.totalorder %s138, %s154
      %p156 = scmp.eq.s32.totalorder %s20, 0
      %p157 = por %p155, %p156
      %p158 = scmp.le.s32.totalorder 1, %s14
      %p159 = scmp.lt.s32.totalorder %s14, 3
      %p160 = pnand %p158, %p159
      %p161 = pneg %p160
      // Predicated region
      $region9: #{tpu_custom_call.1} parent=5 // pred_check
        _
      $region10: #{tpu_custom_call.1} parent=5 // pred_check_branch
        %163 = sbr.rel (%p160) target = $region12
      $region11: #{tpu_custom_call.1} parent=5 // pred_region
        %s164 = ssub.s32 %s14, 1
        // Predicated region
        $region13: #{tpu_custom_call.1} parent=11 // pred_check
          %p165 = pneg %p61
        $region14: #{tpu_custom_call.1} parent=11 // pred_check_branch
          %167 = sbr.rel (%p165) target = $region16
        $region15: #{tpu_custom_call.1} parent=11 // pred_region
          _
        $region16: #{tpu_custom_call.1} parent=11 // pred_fallthru
          _
        // Predicated region
        $region17: #{tpu_custom_call.1} parent=11 // pred_check
          %p168 = pneg %p82
        $region18: #{tpu_custom_call.1} parent=11 // pred_check_branch
          %170 = sbr.rel (%p168) target = $region20
        $region19: #{tpu_custom_call.1} parent=11 // pred_region
          _
        $region20: #{tpu_custom_call.1} parent=11 // pred_fallthru
          _
        // Predicated region
        $region21: #{tpu_custom_call.1} parent=11 // pred_check
          %p171 = pneg %p103
        $region22: #{tpu_custom_call.1} parent=11 // pred_check_branch
          %173 = sbr.rel (%p171) target = $region24
        $region23: #{tpu_custom_call.1} parent=11 // pred_region
          _
        $region24: #{tpu_custom_call.1} parent=11 // pred_fallthru
          _
        // Predicated region
        $region25: #{tpu_custom_call.1} parent=11 // pred_check
          %p174 = pneg %p124
        $region26: #{tpu_custom_call.1} parent=11 // pred_check_branch
          %176 = sbr.rel (%p174) target = $region28
        $region27: #{tpu_custom_call.1} parent=11 // pred_region
          _
        $region28: #{tpu_custom_call.1} parent=11 // pred_fallthru
          _
      $region12: #{tpu_custom_call.1} parent=5 // pred_fallthru
        _
      %p177 = scmp.lt.s32.totalorder %s14, 2
      // Predicated region
      $region29: #{tpu_custom_call.1} parent=5 // pred_check
        %p178 = pneg %p177
      $region30: #{tpu_custom_call.1} parent=5 // pred_check_branch
        %180 = sbr.rel (%p178) target = $region32
      $region31: #{tpu_custom_call.1} parent=5 // pred_region
        // Predicated region
        $region33: #{tpu_custom_call.1} parent=31 // pred_check
          %p181 = pneg %p34
        $region34: #{tpu_custom_call.1} parent=31 // pred_check_branch
          %183 = sbr.rel (%p181) target = $region36
        $region35: #{tpu_custom_call.1} parent=31 // pred_region
          %s184 = smul.u32 32, %s14
          %p185 = scmp.lt.s32.totalorder %s184, 63
          %s186 = scalar_select %p185, %s184, 63
          %s187 = smul.addr %s186, 8
          %s188 = scalar_lea.vmem %s0, %s187
          %s189 = smul.u32 32, %s14
        $region36: #{tpu_custom_call.1} parent=31 // pred_fallthru
          _
      $region32: #{tpu_custom_call.1} parent=5 // pred_fallthru
        _
      %p190 = scmp.le.s32.totalorder 1, %s14
      %p191 = scmp.lt.s32.totalorder %s14, 3
      %p192 = pnand %p190, %p191
      %p193 = pneg %p192
      // Predicated region
      $region37: #{tpu_custom_call.1} parent=5 // pred_check
        _
      $region38: #{tpu_custom_call.1} parent=5 // pred_check_branch
        %195 = sbr.rel (%p192) target = $region40
      $region39: #{tpu_custom_call.1} parent=5 // pred_region
        %s196 = ssub.s32 %s14, 1
        %s197 = smul.u32 32, %s19
        %p198 = scmp.lt.s32.totalorder %s197, 63
        %s199 = scalar_select %p198, %s197, 63
        %s200 = smul.addr %s199, 8
        %s201 = scalar_lea.vmem %s0, %s200
        %p202 = pneg %p40
        %p203 = pneg %p37
        %p204 = pneg %p61
        %p205 = pneg %p58
        %p206 = pneg %p82
        %p207 = pneg %p79
        %p208 = pneg %p103
        %p209 = pneg %p100
        %p210 = pneg %p124
        %p211 = pneg %p121
        %p212 = pneg %p150
        %p213 = pneg %p147
        %s214 = sand.u32 %s137, 1
        %s215 = scalar_lea.sflag [#allocation4], %s214
        %s216 = sand.u32 %s137, 1
        %s217 = smul.addr %s216, 256
        %s218 = scalar_lea.vmem [#allocation3], %s217
        %s219 = smul.u32 32, %s19
        %p220 = scmp.lt.s32.totalorder %s219, 63
        %s221 = scalar_select %p220, %s219, 63
        %s222 = smul.addr %s221, 8
        %s223 = scalar_lea.vmem %s0, %s222
        %s224 = smul.u32 32, %s19
        %v225 = vld [vmem:[%s223] sm:$0xff]
        %v226 = vld [vmem:[%s223 + $0x8] sm:$0xff]
        %v227 = vld [vmem:[%s223 + $0x10] sm:$0xff]
        %v228 = vld [vmem:[%s223 + $0x18] sm:$0xff]
        %v229 = vld [vmem:[%s223 + $0x20] sm:$0xff]
        %v230 = vld [vmem:[%s223 + $0x28] sm:$0xff]
        %v231 = vld [vmem:[%s223 + $0x30] sm:$0xff]
        %v232 = vld [vmem:[%s223 + $0x38] sm:$0xff]
        %v233 = vld [vmem:[%s223 + $0x40] sm:$0xff]
        %v234 = vld [vmem:[%s223 + $0x48] sm:$0xff]
        %v235 = vld [vmem:[%s223 + $0x50] sm:$0xff]
        %v236 = vld [vmem:[%s223 + $0x58] sm:$0xff]
        %v237 = vld [vmem:[%s223 + $0x60] sm:$0xff]
        %v238 = vld [vmem:[%s223 + $0x68] sm:$0xff]
        %v239 = vld [vmem:[%s223 + $0x70] sm:$0xff]
        %v240 = vld [vmem:[%s223 + $0x78] sm:$0xff]
        %v241 = vld [vmem:[%s223 + $0x80] sm:$0xff]
        %v242 = vld [vmem:[%s223 + $0x88] sm:$0xff]
        %v243 = vld [vmem:[%s223 + $0x90] sm:$0xff]
        %v244 = vld [vmem:[%s223 + $0x98] sm:$0xff]
        %v245 = vld [vmem:[%s223 + $0xa0] sm:$0xff]
        %v246 = vld [vmem:[%s223 + $0xa8] sm:$0xff]
        %v247 = vld [vmem:[%s223 + $0xb0] sm:$0xff]
        %v248 = vld [vmem:[%s223 + $0xb8] sm:$0xff]
        %v249 = vld [vmem:[%s223 + $0xc0] sm:$0xff]
        %v250 = vld [vmem:[%s223 + $0xc8] sm:$0xff]
        %v251 = vld [vmem:[%s223 + $0xd0] sm:$0xff]
        %v252 = vld [vmem:[%s223 + $0xd8] sm:$0xff]
        %v253 = vld [vmem:[%s223 + $0xe0] sm:$0xff]
        %v254 = vld [vmem:[%s223 + $0xe8] sm:$0xff]
        %v255 = vld [vmem:[%s223 + $0xf0] sm:$0xff]
        %v256 = vld [vmem:[%s223 + $0xf8] sm:$0xff]
        %v257 = vld [vmem:[%s1] sm:$0xff]
        %vm258 = vcmask 64512
        %v260 = vsel %vm258, %v225, 0
        %v263 = vsel %vm258, %v226, 0
        %v266 = vsel %vm258, %v227, 0
        %v269 = vsel %vm258, %v228, 0
        %v272 = vsel %vm258, %v229, 0
        %v275 = vsel %vm258, %v230, 0
        %v278 = vsel %vm258, %v231, 0
        %v281 = vsel %vm258, %v232, 0
        %v284 = vsel %vm258, %v233, 0
        %v287 = vsel %vm258, %v234, 0
        %v290 = vsel %vm258, %v235, 0
        %v293 = vsel %vm258, %v236, 0
        %v296 = vsel %vm258, %v237, 0
        %v299 = vsel %vm258, %v238, 0
        %v302 = vsel %vm258, %v239, 0
        %v305 = vsel %vm258, %v240, 0
        %v308 = vsel %vm258, %v241, 0
        %v311 = vsel %vm258, %v242, 0
        %v314 = vsel %vm258, %v243, 0
        %v317 = vsel %vm258, %v244, 0
        %v320 = vsel %vm258, %v245, 0
        %v323 = vsel %vm258, %v246, 0
        %v326 = vsel %vm258, %v247, 0
        %v329 = vsel %vm258, %v248, 0
        %v332 = vsel %vm258, %v249, 0
        %v335 = vsel %vm258, %v250, 0
        %v338 = vsel %vm258, %v251, 0
        %v341 = vsel %vm258, %v252, 0
        %v344 = vsel %vm258, %v253, 0
        %v347 = vsel %vm258, %v254, 0
        %v350 = vsel %vm258, %v255, 0
        %v353 = vsel %vm258, %v256, 0
        %355 = vmatprep.subr.mxu0 0.0
        %356 = vmatpush1.msra.mxu0 %v257
        %357 = vmatprep.subr.mxu0 0.0
        %358 = vmatpush1.msra.mxu0 0.0
        %359 = vmatprep.subr.mxu0 0.0
        %360 = vmatpush1.msra.mxu0 0.0
        %361 = vmatprep.subr.mxu0 0.0
        %362 = vmatpush1.msra.mxu0 0.0
        %363 = vmatprep.subr.mxu0 0.0
        %364 = vmatpush1.msra.mxu0 0.0
        %365 = vmatprep.subr.mxu0 0.0
        %366 = vmatpush1.msra.mxu0 0.0
        %367 = vmatprep.subr.mxu0 0.0
        %368 = vmatpush1.msra.mxu0 0.0
        %369 = vmatprep.subr.mxu0 0.0
        %370 = vmatpush1.msra.mxu0 0.0
        %371 = vmatprep.subr.mxu0 0.0
        %372 = vmatpush1.msra.mxu0 0.0
        %373 = vmatprep.subr.mxu0 0.0
        %374 = vmatpush1.msra.mxu0 0.0
        %375 = vmatprep.subr.mxu0 0.0
        %376 = vmatpush1.msra.mxu0 0.0
        %377 = vmatprep.subr.mxu0 0.0
        %378 = vmatpush1.msra.mxu0 0.0
        %379 = vmatprep.subr.mxu0 0.0
        %380 = vmatpush1.msra.mxu0 0.0
        %381 = vmatprep.subr.mxu0 0.0
        %382 = vmatpush1.msra.mxu0 0.0
        %383 = vmatprep.subr.mxu0 0.0
        %384 = vmatpush1.msra.mxu0 0.0
        %385 = vmatprep.subr.mxu0 0.0
        %386 = vmatpush1.msra.mxu0 0.0
        %387 = vmatprep.subr.mxu0 0.0
        %388 = vmatpush1.msra.mxu0 0.0
        %389 = vmatprep.subr.mxu0 0.0
        %390 = vmatpush1.msra.mxu0 0.0
        %391 = vmatprep.subr.mxu0 0.0
        %392 = vmatpush1.msra.mxu0 0.0
        %393 = vmatprep.subr.mxu0 0.0
        %394 = vmatpush1.msra.mxu0 0.0
        %395 = vmatprep.subr.mxu0 0.0
        %396 = vmatpush1.msra.mxu0 0.0
        %397 = vmatprep.subr.mxu0 0.0
        %398 = vmatpush1.msra.mxu0 0.0
        %399 = vmatprep.subr.mxu0 0.0
        %400 = vmatpush1.msra.mxu0 0.0
        %401 = vmatprep.subr.mxu0 0.0
        %402 = vmatpush1.msra.mxu0 0.0
        %403 = vmatprep.subr.mxu0 0.0
        %404 = vmatpush1.msra.mxu0 0.0
        %405 = vmatprep.subr.mxu0 0.0
        %406 = vmatpush1.msra.mxu0 0.0
        %407 = vmatprep.subr.mxu0 0.0
        %408 = vmatpush1.msra.mxu0 0.0
        %409 = vmatprep.subr.mxu0 0.0
        %410 = vmatpush1.msra.mxu0 0.0
        %411 = vmatprep.subr.mxu0 0.0
        %412 = vmatpush1.msra.mxu0 0.0
        %413 = vmatprep.subr.mxu0 0.0
        %414 = vmatpush1.msra.mxu0 0.0
        %415 = vmatprep.subr.mxu0 0.0
        %416 = vmatpush1.msra.mxu0 0.0
        %417 = vmatprep.subr.mxu0 0.0
        %418 = vmatpush1.msra.mxu0 0.0
        %419 = vmatprep.mubr.f32.mxu0 0.0
        %420 = vmatmul.mubr.f32.gmra.mrb[0].mxu0 %v260
        %v421 = vpop.f32.mrb[0].mxu0
        %v422 = vadd.f32 0.0, %v421
        %v423 = vpop.f32.mrb[0].mxu0
        %424 = vmatprep.mubr.f32.mxu0 0.0
        %425 = vmatmul.mubr.f32.gmra.mrb[0].mxu0 %v263
        %v426 = vpop.f32.mrb[0].mxu0
        %v427 = vadd.f32 0.0, %v426
        %v428 = vpop.f32.mrb[0].mxu0
        %429 = vmatprep.mubr.f32.mxu0 0.0
        %430 = vmatmul.mubr.f32.gmra.mrb[0].mxu0 %v266
        %v431 = vpop.f32.mrb[0].mxu0
        %v432 = vadd.f32 0.0, %v431
        %v433 = vpop.f32.mrb[0].mxu0
        %434 = vmatprep.mubr.f32.mxu0 0.0
        %435 = vmatmul.mubr.f32.gmra.mrb[0].mxu0 %v269
        %v436 = vpop.f32.mrb[0].mxu0
        %v437 = vadd.f32 0.0, %v436
        %v438 = vpop.f32.mrb[0].mxu0
        %439 = vmatprep.mubr.f32.mxu0 0.0
        %440 = vmatmul.mubr.f32.gmra.mrb[0].mxu0 %v272
        %v441 = vpop.f32.mrb[0].mxu0
        %v442 = vadd.f32 0.0, %v441
        %v443 = vpop.f32.mrb[0].mxu0
        %444 = vmatprep.mubr.f32.mxu0 0.0
        %445 = vmatmul.mubr.f32.gmra.mrb[0].mxu0 %v275
        %v446 = vpop.f32.mrb[0].mxu0
        %v447 = vadd.f32 0.0, %v446
        %v448 = vpop.f32.mrb[0].mxu0
        %449 = vmatprep.mubr.f32.mxu0 0.0
        %450 = vmatmul.mubr.f32.gmra.mrb[0].mxu0 %v278
        %v451 = vpop.f32.mrb[0].mxu0
        %v452 = vadd.f32 0.0, %v451
        %v453 = vpop.f32.mrb[0].mxu0
        %454 = vmatprep.mubr.f32.mxu0 0.0
        %455 = vmatmul.mubr.f32.gmra.mrb[0].mxu0 %v281
        %v456 = vpop.f32.mrb[0].mxu0
        %v457 = vadd.f32 0.0, %v456
        %v458 = vpop.f32.mrb[0].mxu0
        %459 = vmatprep.mubr.f32.mxu0 0.0
        %460 = vmatmul.mubr.f32.gmra.mrb[0].mxu0 %v284
        %v461 = vpop.f32.mrb[0].mxu0
        %v462 = vadd.f32 0.0, %v461
        %v463 = vpop.f32.mrb[0].mxu0
        %464 = vmatprep.mubr.f32.mxu0 0.0
        %465 = vmatmul.mubr.f32.gmra.mrb[0].mxu0 %v287
        %v466 = vpop.f32.mrb[0].mxu0
        %v467 = vadd.f32 0.0, %v466
        %v468 = vpop.f32.mrb[0].mxu0
        %469 = vmatprep.mubr.f32.mxu0 0.0
        %470 = vmatmul.mubr.f32.gmra.mrb[0].mxu0 %v290
        %v471 = vpop.f32.mrb[0].mxu0
        %v472 = vadd.f32 0.0, %v471
        %v473 = vpop.f32.mrb[0].mxu0
        %474 = vmatprep.mubr.f32.mxu0 0.0
        %475 = vmatmul.mubr.f32.gmra.mrb[0].mxu0 %v293
        %v476 = vpop.f32.mrb[0].mxu0
        %v477 = vadd.f32 0.0, %v476
        %v478 = vpop.f32.mrb[0].mxu0
        %479 = vmatprep.mubr.f32.mxu0 0.0
        %480 = vmatmul.mubr.f32.gmra.mrb[0].mxu0 %v296
        %v481 = vpop.f32.mrb[0].mxu0
        %v482 = vadd.f32 0.0, %v481
        %v483 = vpop.f32.mrb[0].mxu0
        %484 = vmatprep.mubr.f32.mxu0 0.0
        %485 = vmatmul.mubr.f32.gmra.mrb[0].mxu0 %v299
        %v486 = vpop.f32.mrb[0].mxu0
        %v487 = vadd.f32 0.0, %v486
        %v488 = vpop.f32.mrb[0].mxu0
        %489 = vmatprep.mubr.f32.mxu0 0.0
        %490 = vmatmul.mubr.f32.gmra.mrb[0].mxu0 %v302
        %v491 = vpop.f32.mrb[0].mxu0
        %v492 = vadd.f32 0.0, %v491
        %v493 = vpop.f32.mrb[0].mxu0
        %494 = vmatprep.mubr.f32.mxu0 0.0
        %495 = vmatmul.mubr.f32.gmra.mrb[0].mxu0 %v305
        %v496 = vpop.f32.mrb[0].mxu0
        %v497 = vadd.f32 0.0, %v496
        %v498 = vpop.f32.mrb[0].mxu0
        %499 = vmatprep.mubr.f32.mxu0 0.0
        %500 = vmatmul.mubr.f32.gmra.mrb[0].mxu0 %v308
        %v501 = vpop.f32.mrb[0].mxu0
        %v502 = vadd.f32 0.0, %v501
        %v503 = vpop.f32.mrb[0].mxu0
        %504 = vmatprep.mubr.f32.mxu0 0.0
        %505 = vmatmul.mubr.f32.gmra.mrb[0].mxu0 %v311
        %v506 = vpop.f32.mrb[0].mxu0
        %v507 = vadd.f32 0.0, %v506
        %v508 = vpop.f32.mrb[0].mxu0
        %509 = vmatprep.mubr.f32.mxu0 0.0
        %510 = vmatmul.mubr.f32.gmra.mrb[0].mxu0 %v314
        %v511 = vpop.f32.mrb[0].mxu0
        %v512 = vadd.f32 0.0, %v511
        %v513 = vpop.f32.mrb[0].mxu0
        %514 = vmatprep.mubr.f32.mxu0 0.0
        %515 = vmatmul.mubr.f32.gmra.mrb[0].mxu0 %v317
        %v516 = vpop.f32.mrb[0].mxu0
        %v517 = vadd.f32 0.0, %v516
        %v518 = vpop.f32.mrb[0].mxu0
        %519 = vmatprep.mubr.f32.mxu0 0.0
        %520 = vmatmul.mubr.f32.gmra.mrb[0].mxu0 %v320
        %v521 = vpop.f32.mrb[0].mxu0
        %v522 = vadd.f32 0.0, %v521
        %v523 = vpop.f32.mrb[0].mxu0
        %524 = vmatprep.mubr.f32.mxu0 0.0
        %525 = vmatmul.mubr.f32.gmra.mrb[0].mxu0 %v323
        %v526 = vpop.f32.mrb[0].mxu0
        %v527 = vadd.f32 0.0, %v526
        %v528 = vpop.f32.mrb[0].mxu0
        %529 = vmatprep.mubr.f32.mxu0 0.0
        %530 = vmatmul.mubr.f32.gmra.mrb[0].mxu0 %v326
        %v531 = vpop.f32.mrb[0].mxu0
        %v532 = vadd.f32 0.0, %v531
        %v533 = vpop.f32.mrb[0].mxu0
        %534 = vmatprep.mubr.f32.mxu0 0.0
        %535 = vmatmul.mubr.f32.gmra.mrb[0].mxu0 %v329
        %v536 = vpop.f32.mrb[0].mxu0
        %v537 = vadd.f32 0.0, %v536
        %v538 = vpop.f32.mrb[0].mxu0
        %539 = vmatprep.mubr.f32.mxu0 0.0
        %540 = vmatmul.mubr.f32.gmra.mrb[0].mxu0 %v332
        %v541 = vpop.f32.mrb[0].mxu0
        %v542 = vadd.f32 0.0, %v541
        %v543 = vpop.f32.mrb[0].mxu0
        %544 = vmatprep.mubr.f32.mxu0 0.0
        %545 = vmatmul.mubr.f32.gmra.mrb[0].mxu0 %v335
        %v546 = vpop.f32.mrb[0].mxu0
        %v547 = vadd.f32 0.0, %v546
        %v548 = vpop.f32.mrb[0].mxu0
        %549 = vmatprep.mubr.f32.mxu0 0.0
        %550 = vmatmul.mubr.f32.gmra.mrb[0].mxu0 %v338
        %v551 = vpop.f32.mrb[0].mxu0
        %v552 = vadd.f32 0.0, %v551
        %v553 = vpop.f32.mrb[0].mxu0
        %554 = vmatprep.mubr.f32.mxu0 0.0
        %555 = vmatmul.mubr.f32.gmra.mrb[0].mxu0 %v341
        %v556 = vpop.f32.mrb[0].mxu0
        %v557 = vadd.f32 0.0, %v556
        %v558 = vpop.f32.mrb[0].mxu0
        %559 = vmatprep.mubr.f32.mxu0 0.0
        %560 = vmatmul.mubr.f32.gmra.mrb[0].mxu0 %v344
        %v561 = vpop.f32.mrb[0].mxu0
        %v562 = vadd.f32 0.0, %v561
        %v563 = vpop.f32.mrb[0].mxu0
        %564 = vmatprep.mubr.f32.mxu0 0.0
        %565 = vmatmul.mubr.f32.gmra.mrb[0].mxu0 %v347
        %v566 = vpop.f32.mrb[0].mxu0
        %v567 = vadd.f32 0.0, %v566
        %v568 = vpop.f32.mrb[0].mxu0
        %569 = vmatprep.mubr.f32.mxu0 0.0
        %570 = vmatmul.mubr.f32.gmra.mrb[0].mxu0 %v350
        %v571 = vpop.f32.mrb[0].mxu0
        %v572 = vadd.f32 0.0, %v571
        %v573 = vpop.f32.mrb[0].mxu0
        %574 = vmatprep.mubr.f32.mxu0 0.0
        %575 = vmatmul.mubr.f32.gmra.mrb[0].mxu0 %v353
        %v576 = vpop.f32.mrb[0].mxu0
        %v577 = vadd.f32 0.0, %v576
        %v578 = vpop.f32.mrb[0].mxu0
        %579 = vdwg.mxu0
        %580 = vxpose.xlu0.b32.start [1/16] %v422, 128
        %581 = vxpose.xlu0.b32.cont [2/16] %v427, 128
        %582 = vxpose.xlu0.b32.cont [3/16] 0.0, 128
        %583 = vxpose.xlu0.b32.cont [4/16] 0.0, 128
        %584 = vxpose.xlu0.b32.cont [5/16] 0.0, 128
        %585 = vxpose.xlu0.b32.cont [6/16] 0.0, 128
        %586 = vxpose.xlu0.b32.cont [7/16] 0.0, 128
        %587 = vxpose.xlu0.b32.cont [8/16] 0.0, 128
        %588 = vxpose.xlu0.b32.cont [9/16] 0.0, 128
        %589 = vxpose.xlu0.b32.cont [10/16] 0.0, 128
        %590 = vxpose.xlu0.b32.cont [11/16] 0.0, 128
        %591 = vxpose.xlu0.b32.cont [12/16] 0.0, 128
        %592 = vxpose.xlu0.b32.cont [13/16] 0.0, 128
        %593 = vxpose.xlu0.b32.cont [14/16] 0.0, 128
        %594 = vxpose.xlu0.b32.cont [15/16] 0.0, 128
        %595 = vxpose.xlu0.b32.end [16/16] 0.0, 128
        %v596 = vpop.trf.xlu0
        %v597 = vpop.trf.xlu0
        %v598 = vpop.trf.xlu0
        %v599 = vpop.trf.xlu0
        %v600 = vpop.trf.xlu0
        %v601 = vpop.trf.xlu0
        %v602 = vpop.trf.xlu0
        %v603 = vpop.trf.xlu0
        %v604 = vpop.trf.xlu0
        %v605 = vpop.trf.xlu0
        %v606 = vpop.trf.xlu0
        %v607 = vpop.trf.xlu0
        %v608 = vpop.trf.xlu0
        %v609 = vpop.trf.xlu0
        %v610 = vpop.trf.xlu0
        %v611 = vpop.trf.xlu0
        %612 = vxpose.xlu0.b32.start [1/16] %v432, 128
        %613 = vxpose.xlu0.b32.cont [2/16] %v437, 128
        %614 = vxpose.xlu0.b32.cont [3/16] 0.0, 128
        %615 = vxpose.xlu0.b32.cont [4/16] 0.0, 128
        %616 = vxpose.xlu0.b32.cont [5/16] 0.0, 128
        %617 = vxpose.xlu0.b32.cont [6/16] 0.0, 128
        %618 = vxpose.xlu0.b32.cont [7/16] 0.0, 128
        %619 = vxpose.xlu0.b32.cont [8/16] 0.0, 128
        %620 = vxpose.xlu0.b32.cont [9/16] 0.0, 128
        %621 = vxpose.xlu0.b32.cont [10/16] 0.0, 128
        %622 = vxpose.xlu0.b32.cont [11/16] 0.0, 128
        %623 = vxpose.xlu0.b32.cont [12/16] 0.0, 128
        %624 = vxpose.xlu0.b32.cont [13/16] 0.0, 128
        %625 = vxpose.xlu0.b32.cont [14/16] 0.0, 128
        %626 = vxpose.xlu0.b32.cont [15/16] 0.0, 128
        %627 = vxpose.xlu0.b32.end [16/16] 0.0, 128
        %v628 = vpop.trf.xlu0
        %v629 = vpop.trf.xlu0
        %v630 = vpop.trf.xlu0
        %v631 = vpop.trf.xlu0
        %v632 = vpop.trf.xlu0
        %v633 = vpop.trf.xlu0
        %v634 = vpop.trf.xlu0
        %v635 = vpop.trf.xlu0
        %v636 = vpop.trf.xlu0
        %v637 = vpop.trf.xlu0
        %v638 = vpop.trf.xlu0
        %v639 = vpop.trf.xlu0
        %v640 = vpop.trf.xlu0
        %v641 = vpop.trf.xlu0
        %v642 = vpop.trf.xlu0
        %v643 = vpop.trf.xlu0
        %644 = vxpose.xlu0.b32.start [1/16] %v442, 128
        %645 = vxpose.xlu0.b32.cont [2/16] %v447, 128
        %646 = vxpose.xlu0.b32.cont [3/16] 0.0, 128
        %647 = vxpose.xlu0.b32.cont [4/16] 0.0, 128
        %648 = vxpose.xlu0.b32.cont [5/16] 0.0, 128
        %649 = vxpose.xlu0.b32.cont [6/16] 0.0, 128
        %650 = vxpose.xlu0.b32.cont [7/16] 0.0, 128
        %651 = vxpose.xlu0.b32.cont [8/16] 0.0, 128
        %652 = vxpose.xlu0.b32.cont [9/16] 0.0, 128
        %653 = vxpose.xlu0.b32.cont [10/16] 0.0, 128
        %654 = vxpose.xlu0.b32.cont [11/16] 0.0, 128
        %655 = vxpose.xlu0.b32.cont [12/16] 0.0, 128
        %656 = vxpose.xlu0.b32.cont [13/16] 0.0, 128
        %657 = vxpose.xlu0.b32.cont [14/16] 0.0, 128
        %658 = vxpose.xlu0.b32.cont [15/16] 0.0, 128
        %659 = vxpose.xlu0.b32.end [16/16] 0.0, 128
        %v660 = vpop.trf.xlu0
        %v661 = vpop.trf.xlu0
        %v662 = vpop.trf.xlu0
        %v663 = vpop.trf.xlu0
        %v664 = vpop.trf.xlu0
        %v665 = vpop.trf.xlu0
        %v666 = vpop.trf.xlu0
        %v667 = vpop.trf.xlu0
        %v668 = vpop.trf.xlu0
        %v669 = vpop.trf.xlu0
        %v670 = vpop.trf.xlu0
        %v671 = vpop.trf.xlu0
        %v672 = vpop.trf.xlu0
        %v673 = vpop.trf.xlu0
        %v674 = vpop.trf.xlu0
        %v675 = vpop.trf.xlu0
        %676 = vxpose.xlu0.b32.start [1/16] %v452, 128
        %677 = vxpose.xlu0.b32.cont [2/16] %v457, 128
        %678 = vxpose.xlu0.b32.cont [3/16] 0.0, 128
        %679 = vxpose.xlu0.b32.cont [4/16] 0.0, 128
        %680 = vxpose.xlu0.b32.cont [5/16] 0.0, 128
        %681 = vxpose.xlu0.b32.cont [6/16] 0.0, 128
        %682 = vxpose.xlu0.b32.cont [7/16] 0.0, 128
        %683 = vxpose.xlu0.b32.cont [8/16] 0.0, 128
        %684 = vxpose.xlu0.b32.cont [9/16] 0.0, 128
        %685 = vxpose.xlu0.b32.cont [10/16] 0.0, 128
        %686 = vxpose.xlu0.b32.cont [11/16] 0.0, 128
        %687 = vxpose.xlu0.b32.cont [12/16] 0.0, 128
        %688 = vxpose.xlu0.b32.cont [13/16] 0.0, 128
        %689 = vxpose.xlu0.b32.cont [14/16] 0.0, 128
        %690 = vxpose.xlu0.b32.cont [15/16] 0.0, 128
        %691 = vxpose.xlu0.b32.end [16/16] 0.0, 128
        %v692 = vpop.trf.xlu0
        %v693 = vpop.trf.xlu0
        %v694 = vpop.trf.xlu0
        %v695 = vpop.trf.xlu0
        %v696 = vpop.trf.xlu0
        %v697 = vpop.trf.xlu0
        %v698 = vpop.trf.xlu0
        %v699 = vpop.trf.xlu0
        %v700 = vpop.trf.xlu0
        %v701 = vpop.trf.xlu0
        %v702 = vpop.trf.xlu0
        %v703 = vpop.trf.xlu0
        %v704 = vpop.trf.xlu0
        %v705 = vpop.trf.xlu0
        %v706 = vpop.trf.xlu0
        %v707 = vpop.trf.xlu0
        %708 = vxpose.xlu0.b32.start [1/16] %v462, 128
        %709 = vxpose.xlu0.b32.cont [2/16] %v467, 128
        %710 = vxpose.xlu0.b32.cont [3/16] 0.0, 128
        %711 = vxpose.xlu0.b32.cont [4/16] 0.0, 128
        %712 = vxpose.xlu0.b32.cont [5/16] 0.0, 128
        %713 = vxpose.xlu0.b32.cont [6/16] 0.0, 128
        %714 = vxpose.xlu0.b32.cont [7/16] 0.0, 128
        %715 = vxpose.xlu0.b32.cont [8/16] 0.0, 128
        %716 = vxpose.xlu0.b32.cont [9/16] 0.0, 128
        %717 = vxpose.xlu0.b32.cont [10/16] 0.0, 128
        %718 = vxpose.xlu0.b32.cont [11/16] 0.0, 128
        %719 = vxpose.xlu0.b32.cont [12/16] 0.0, 128
        %720 = vxpose.xlu0.b32.cont [13/16] 0.0, 128
        %721 = vxpose.xlu0.b32.cont [14/16] 0.0, 128
        %722 = vxpose.xlu0.b32.cont [15/16] 0.0, 128
        %723 = vxpose.xlu0.b32.end [16/16] 0.0, 128
        %v724 = vpop.trf.xlu0
        %v725 = vpop.trf.xlu0
        %v726 = vpop.trf.xlu0
        %v727 = vpop.trf.xlu0
        %v728 = vpop.trf.xlu0
        %v729 = vpop.trf.xlu0
        %v730 = vpop.trf.xlu0
        %v731 = vpop.trf.xlu0
        %v732 = vpop.trf.xlu0
        %v733 = vpop.trf.xlu0
        %v734 = vpop.trf.xlu0
        %v735 = vpop.trf.xlu0
        %v736 = vpop.trf.xlu0
        %v737 = vpop.trf.xlu0
        %v738 = vpop.trf.xlu0
        %v739 = vpop.trf.xlu0
        %740 = vxpose.xlu0.b32.start [1/16] %v472, 128
        %741 = vxpose.xlu0.b32.cont [2/16] %v477, 128
        %742 = vxpose.xlu0.b32.cont [3/16] 0.0, 128
        %743 = vxpose.xlu0.b32.cont [4/16] 0.0, 128
        %744 = vxpose.xlu0.b32.cont [5/16] 0.0, 128
        %745 = vxpose.xlu0.b32.cont [6/16] 0.0, 128
        %746 = vxpose.xlu0.b32.cont [7/16] 0.0, 128
        %747 = vxpose.xlu0.b32.cont [8/16] 0.0, 128
        %748 = vxpose.xlu0.b32.cont [9/16] 0.0, 128
        %749 = vxpose.xlu0.b32.cont [10/16] 0.0, 128
        %750 = vxpose.xlu0.b32.cont [11/16] 0.0, 128
        %751 = vxpose.xlu0.b32.cont [12/16] 0.0, 128
        %752 = vxpose.xlu0.b32.cont [13/16] 0.0, 128
        %753 = vxpose.xlu0.b32.cont [14/16] 0.0, 128
        %754 = vxpose.xlu0.b32.cont [15/16] 0.0, 128
        %755 = vxpose.xlu0.b32.end [16/16] 0.0, 128
        %v756 = vpop.trf.xlu0
        %v757 = vpop.trf.xlu0
        %v758 = vpop.trf.xlu0
        %v759 = vpop.trf.xlu0
        %v760 = vpop.trf.xlu0
        %v761 = vpop.trf.xlu0
        %v762 = vpop.trf.xlu0
        %v763 = vpop.trf.xlu0
        %v764 = vpop.trf.xlu0
        %v765 = vpop.trf.xlu0
        %v766 = vpop.trf.xlu0
        %v767 = vpop.trf.xlu0
        %v768 = vpop.trf.xlu0
        %v769 = vpop.trf.xlu0
        %v770 = vpop.trf.xlu0
        %v771 = vpop.trf.xlu0
        %772 = vxpose.xlu0.b32.start [1/16] %v482, 128
        %773 = vxpose.xlu0.b32.cont [2/16] %v487, 128
        %774 = vxpose.xlu0.b32.cont [3/16] 0.0, 128
        %775 = vxpose.xlu0.b32.cont [4/16] 0.0, 128
        %776 = vxpose.xlu0.b32.cont [5/16] 0.0, 128
        %777 = vxpose.xlu0.b32.cont [6/16] 0.0, 128
        %778 = vxpose.xlu0.b32.cont [7/16] 0.0, 128
        %779 = vxpose.xlu0.b32.cont [8/16] 0.0, 128
        %780 = vxpose.xlu0.b32.cont [9/16] 0.0, 128
        %781 = vxpose.xlu0.b32.cont [10/16] 0.0, 128
        %782 = vxpose.xlu0.b32.cont [11/16] 0.0, 128
        %783 = vxpose.xlu0.b32.cont [12/16] 0.0, 128
        %784 = vxpose.xlu0.b32.cont [13/16] 0.0, 128
        %785 = vxpose.xlu0.b32.cont [14/16] 0.0, 128
        %786 = vxpose.xlu0.b32.cont [15/16] 0.0, 128
        %787 = vxpose.xlu0.b32.end [16/16] 0.0, 128
        %v788 = vpop.trf.xlu0
        %v789 = vpop.trf.xlu0
        %v790 = vpop.trf.xlu0
        %v791 = vpop.trf.xlu0
        %v792 = vpop.trf.xlu0
        %v793 = vpop.trf.xlu0
        %v794 = vpop.trf.xlu0
        %v795 = vpop.trf.xlu0
        %v796 = vpop.trf.xlu0
        %v797 = vpop.trf.xlu0
        %v798 = vpop.trf.xlu0
        %v799 = vpop.trf.xlu0
        %v800 = vpop.trf.xlu0
        %v801 = vpop.trf.xlu0
        %v802 = vpop.trf.xlu0
        %v803 = vpop.trf.xlu0
        %804 = vxpose.xlu0.b32.start [1/16] %v492, 128
        %805 = vxpose.xlu0.b32.cont [2/16] %v497, 128
        %806 = vxpose.xlu0.b32.cont [3/16] 0.0, 128
        %807 = vxpose.xlu0.b32.cont [4/16] 0.0, 128
        %808 = vxpose.xlu0.b32.cont [5/16] 0.0, 128
        %809 = vxpose.xlu0.b32.cont [6/16] 0.0, 128
        %810 = vxpose.xlu0.b32.cont [7/16] 0.0, 128
        %811 = vxpose.xlu0.b32.cont [8/16] 0.0, 128
        %812 = vxpose.xlu0.b32.cont [9/16] 0.0, 128
        %813 = vxpose.xlu0.b32.cont [10/16] 0.0, 128
        %814 = vxpose.xlu0.b32.cont [11/16] 0.0, 128
        %815 = vxpose.xlu0.b32.cont [12/16] 0.0, 128
        %816 = vxpose.xlu0.b32.cont [13/16] 0.0, 128
        %817 = vxpose.xlu0.b32.cont [14/16] 0.0, 128
        %818 = vxpose.xlu0.b32.cont [15/16] 0.0, 128
        %819 = vxpose.xlu0.b32.end [16/16] 0.0, 128
        %v820 = vpop.trf.xlu0
        %v821 = vpop.trf.xlu0
        %v822 = vpop.trf.xlu0
        %v823 = vpop.trf.xlu0
        %v824 = vpop.trf.xlu0
        %v825 = vpop.trf.xlu0
        %v826 = vpop.trf.xlu0
        %v827 = vpop.trf.xlu0
        %v828 = vpop.trf.xlu0
        %v829 = vpop.trf.xlu0
        %v830 = vpop.trf.xlu0
        %v831 = vpop.trf.xlu0
        %v832 = vpop.trf.xlu0
        %v833 = vpop.trf.xlu0
        %v834 = vpop.trf.xlu0
        %v835 = vpop.trf.xlu0
        %836 = vxpose.xlu0.b32.start [1/16] %v502, 128
        %837 = vxpose.xlu0.b32.cont [2/16] %v507, 128
        %838 = vxpose.xlu0.b32.cont [3/16] 0.0, 128
        %839 = vxpose.xlu0.b32.cont [4/16] 0.0, 128
        %840 = vxpose.xlu0.b32.cont [5/16] 0.0, 128
        %841 = vxpose.xlu0.b32.cont [6/16] 0.0, 128
        %842 = vxpose.xlu0.b32.cont [7/16] 0.0, 128
        %843 = vxpose.xlu0.b32.cont [8/16] 0.0, 128
        %844 = vxpose.xlu0.b32.cont [9/16] 0.0, 128
        %845 = vxpose.xlu0.b32.cont [10/16] 0.0, 128
        %846 = vxpose.xlu0.b32.cont [11/16] 0.0, 128
        %847 = vxpose.xlu0.b32.cont [12/16] 0.0, 128
        %848 = vxpose.xlu0.b32.cont [13/16] 0.0, 128
        %849 = vxpose.xlu0.b32.cont [14/16] 0.0, 128
        %850 = vxpose.xlu0.b32.cont [15/16] 0.0, 128
        %851 = vxpose.xlu0.b32.end [16/16] 0.0, 128
        %v852 = vpop.trf.xlu0
        %v853 = vpop.trf.xlu0
        %v854 = vpop.trf.xlu0
        %v855 = vpop.trf.xlu0
        %v856 = vpop.trf.xlu0
        %v857 = vpop.trf.xlu0
        %v858 = vpop.trf.xlu0
        %v859 = vpop.trf.xlu0
        %v860 = vpop.trf.xlu0
        %v861 = vpop.trf.xlu0
        %v862 = vpop.trf.xlu0
        %v863 = vpop.trf.xlu0
        %v864 = vpop.trf.xlu0
        %v865 = vpop.trf.xlu0
        %v866 = vpop.trf.xlu0
        %v867 = vpop.trf.xlu0
        %868 = vxpose.xlu0.b32.start [1/16] %v512, 128
        %869 = vxpose.xlu0.b32.cont [2/16] %v517, 128
        %870 = vxpose.xlu0.b32.cont [3/16] 0.0, 128
        %871 = vxpose.xlu0.b32.cont [4/16] 0.0, 128
        %872 = vxpose.xlu0.b32.cont [5/16] 0.0, 128
        %873 = vxpose.xlu0.b32.cont [6/16] 0.0, 128
        %874 = vxpose.xlu0.b32.cont [7/16] 0.0, 128
        %875 = vxpose.xlu0.b32.cont [8/16] 0.0, 128
        %876 = vxpose.xlu0.b32.cont [9/16] 0.0, 128
        %877 = vxpose.xlu0.b32.cont [10/16] 0.0, 128
        %878 = vxpose.xlu0.b32.cont [11/16] 0.0, 128
        %879 = vxpose.xlu0.b32.cont [12/16] 0.0, 128
        %880 = vxpose.xlu0.b32.cont [13/16] 0.0, 128
        %881 = vxpose.xlu0.b32.cont [14/16] 0.0, 128
        %882 = vxpose.xlu0.b32.cont [15/16] 0.0, 128
        %883 = vxpose.xlu0.b32.end [16/16] 0.0, 128
        %v884 = vpop.trf.xlu0
        %v885 = vpop.trf.xlu0
        %v886 = vpop.trf.xlu0
        %v887 = vpop.trf.xlu0
        %v888 = vpop.trf.xlu0
        %v889 = vpop.trf.xlu0
        %v890 = vpop.trf.xlu0
        %v891 = vpop.trf.xlu0
        %v892 = vpop.trf.xlu0
        %v893 = vpop.trf.xlu0
        %v894 = vpop.trf.xlu0
        %v895 = vpop.trf.xlu0
        %v896 = vpop.trf.xlu0
        %v897 = vpop.trf.xlu0
        %v898 = vpop.trf.xlu0
        %v899 = vpop.trf.xlu0
        %900 = vxpose.xlu0.b32.start [1/16] %v522, 128
        %901 = vxpose.xlu0.b32.cont [2/16] %v527, 128
        %902 = vxpose.xlu0.b32.cont [3/16] 0.0, 128
        %903 = vxpose.xlu0.b32.cont [4/16] 0.0, 128
        %904 = vxpose.xlu0.b32.cont [5/16] 0.0, 128
        %905 = vxpose.xlu0.b32.cont [6/16] 0.0, 128
        %906 = vxpose.xlu0.b32.cont [7/16] 0.0, 128
        %907 = vxpose.xlu0.b32.cont [8/16] 0.0, 128
        %908 = vxpose.xlu0.b32.cont [9/16] 0.0, 128
        %909 = vxpose.xlu0.b32.cont [10/16] 0.0, 128
        %910 = vxpose.xlu0.b32.cont [11/16] 0.0, 128
        %911 = vxpose.xlu0.b32.cont [12/16] 0.0, 128
        %912 = vxpose.xlu0.b32.cont [13/16] 0.0, 128
        %913 = vxpose.xlu0.b32.cont [14/16] 0.0, 128
        %914 = vxpose.xlu0.b32.cont [15/16] 0.0, 128
        %915 = vxpose.xlu0.b32.end [16/16] 0.0, 128
        %v916 = vpop.trf.xlu0
        %v917 = vpop.trf.xlu0
        %v918 = vpop.trf.xlu0
        %v919 = vpop.trf.xlu0
        %v920 = vpop.trf.xlu0
        %v921 = vpop.trf.xlu0
        %v922 = vpop.trf.xlu0
        %v923 = vpop.trf.xlu0
        %v924 = vpop.trf.xlu0
        %v925 = vpop.trf.xlu0
        %v926 = vpop.trf.xlu0
        %v927 = vpop.trf.xlu0
        %v928 = vpop.trf.xlu0
        %v929 = vpop.trf.xlu0
        %v930 = vpop.trf.xlu0
        %v931 = vpop.trf.xlu0
        %932 = vxpose.xlu0.b32.start [1/16] %v532, 128
        %933 = vxpose.xlu0.b32.cont [2/16] %v537, 128
        %934 = vxpose.xlu0.b32.cont [3/16] 0.0, 128
        %935 = vxpose.xlu0.b32.cont [4/16] 0.0, 128
        %936 = vxpose.xlu0.b32.cont [5/16] 0.0, 128
        %937 = vxpose.xlu0.b32.cont [6/16] 0.0, 128
        %938 = vxpose.xlu0.b32.cont [7/16] 0.0, 128
        %939 = vxpose.xlu0.b32.cont [8/16] 0.0, 128
        %940 = vxpose.xlu0.b32.cont [9/16] 0.0, 128
        %941 = vxpose.xlu0.b32.cont [10/16] 0.0, 128
        %942 = vxpose.xlu0.b32.cont [11/16] 0.0, 128
        %943 = vxpose.xlu0.b32.cont [12/16] 0.0, 128
        %944 = vxpose.xlu0.b32.cont [13/16] 0.0, 128
        %945 = vxpose.xlu0.b32.cont [14/16] 0.0, 128
        %946 = vxpose.xlu0.b32.cont [15/16] 0.0, 128
        %947 = vxpose.xlu0.b32.end [16/16] 0.0, 128
        %v948 = vpop.trf.xlu0
        %v949 = vpop.trf.xlu0
        %v950 = vpop.trf.xlu0
        %v951 = vpop.trf.xlu0
        %v952 = vpop.trf.xlu0
        %v953 = vpop.trf.xlu0
        %v954 = vpop.trf.xlu0
        %v955 = vpop.trf.xlu0
        %v956 = vpop.trf.xlu0
        %v957 = vpop.trf.xlu0
        %v958 = vpop.trf.xlu0
        %v959 = vpop.trf.xlu0
        %v960 = vpop.trf.xlu0
        %v961 = vpop.trf.xlu0
        %v962 = vpop.trf.xlu0
        %v963 = vpop.trf.xlu0
        %964 = vxpose.xlu0.b32.start [1/16] %v542, 128
        %965 = vxpose.xlu0.b32.cont [2/16] %v547, 128
        %966 = vxpose.xlu0.b32.cont [3/16] 0.0, 128
        %967 = vxpose.xlu0.b32.cont [4/16] 0.0, 128
        %968 = vxpose.xlu0.b32.cont [5/16] 0.0, 128
        %969 = vxpose.xlu0.b32.cont [6/16] 0.0, 128
        %970 = vxpose.xlu0.b32.cont [7/16] 0.0, 128
        %971 = vxpose.xlu0.b32.cont [8/16] 0.0, 128
        %972 = vxpose.xlu0.b32.cont [9/16] 0.0, 128
        %973 = vxpose.xlu0.b32.cont [10/16] 0.0, 128
        %974 = vxpose.xlu0.b32.cont [11/16] 0.0, 128
        %975 = vxpose.xlu0.b32.cont [12/16] 0.0, 128
        %976 = vxpose.xlu0.b32.cont [13/16] 0.0, 128
        %977 = vxpose.xlu0.b32.cont [14/16] 0.0, 128
        %978 = vxpose.xlu0.b32.cont [15/16] 0.0, 128
        %979 = vxpose.xlu0.b32.end [16/16] 0.0, 128
        %v980 = vpop.trf.xlu0
        %v981 = vpop.trf.xlu0
        %v982 = vpop.trf.xlu0
        %v983 = vpop.trf.xlu0
        %v984 = vpop.trf.xlu0
        %v985 = vpop.trf.xlu0
        %v986 = vpop.trf.xlu0
        %v987 = vpop.trf.xlu0
        %v988 = vpop.trf.xlu0
        %v989 = vpop.trf.xlu0
        %v990 = vpop.trf.xlu0
        %v991 = vpop.trf.xlu0
        %v992 = vpop.trf.xlu0
        %v993 = vpop.trf.xlu0
        %v994 = vpop.trf.xlu0
        %v995 = vpop.trf.xlu0
        %996 = vxpose.xlu0.b32.start [1/16] %v552, 128
        %997 = vxpose.xlu0.b32.cont [2/16] %v557, 128
        %998 = vxpose.xlu0.b32.cont [3/16] 0.0, 128
        %999 = vxpose.xlu0.b32.cont [4/16] 0.0, 128
        %1000 = vxpose.xlu0.b32.cont [5/16] 0.0, 128
        %1001 = vxpose.xlu0.b32.cont [6/16] 0.0, 128
        %1002 = vxpose.xlu0.b32.cont [7/16] 0.0, 128
        %1003 = vxpose.xlu0.b32.cont [8/16] 0.0, 128
        %1004 = vxpose.xlu0.b32.cont [9/16] 0.0, 128
        %1005 = vxpose.xlu0.b32.cont [10/16] 0.0, 128
        %1006 = vxpose.xlu0.b32.cont [11/16] 0.0, 128
        %1007 = vxpose.xlu0.b32.cont [12/16] 0.0, 128
        %1008 = vxpose.xlu0.b32.cont [13/16] 0.0, 128
        %1009 = vxpose.xlu0.b32.cont [14/16] 0.0, 128
        %1010 = vxpose.xlu0.b32.cont [15/16] 0.0, 128
        %1011 = vxpose.xlu0.b32.end [16/16] 0.0, 128
        %v1012 = vpop.trf.xlu0
        %v1013 = vpop.trf.xlu0
        %v1014 = vpop.trf.xlu0
        %v1015 = vpop.trf.xlu0
        %v1016 = vpop.trf.xlu0
        %v1017 = vpop.trf.xlu0
        %v1018 = vpop.trf.xlu0
        %v1019 = vpop.trf.xlu0
        %v1020 = vpop.trf.xlu0
        %v1021 = vpop.trf.xlu0
        %v1022 = vpop.trf.xlu0
        %v1023 = vpop.trf.xlu0
        %v1024 = vpop.trf.xlu0
        %v1025 = vpop.trf.xlu0
        %v1026 = vpop.trf.xlu0
        %v1027 = vpop.trf.xlu0
        %1028 = vxpose.xlu0.b32.start [1/16] %v562, 128
        %1029 = vxpose.xlu0.b32.cont [2/16] %v567, 128
        %1030 = vxpose.xlu0.b32.cont [3/16] 0.0, 128
        %1031 = vxpose.xlu0.b32.cont [4/16] 0.0, 128
        %1032 = vxpose.xlu0.b32.cont [5/16] 0.0, 128
        %1033 = vxpose.xlu0.b32.cont [6/16] 0.0, 128
        %1034 = vxpose.xlu0.b32.cont [7/16] 0.0, 128
        %1035 = vxpose.xlu0.b32.cont [8/16] 0.0, 128
        %1036 = vxpose.xlu0.b32.cont [9/16] 0.0, 128
        %1037 = vxpose.xlu0.b32.cont [10/16] 0.0, 128
        %1038 = vxpose.xlu0.b32.cont [11/16] 0.0, 128
        %1039 = vxpose.xlu0.b32.cont [12/16] 0.0, 128
        %1040 = vxpose.xlu0.b32.cont [13/16] 0.0, 128
        %1041 = vxpose.xlu0.b32.cont [14/16] 0.0, 128
        %1042 = vxpose.xlu0.b32.cont [15/16] 0.0, 128
        %1043 = vxpose.xlu0.b32.end [16/16] 0.0, 128
        %v1044 = vpop.trf.xlu0
        %v1045 = vpop.trf.xlu0
        %v1046 = vpop.trf.xlu0
        %v1047 = vpop.trf.xlu0
        %v1048 = vpop.trf.xlu0
        %v1049 = vpop.trf.xlu0
        %v1050 = vpop.trf.xlu0
        %v1051 = vpop.trf.xlu0
        %v1052 = vpop.trf.xlu0
        %v1053 = vpop.trf.xlu0
        %v1054 = vpop.trf.xlu0
        %v1055 = vpop.trf.xlu0
        %v1056 = vpop.trf.xlu0
        %v1057 = vpop.trf.xlu0
        %v1058 = vpop.trf.xlu0
        %v1059 = vpop.trf.xlu0
        %1060 = vxpose.xlu0.b32.start [1/16] %v572, 128
        %1061 = vxpose.xlu0.b32.cont [2/16] %v577, 128
        %1062 = vxpose.xlu0.b32.cont [3/16] 0.0, 128
        %1063 = vxpose.xlu0.b32.cont [4/16] 0.0, 128
        %1064 = vxpose.xlu0.b32.cont [5/16] 0.0, 128
        %1065 = vxpose.xlu0.b32.cont [6/16] 0.0, 128
        %1066 = vxpose.xlu0.b32.cont [7/16] 0.0, 128
        %1067 = vxpose.xlu0.b32.cont [8/16] 0.0, 128
        %1068 = vxpose.xlu0.b32.cont [9/16] 0.0, 128
        %1069 = vxpose.xlu0.b32.cont [10/16] 0.0, 128
        %1070 = vxpose.xlu0.b32.cont [11/16] 0.0, 128
        %1071 = vxpose.xlu0.b32.cont [12/16] 0.0, 128
        %1072 = vxpose.xlu0.b32.cont [13/16] 0.0, 128
        %1073 = vxpose.xlu0.b32.cont [14/16] 0.0, 128
        %1074 = vxpose.xlu0.b32.cont [15/16] 0.0, 128
        %1075 = vxpose.xlu0.b32.end [16/16] 0.0, 128
        %v1076 = vpop.trf.xlu0
        %v1077 = vpop.trf.xlu0
        %v1078 = vpop.trf.xlu0
        %v1079 = vpop.trf.xlu0
        %v1080 = vpop.trf.xlu0
        %v1081 = vpop.trf.xlu0
        %v1082 = vpop.trf.xlu0
        %v1083 = vpop.trf.xlu0
        %v1084 = vpop.trf.xlu0
        %v1085 = vpop.trf.xlu0
        %v1086 = vpop.trf.xlu0
        %v1087 = vpop.trf.xlu0
        %v1088 = vpop.trf.xlu0
        %v1089 = vpop.trf.xlu0
        %v1090 = vpop.trf.xlu0
        %v1091 = vpop.trf.xlu0
        %v1092 = vld [vmem:[%s2] sm:$0xff]
        %v1093 = vld [vmem:[%s2 + $0x8] sm:$0xff]
        %vm1094 = vcmask 130048
        %v1096 = vsel %vm1094, %v596, 0
        %v1099 = vsel %vm1094, %v628, 0
        %v1102 = vsel %vm1094, %v660, 0
        %v1105 = vsel %vm1094, %v692, 0
        %v1108 = vsel %vm1094, %v724, 0
        %v1111 = vsel %vm1094, %v756, 0
        %v1114 = vsel %vm1094, %v788, 0
        %v1117 = vsel %vm1094, %v820, 0
        %v1120 = vsel %vm1094, %v852, 0
        %v1123 = vsel %vm1094, %v884, 0
        %v1126 = vsel %vm1094, %v916, 0
        %v1129 = vsel %vm1094, %v948, 0
        %v1132 = vsel %vm1094, %v980, 0
        %v1135 = vsel %vm1094, %v1012, 0
        %v1138 = vsel %vm1094, %v1044, 0
        %v1141 = vsel %vm1094, %v1076, 0
        %1143 = vmatprep.subr.mxu0 0.0
        %1144 = vmatpush1.msra.mxu0 %v1092
        %1145 = vmatprep.subr.mxu0 0.0
        %1146 = vmatpush1.msra.mxu0 %v1093
        %1147 = vmatprep.subr.mxu0 0.0
        %1148 = vmatpush1.msra.mxu0 0.0
        %1149 = vmatprep.subr.mxu0 0.0
        %1150 = vmatpush1.msra.mxu0 0.0
        %1151 = vmatprep.subr.mxu0 0.0
        %1152 = vmatpush1.msra.mxu0 0.0
        %1153 = vmatprep.subr.mxu0 0.0
        %1154 = vmatpush1.msra.mxu0 0.0
        %1155 = vmatprep.subr.mxu0 0.0
        %1156 = vmatpush1.msra.mxu0 0.0
        %1157 = vmatprep.subr.mxu0 0.0
        %1158 = vmatpush1.msra.mxu0 0.0
        %1159 = vmatprep.subr.mxu0 0.0
        %1160 = vmatpush1.msra.mxu0 0.0
        %1161 = vmatprep.subr.mxu0 0.0
        %1162 = vmatpush1.msra.mxu0 0.0
        %1163 = vmatprep.subr.mxu0 0.0
        %1164 = vmatpush1.msra.mxu0 0.0
        %1165 = vmatprep.subr.mxu0 0.0
        %1166 = vmatpush1.msra.mxu0 0.0
        %1167 = vmatprep.subr.mxu0 0.0
        %1168 = vmatpush1.msra.mxu0 0.0
        %1169 = vmatprep.subr.mxu0 0.0
        %1170 = vmatpush1.msra.mxu0 0.0
        %1171 = vmatprep.subr.mxu0 0.0
        %1172 = vmatpush1.msra.mxu0 0.0
        %1173 = vmatprep.subr.mxu0 0.0
        %1174 = vmatpush1.msra.mxu0 0.0
        %1175 = vmatprep.subr.mxu0 0.0
        %1176 = vmatpush1.msra.mxu0 0.0
        %1177 = vmatprep.subr.mxu0 0.0
        %1178 = vmatpush1.msra.mxu0 0.0
        %1179 = vmatprep.subr.mxu0 0.0
        %1180 = vmatpush1.msra.mxu0 0.0
        %1181 = vmatprep.subr.mxu0 0.0
        %1182 = vmatpush1.msra.mxu0 0.0
        %1183 = vmatprep.subr.mxu0 0.0
        %1184 = vmatpush1.msra.mxu0 0.0
        %1185 = vmatprep.subr.mxu0 0.0
        %1186 = vmatpush1.msra.mxu0 0.0
        %1187 = vmatprep.subr.mxu0 0.0
        %1188 = vmatpush1.msra.mxu0 0.0
        %1189 = vmatprep.subr.mxu0 0.0
        %1190 = vmatpush1.msra.mxu0 0.0
        %1191 = vmatprep.subr.mxu0 0.0
        %1192 = vmatpush1.msra.mxu0 0.0
        %1193 = vmatprep.subr.mxu0 0.0
        %1194 = vmatpush1.msra.mxu0 0.0
        %1195 = vmatprep.subr.mxu0 0.0
        %1196 = vmatpush1.msra.mxu0 0.0
        %1197 = vmatprep.subr.mxu0 0.0
        %1198 = vmatpush1.msra.mxu0 0.0
        %1199 = vmatprep.subr.mxu0 0.0
        %1200 = vmatpush1.msra.mxu0 0.0
        %1201 = vmatprep.subr.mxu0 0.0
        %1202 = vmatpush1.msra.mxu0 0.0
        %1203 = vmatprep.subr.mxu0 0.0
        %1204 = vmatpush1.msra.mxu0 0.0
        %1205 = vmatprep.subr.mxu0 0.0
        %1206 = vmatpush1.msra.mxu0 0.0
        %1207 = vmatprep.mubr.f32.mxu0 0.0
        %1208 = vmatmul.mubr.f32.gmra.mrb[0].mxu0 %v1096
        %v1209 = vpop.f32.mrb[0].mxu0
        %v1210 = vadd.f32 0.0, %v1209
        %v1211 = vpop.f32.mrb[0].mxu0
        %1212 = vmatprep.mubr.f32.mxu0 0.0
        %1213 = vmatmul.mubr.f32.gmra.mrb[0].mxu0 %v1099
        %v1214 = vpop.f32.mrb[0].mxu0
        %v1215 = vadd.f32 0.0, %v1214
        %v1216 = vpop.f32.mrb[0].mxu0
        %1217 = vmatprep.mubr.f32.mxu0 0.0
        %1218 = vmatmul.mubr.f32.gmra.mrb[0].mxu0 %v1102
        %v1219 = vpop.f32.mrb[0].mxu0
        %v1220 = vadd.f32 0.0, %v1219
        %v1221 = vpop.f32.mrb[0].mxu0
        %1222 = vmatprep.mubr.f32.mxu0 0.0
        %1223 = vmatmul.mubr.f32.gmra.mrb[0].mxu0 %v1105
        %v1224 = vpop.f32.mrb[0].mxu0
        %v1225 = vadd.f32 0.0, %v1224
        %v1226 = vpop.f32.mrb[0].mxu0
        %1227 = vmatprep.mubr.f32.mxu0 0.0
        %1228 = vmatmul.mubr.f32.gmra.mrb[0].mxu0 %v1108
        %v1229 = vpop.f32.mrb[0].mxu0
        %v1230 = vadd.f32 0.0, %v1229
        %v1231 = vpop.f32.mrb[0].mxu0
        %1232 = vmatprep.mubr.f32.mxu0 0.0
        %1233 = vmatmul.mubr.f32.gmra.mrb[0].mxu0 %v1111
        %v1234 = vpop.f32.mrb[0].mxu0
        %v1235 = vadd.f32 0.0, %v1234
        %v1236 = vpop.f32.mrb[0].mxu0
        %1237 = vmatprep.mubr.f32.mxu0 0.0
        %1238 = vmatmul.mubr.f32.gmra.mrb[0].mxu0 %v1114
        %v1239 = vpop.f32.mrb[0].mxu0
        %v1240 = vadd.f32 0.0, %v1239
        %v1241 = vpop.f32.mrb[0].mxu0
        %1242 = vmatprep.mubr.f32.mxu0 0.0
        %1243 = vmatmul.mubr.f32.gmra.mrb[0].mxu0 %v1117
        %v1244 = vpop.f32.mrb[0].mxu0
        %v1245 = vadd.f32 0.0, %v1244
        %v1246 = vpop.f32.mrb[0].mxu0
        %1247 = vmatprep.mubr.f32.mxu0 0.0
        %1248 = vmatmul.mubr.f32.gmra.mrb[0].mxu0 %v1120
        %v1249 = vpop.f32.mrb[0].mxu0
        %v1250 = vadd.f32 0.0, %v1249
        %v1251 = vpop.f32.mrb[0].mxu0
        %1252 = vmatprep.mubr.f32.mxu0 0.0
        %1253 = vmatmul.mubr.f32.gmra.mrb[0].mxu0 %v1123
        %v1254 = vpop.f32.mrb[0].mxu0
        %v1255 = vadd.f32 0.0, %v1254
        %v1256 = vpop.f32.mrb[0].mxu0
        %1257 = vmatprep.mubr.f32.mxu0 0.0
        %1258 = vmatmul.mubr.f32.gmra.mrb[0].mxu0 %v1126
        %v1259 = vpop.f32.mrb[0].mxu0
        %v1260 = vadd.f32 0.0, %v1259
        %v1261 = vpop.f32.mrb[0].mxu0
        %1262 = vmatprep.mubr.f32.mxu0 0.0
        %1263 = vmatmul.mubr.f32.gmra.mrb[0].mxu0 %v1129
        %v1264 = vpop.f32.mrb[0].mxu0
        %v1265 = vadd.f32 0.0, %v1264
        %v1266 = vpop.f32.mrb[0].mxu0
        %1267 = vmatprep.mubr.f32.mxu0 0.0
        %1268 = vmatmul.mubr.f32.gmra.mrb[0].mxu0 %v1132
        %v1269 = vpop.f32.mrb[0].mxu0
        %v1270 = vadd.f32 0.0, %v1269
        %v1271 = vpop.f32.mrb[0].mxu0
        %1272 = vmatprep.mubr.f32.mxu0 0.0
        %1273 = vmatmul.mubr.f32.gmra.mrb[0].mxu0 %v1135
        %v1274 = vpop.f32.mrb[0].mxu0
        %v1275 = vadd.f32 0.0, %v1274
        %v1276 = vpop.f32.mrb[0].mxu0
        %1277 = vmatprep.mubr.f32.mxu0 0.0
        %1278 = vmatmul.mubr.f32.gmra.mrb[0].mxu0 %v1138
        %v1279 = vpop.f32.mrb[0].mxu0
        %v1280 = vadd.f32 0.0, %v1279
        %v1281 = vpop.f32.mrb[0].mxu0
        %1282 = vmatprep.mubr.f32.mxu0 0.0
        %1283 = vmatmul.mubr.f32.gmra.mrb[0].mxu0 %v1141
        %v1284 = vpop.f32.mrb[0].mxu0
        %v1285 = vadd.f32 0.0, %v1284
        %v1286 = vpop.f32.mrb[0].mxu0
        %1287 = vdwg.mxu0
        %vm1288 = vcmask 261120
        %1289 = vst.msk [vmem:[#allocation2] sm:$0xff] %vm1288, %v1210
        %1290 = vst.msk [vmem:[#allocation2 + $0x8] sm:$0xff] %vm1288, %v1215
        %1291 = vst.msk [vmem:[#allocation2 + $0x10] sm:$0xff] %vm1288, %v1220
        %1292 = vst.msk [vmem:[#allocation2 + $0x18] sm:$0xff] %vm1288, %v1225
        %1293 = vst.msk [vmem:[#allocation2 + $0x20] sm:$0xff] %vm1288, %v1230
        %1294 = vst.msk [vmem:[#allocation2 + $0x28] sm:$0xff] %vm1288, %v1235
        %1295 = vst.msk [vmem:[#allocation2 + $0x30] sm:$0xff] %vm1288, %v1240
        %1296 = vst.msk [vmem:[#allocation2 + $0x38] sm:$0xff] %vm1288, %v1245
        %1297 = vst.msk [vmem:[#allocation2 + $0x40] sm:$0xff] %vm1288, %v1250
        %1298 = vst.msk [vmem:[#allocation2 + $0x48] sm:$0xff] %vm1288, %v1255
        %1299 = vst.msk [vmem:[#allocation2 + $0x50] sm:$0xff] %vm1288, %v1260
        %1300 = vst.msk [vmem:[#allocation2 + $0x58] sm:$0xff] %vm1288, %v1265
        %1301 = vst.msk [vmem:[#allocation2 + $0x60] sm:$0xff] %vm1288, %v1270
        %1302 = vst.msk [vmem:[#allocation2 + $0x68] sm:$0xff] %vm1288, %v1275
        %1303 = vst.msk [vmem:[#allocation2 + $0x70] sm:$0xff] %vm1288, %v1280
        %1304 = vst.msk [vmem:[#allocation2 + $0x78] sm:$0xff] %vm1288, %v1285
        %v1305 = vld [vmem:[#allocation2] sm:$0xff]
        %v1306 = vmax.f32 %v1305, 0.0
        %v1307 = vadd.f32 %v1306, 0.0
        %v1308 = vmul.f32 %v1305, 0.516129
        %s1309 = scalar_lea.vmem [#allocation2], 8
        %v1310 = vld [vmem:[%s1309] sm:$0xff]
        %v1311 = vmul.f32 %v1310, 0.48387095
        %v1312 = vadd.f32 %v1308, %v1311
        %v1313 = vmax.f32 %v1312, 0.0
        %v1314 = vadd.f32 %v1307, %v1313
        %v1315 = vmul.f32 %v1305, 0.032258064
        %v1316 = vmul.f32 %v1310, 0.9677419
        %v1317 = vadd.f32 %v1315, %v1316
        %v1318 = vmax.f32 %v1317, 0.0
        %v1319 = vadd.f32 %v1314, %v1318
        %v1320 = vmul.f32 %v1310, 0.5483871
        %s1321 = scalar_lea.vmem [#allocation2], 16
        %v1322 = vld [vmem:[%s1321] sm:$0xff]
        %v1323 = vmul.f32 %v1322, 0.4516129
        %v1324 = vadd.f32 %v1320, %v1323
        %v1325 = vmax.f32 %v1324, 0.0
        %v1326 = vadd.f32 %v1319, %v1325
        %v1327 = vmul.f32 %v1310, 0.06451613
        %v1328 = vmul.f32 %v1322, 0.9354839
        %v1329 = vadd.f32 %v1327, %v1328
        %v1330 = vmax.f32 %v1329, 0.0
        %v1331 = vadd.f32 %v1326, %v1330
        %v1332 = vmul.f32 %v1322, 0.58064514
        %s1333 = scalar_lea.vmem [#allocation2], 24
        %v1334 = vld [vmem:[%s1333] sm:$0xff]
        %v1335 = vmul.f32 %v1334, 0.41935483
        %v1336 = vadd.f32 %v1332, %v1335
        %v1337 = vmax.f32 %v1336, 0.0
        %v1338 = vadd.f32 %v1331, %v1337
        %v1339 = vmul.f32 %v1322, 0.09677419
        %v1340 = vmul.f32 %v1334, 0.9032258
        %v1341 = vadd.f32 %v1339, %v1340
        %v1342 = vmax.f32 %v1341, 0.0
        %v1343 = vadd.f32 %v1338, %v1342
        %v1344 = vmul.f32 %v1334, 0.61290324
        %s1345 = scalar_lea.vmem [#allocation2], 32
        %v1346 = vld [vmem:[%s1345] sm:$0xff]
        %v1347 = vmul.f32 %v1346, 0.38709676
        %v1348 = vadd.f32 %v1344, %v1347
        %v1349 = vmax.f32 %v1348, 0.0
        %v1350 = vadd.f32 %v1343, %v1349
        %v1351 = vmul.f32 %v1334, 0.12903225
        %v1352 = vmul.f32 %v1346, 0.87096775
        %v1353 = vadd.f32 %v1351, %v1352
        %v1354 = vmax.f32 %v1353, 0.0
        %v1355 = vadd.f32 %v1350, %v1354
        %v1356 = vmul.f32 %v1346, 0.6451613
        %s1357 = scalar_lea.vmem [#allocation2], 40
        %v1358 = vld [vmem:[%s1357] sm:$0xff]
        %v1359 = vmul.f32 %v1358, 0.3548387
        %v1360 = vadd.f32 %v1356, %v1359
        %v1361 = vmax.f32 %v1360, 0.0
        %v1362 = vadd.f32 %v1355, %v1361
        %v1363 = vmul.f32 %v1346, 0.16129032
        %v1364 = vmul.f32 %v1358, 0.83870965
        %v1365 = vadd.f32 %v1363, %v1364
        %v1366 = vmax.f32 %v1365, 0.0
        %v1367 = vadd.f32 %v1362, %v1366
        %v1368 = vmul.f32 %v1358, 0.67741936
        %s1369 = scalar_lea.vmem [#allocation2], 48
        %v1370 = vld [vmem:[%s1369] sm:$0xff]
        %v1371 = vmul.f32 %v1370, 0.32258064
        %v1372 = vadd.f32 %v1368, %v1371
        %v1373 = vmax.f32 %v1372, 0.0
        %v1374 = vadd.f32 %v1367, %v1373
        %v1375 = vmul.f32 %v1358, 0.19354838
        %v1376 = vmul.f32 %v1370, 0.8064516
        %v1377 = vadd.f32 %v1375, %v1376
        %v1378 = vmax.f32 %v1377, 0.0
        %v1379 = vadd.f32 %v1374, %v1378
        %v1380 = vmul.f32 %v1370, 0.7096774
        %s1381 = scalar_lea.vmem [#allocation2], 56
        %v1382 = vld [vmem:[%s1381] sm:$0xff]
        %v1383 = vmul.f32 %v1382, 0.29032257
        %v1384 = vadd.f32 %v1380, %v1383
        %v1385 = vmax.f32 %v1384, 0.0
        %v1386 = vadd.f32 %v1379, %v1385
        %v1387 = vmul.f32 %v1370, 0.22580644
        %v1388 = vmul.f32 %v1382, 0.7741935
        %v1389 = vadd.f32 %v1387, %v1388
        %v1390 = vmax.f32 %v1389, 0.0
        %v1391 = vadd.f32 %v1386, %v1390
        %v1392 = vmul.f32 %v1382, 0.7419355
        %s1393 = scalar_lea.vmem [#allocation2], 64
        %v1394 = vld [vmem:[%s1393] sm:$0xff]
        %v1395 = vmul.f32 %v1394, 0.2580645
        %v1396 = vadd.f32 %v1392, %v1395
        %v1397 = vmax.f32 %v1396, 0.0
        %v1398 = vadd.f32 %v1391, %v1397
        %v1399 = vmul.f32 %v1382, 0.2580645
        %v1400 = vmul.f32 %v1394, 0.7419355
        %v1401 = vadd.f32 %v1399, %v1400
        %v1402 = vmax.f32 %v1401, 0.0
        %v1403 = vadd.f32 %v1398, %v1402
        %v1404 = vmul.f32 %v1394, 0.7741935
        %s1405 = scalar_lea.vmem [#allocation2], 72
        %v1406 = vld [vmem:[%s1405] sm:$0xff]
        %v1407 = vmul.f32 %v1406, 0.22580644
        %v1408 = vadd.f32 %v1404, %v1407
        %v1409 = vmax.f32 %v1408, 0.0
        %v1410 = vadd.f32 %v1403, %v1409
        %v1411 = vmul.f32 %v1394, 0.29032257
        %v1412 = vmul.f32 %v1406, 0.7096774
        %v1413 = vadd.f32 %v1411, %v1412
        %v1414 = vmax.f32 %v1413, 0.0
        %v1415 = vadd.f32 %v1410, %v1414
        %v1416 = vmul.f32 %v1406, 0.8064516
        %s1417 = scalar_lea.vmem [#allocation2], 80
        %v1418 = vld [vmem:[%s1417] sm:$0xff]
        %v1419 = vmul.f32 %v1418, 0.19354838
        %v1420 = vadd.f32 %v1416, %v1419
        %v1421 = vmax.f32 %v1420, 0.0
        %v1422 = vadd.f32 %v1415, %v1421
        %v1423 = vmul.f32 %v1406, 0.32258064
        %v1424 = vmul.f32 %v1418, 0.67741936
        %v1425 = vadd.f32 %v1423, %v1424
        %v1426 = vmax.f32 %v1425, 0.0
        %v1427 = vadd.f32 %v1422, %v1426
        %v1428 = vmul.f32 %v1418, 0.83870965
        %s1429 = scalar_lea.vmem [#allocation2], 88
        %v1430 = vld [vmem:[%s1429] sm:$0xff]
        %v1431 = vmul.f32 %v1430, 0.16129032
        %v1432 = vadd.f32 %v1428, %v1431
        %v1433 = vmax.f32 %v1432, 0.0
        %v1434 = vadd.f32 %v1427, %v1433
        %v1435 = vmul.f32 %v1418, 0.3548387
        %v1436 = vmul.f32 %v1430, 0.6451613
        %v1437 = vadd.f32 %v1435, %v1436
        %v1438 = vmax.f32 %v1437, 0.0
        %v1439 = vadd.f32 %v1434, %v1438
        %v1440 = vmul.f32 %v1430, 0.87096775
        %s1441 = scalar_lea.vmem [#allocation2], 96
        %v1442 = vld [vmem:[%s1441] sm:$0xff]
        %v1443 = vmul.f32 %v1442, 0.12903225
        %v1444 = vadd.f32 %v1440, %v1443
        %v1445 = vmax.f32 %v1444, 0.0
        %v1446 = vadd.f32 %v1439, %v1445
        %v1447 = vmul.f32 %v1430, 0.38709676
        %v1448 = vmul.f32 %v1442, 0.61290324
        %v1449 = vadd.f32 %v1447, %v1448
        %v1450 = vmax.f32 %v1449, 0.0
        %v1451 = vadd.f32 %v1446, %v1450
        %v1452 = vmul.f32 %v1442, 0.9032258
        %s1453 = scalar_lea.vmem [#allocation2], 104
        %v1454 = vld [vmem:[%s1453] sm:$0xff]
        %v1455 = vmul.f32 %v1454, 0.09677419
        %v1456 = vadd.f32 %v1452, %v1455
        %v1457 = vmax.f32 %v1456, 0.0
        %v1458 = vadd.f32 %v1451, %v1457
        %v1459 = vmul.f32 %v1442, 0.41935483
        %v1460 = vmul.f32 %v1454, 0.58064514
        %v1461 = vadd.f32 %v1459, %v1460
        %v1462 = vmax.f32 %v1461, 0.0
        %v1463 = vadd.f32 %v1458, %v1462
        %v1464 = vmul.f32 %v1454, 0.9354839
        %s1465 = scalar_lea.vmem [#allocation2], 112
        %v1466 = vld [vmem:[%s1465] sm:$0xff]
        %v1467 = vmul.f32 %v1466, 0.06451613
        %v1468 = vadd.f32 %v1464, %v1467
        %v1469 = vmax.f32 %v1468, 0.0
        %v1470 = vadd.f32 %v1463, %v1469
        %v1471 = vmul.f32 %v1454, 0.4516129
        %v1472 = vmul.f32 %v1466, 0.5483871
        %v1473 = vadd.f32 %v1471, %v1472
        %v1474 = vmax.f32 %v1473, 0.0
        %v1475 = vadd.f32 %v1470, %v1474
        %v1476 = vmul.f32 %v1466, 0.9677419
        %s1477 = scalar_lea.vmem [#allocation2], 120
        %v1478 = vld [vmem:[%s1477] sm:$0xff]
        %v1479 = vmul.f32 %v1478, 0.032258064
        %v1480 = vadd.f32 %v1476, %v1479
        %v1481 = vmax.f32 %v1480, 0.0
        %v1482 = vadd.f32 %v1475, %v1481
        %v1483 = vmul.f32 %v1466, 0.48387095
        %v1484 = vmul.f32 %v1478, 0.516129
        %v1485 = vadd.f32 %v1483, %v1484
        %v1486 = vmax.f32 %v1485, 0.0
        %v1487 = vadd.f32 %v1482, %v1486
        %v1488 = vmax.f32 %v1478, 0.0
        %v1489 = vadd.f32 %v1487, %v1488
        %v1490 = vsel %vm1288, %v1489, 0.0
        %1491 = vadd.xlane.f32.xlu0 %v1490
        %v1492 = vpop.xlane.xlu0 %1491
        %v1493 = vmul.f32 %v1492, 0.0009765625
        %v1494 = vld [vmem:[%s3] sm:$0xff]
        %v1496 = vlaneseq
        %v1497 = vand.u32 %v1496, 127
        %v1498 = vlaneseq
        %v1499 = vshrl.u32 %v1498, 7
        %v1500 = vsub.s32 %v1497, %v1499
        %v1501 = vrot.slane %v1493, %v1500
        %v1502 = vsel %vm258, %v1501, 0
        %1504 = vmatprep.subr.mxu0 0.0
        %1505 = vmatpush1.msra.mxu0 %v1494
        %1506 = vmatprep.subr.mxu0 0.0
        %1507 = vmatpush1.msra.mxu0 0.0
        %1508 = vmatprep.subr.mxu0 0.0
        %1509 = vmatpush1.msra.mxu0 0.0
        %1510 = vmatprep.subr.mxu0 0.0
        %1511 = vmatpush1.msra.mxu0 0.0
        %1512 = vmatprep.subr.mxu0 0.0
        %1513 = vmatpush1.msra.mxu0 0.0
        %1514 = vmatprep.subr.mxu0 0.0
        %1515 = vmatpush1.msra.mxu0 0.0
        %1516 = vmatprep.subr.mxu0 0.0
        %1517 = vmatpush1.msra.mxu0 0.0
        %1518 = vmatprep.subr.mxu0 0.0
        %1519 = vmatpush1.msra.mxu0 0.0
        %1520 = vmatprep.subr.mxu0 0.0
        %1521 = vmatpush1.msra.mxu0 0.0
        %1522 = vmatprep.subr.mxu0 0.0
        %1523 = vmatpush1.msra.mxu0 0.0
        %1524 = vmatprep.subr.mxu0 0.0
        %1525 = vmatpush1.msra.mxu0 0.0
        %1526 = vmatprep.subr.mxu0 0.0
        %1527 = vmatpush1.msra.mxu0 0.0
        %1528 = vmatprep.subr.mxu0 0.0
        %1529 = vmatpush1.msra.mxu0 0.0
        %1530 = vmatprep.subr.mxu0 0.0
        %1531 = vmatpush1.msra.mxu0 0.0
        %1532 = vmatprep.subr.mxu0 0.0
        %1533 = vmatpush1.msra.mxu0 0.0
        %1534 = vmatprep.subr.mxu0 0.0
        %1535 = vmatpush1.msra.mxu0 0.0
        %1536 = vmatprep.subr.mxu0 0.0
        %1537 = vmatpush1.msra.mxu0 0.0
        %1538 = vmatprep.subr.mxu0 0.0
        %1539 = vmatpush1.msra.mxu0 0.0
        %1540 = vmatprep.subr.mxu0 0.0
        %1541 = vmatpush1.msra.mxu0 0.0
        %1542 = vmatprep.subr.mxu0 0.0
        %1543 = vmatpush1.msra.mxu0 0.0
        %1544 = vmatprep.subr.mxu0 0.0
        %1545 = vmatpush1.msra.mxu0 0.0
        %1546 = vmatprep.subr.mxu0 0.0
        %1547 = vmatpush1.msra.mxu0 0.0
        %1548 = vmatprep.subr.mxu0 0.0
        %1549 = vmatpush1.msra.mxu0 0.0
        %1550 = vmatprep.subr.mxu0 0.0
        %1551 = vmatpush1.msra.mxu0 0.0
        %1552 = vmatprep.subr.mxu0 0.0
        %1553 = vmatpush1.msra.mxu0 0.0
        %1554 = vmatprep.subr.mxu0 0.0
        %1555 = vmatpush1.msra.mxu0 0.0
        %1556 = vmatprep.subr.mxu0 0.0
        %1557 = vmatpush1.msra.mxu0 0.0
        %1558 = vmatprep.subr.mxu0 0.0
        %1559 = vmatpush1.msra.mxu0 0.0
        %1560 = vmatprep.subr.mxu0 0.0
        %1561 = vmatpush1.msra.mxu0 0.0
        %1562 = vmatprep.subr.mxu0 0.0
        %1563 = vmatpush1.msra.mxu0 0.0
        %1564 = vmatprep.subr.mxu0 0.0
        %1565 = vmatpush1.msra.mxu0 0.0
        %1566 = vmatprep.subr.mxu0 0.0
        %1567 = vmatpush1.msra.mxu0 0.0
        %1568 = vmatprep.mubr.f32.mxu0 0.0
        %1569 = vmatmul.mubr.f32.gmra.mrb[0].mxu0 %v1502
        %v1570 = vpop.f32.mrb[0].mxu0
        %v1571 = vadd.f32 0.0, %v1570
        %v1572 = vpop.f32.mrb[0].mxu0
        %1573 = vdwg.mxu0
        %v1574 = vmax.f32 %v1571, 0.0
        %v1575 = vld [vmem:[%s4] sm:$0x3]
        %vm1576 = vcmask 15360
        %v1578 = vsel %vm1576, %v1574, 0
        %vm1580 = vcmask 1041408
        %v1582 = vsel %vm1580, %v1575, 0
        %1584 = vmatprep.subr.mxu0 0.0
        %1585 = vmatpush1.msra.mxu0 %v1582
        %1586 = vmatprep.subr.mxu0 0.0
        %1587 = vmatpush1.msra.mxu0 0.0
        %1588 = vmatprep.subr.mxu0 0.0
        %1589 = vmatpush1.msra.mxu0 0.0
        %1590 = vmatprep.subr.mxu0 0.0
        %1591 = vmatpush1.msra.mxu0 0.0
        %1592 = vmatprep.subr.mxu0 0.0
        %1593 = vmatpush1.msra.mxu0 0.0
        %1594 = vmatprep.subr.mxu0 0.0
        %1595 = vmatpush1.msra.mxu0 0.0
        %1596 = vmatprep.subr.mxu0 0.0
        %1597 = vmatpush1.msra.mxu0 0.0
        %1598 = vmatprep.subr.mxu0 0.0
        %1599 = vmatpush1.msra.mxu0 0.0
        %1600 = vmatprep.subr.mxu0 0.0
        %1601 = vmatpush1.msra.mxu0 0.0
        %1602 = vmatprep.subr.mxu0 0.0
        %1603 = vmatpush1.msra.mxu0 0.0
        %1604 = vmatprep.subr.mxu0 0.0
        %1605 = vmatpush1.msra.mxu0 0.0
        %1606 = vmatprep.subr.mxu0 0.0
        %1607 = vmatpush1.msra.mxu0 0.0
        %1608 = vmatprep.subr.mxu0 0.0
        %1609 = vmatpush1.msra.mxu0 0.0
        %1610 = vmatprep.subr.mxu0 0.0
        %1611 = vmatpush1.msra.mxu0 0.0
        %1612 = vmatprep.subr.mxu0 0.0
        %1613 = vmatpush1.msra.mxu0 0.0
        %1614 = vmatprep.subr.mxu0 0.0
        %1615 = vmatpush1.msra.mxu0 0.0
        %1616 = vmatprep.subr.mxu0 0.0
        %1617 = vmatpush1.msra.mxu0 0.0
        %1618 = vmatprep.subr.mxu0 0.0
        %1619 = vmatpush1.msra.mxu0 0.0
        %1620 = vmatprep.subr.mxu0 0.0
        %1621 = vmatpush1.msra.mxu0 0.0
        %1622 = vmatprep.subr.mxu0 0.0
        %1623 = vmatpush1.msra.mxu0 0.0
        %1624 = vmatprep.subr.mxu0 0.0
        %1625 = vmatpush1.msra.mxu0 0.0
        %1626 = vmatprep.subr.mxu0 0.0
        %1627 = vmatpush1.msra.mxu0 0.0
        %1628 = vmatprep.subr.mxu0 0.0
        %1629 = vmatpush1.msra.mxu0 0.0
        %1630 = vmatprep.subr.mxu0 0.0
        %1631 = vmatpush1.msra.mxu0 0.0
        %1632 = vmatprep.subr.mxu0 0.0
        %1633 = vmatpush1.msra.mxu0 0.0
        %1634 = vmatprep.subr.mxu0 0.0
        %1635 = vmatpush1.msra.mxu0 0.0
        %1636 = vmatprep.subr.mxu0 0.0
        %1637 = vmatpush1.msra.mxu0 0.0
        %1638 = vmatprep.subr.mxu0 0.0
        %1639 = vmatpush1.msra.mxu0 0.0
        %1640 = vmatprep.subr.mxu0 0.0
        %1641 = vmatpush1.msra.mxu0 0.0
        %1642 = vmatprep.subr.mxu0 0.0
        %1643 = vmatpush1.msra.mxu0 0.0
        %1644 = vmatprep.subr.mxu0 0.0
        %1645 = vmatpush1.msra.mxu0 0.0
        %1646 = vmatprep.subr.mxu0 0.0
        %1647 = vmatpush1.msra.mxu0 0.0
        %1648 = vmatprep.mubr.f32.mxu0 0.0
        %1649 = vmatmul.mubr.f32.gmra.mrb[0].mxu0 %v1578
        %v1650 = vpop.f32.mrb[0].mxu0
        %v1651 = vadd.f32 0.0, %v1650
        %v1652 = vpop.f32.mrb[0].mxu0
        %1653 = vdwg.mxu0
        %v1654 = vxor.u32 %v1651, 2147483648
        %v1655 = vmul.f32 %v1654, 1.442695
        %v1656 = vpow.pop %v1655
        %v1657 = vadd.f32 %v1656, 1.0
        %v1658 = vrcp.pop %v1657
        %v1659 = vmul.f32 1.0, %v1658
        %v1660 = vlaneseq
        %v1661 = vshrl.u32 %v1660, 7
        %v1662 = vsub.s32 0, %v1661
        %v1663 = vrot.slane %v1659, %v1662
        %1665 = vbcast.lane.b32.xlu0 %v1663, 256
        %v1666 = vpop.permute.xlu0 %1665
        %v1667 = vmul.f32 %v1306, %v1666
        %v1669 = vcombine.high %v1667, %v1667
        %v1671 = vunpack.c.l.s4 1966171168
        %v1672 = vunpack.c.0.s8 %v1671
        %v1673 = vlaneseq
        %v1674 = vshrl.u32 %v1673, 7
        %v1675 = vsub.s32 %v1672, %v1674
        %v1676 = vrot.slane %v1667, %v1675
        %v1678 = vunpack.c.l.s4 1966171168
        %v1679 = vunpack.c.0.s8 %v1678
        %v1680 = vlaneseq
        %v1681 = vshrl.u32 %v1680, 7
        %v1682 = vsub.s32 %v1679, %v1681
        %v1683 = vrot.slane %v1669, %v1682
        %v1684 = vcombine.high %v1676, %v1676
        %v1685 = vcombine.high %v1683, %v1683
        %v1687 = vunpack.c.l.s4 1966171168
        %v1688 = vunpack.c.0.s8 %v1687
        %v1689 = vlaneseq
        %v1690 = vshrl.u32 %v1689, 7
        %v1691 = vsub.s32 %v1688, %v1690
        %v1692 = vrot.slane %v1676, %v1691
        %v1694 = vunpack.c.l.s4 1966171168
        %v1695 = vunpack.c.0.s8 %v1694
        %v1696 = vlaneseq
        %v1697 = vshrl.u32 %v1696, 7
        %v1698 = vsub.s32 %v1695, %v1697
        %v1699 = vrot.slane %v1683, %v1698
        %v1701 = vunpack.c.l.s4 1966171168
        %v1702 = vunpack.c.0.s8 %v1701
        %v1703 = vlaneseq
        %v1704 = vshrl.u32 %v1703, 7
        %v1705 = vsub.s32 %v1702, %v1704
        %v1706 = vrot.slane %v1684, %v1705
        %v1708 = vunpack.c.l.s4 1966171168
        %v1709 = vunpack.c.0.s8 %v1708
        %v1710 = vlaneseq
        %v1711 = vshrl.u32 %v1710, 7
        %v1712 = vsub.s32 %v1709, %v1711
        %v1713 = vrot.slane %v1685, %v1712
        %v1714 = vcombine.high %v1692, %v1692
        %v1715 = vcombine.high %v1699, %v1699
        %v1716 = vcombine.high %v1706, %v1706
        %v1717 = vcombine.high %v1713, %v1713
        %vm1726 = vcmask 253952
        %1727 = vst.msk [vmem:[%s218] sm:$0x1] %vm1726, %v1692
        %1728 = vst.msk [vmem:[%s218 + $0x20] sm:$0x1] %vm1726, %v1706
        %1729 = vst.msk [vmem:[%s218 + $0x40] sm:$0x1] %vm1726, %v1714
        %1730 = vst.msk [vmem:[%s218 + $0x60] sm:$0x1] %vm1726, %v1716
        %1731 = vst.msk [vmem:[%s218 + $0x80] sm:$0x1] %vm1726, %v1699
        %1732 = vst.msk [vmem:[%s218 + $0xa0] sm:$0x1] %vm1726, %v1713
        %1733 = vst.msk [vmem:[%s218 + $0xc0] sm:$0x1] %vm1726, %v1715
        %1734 = vst.msk [vmem:[%s218 + $0xe0] sm:$0x1] %vm1726, %v1717
        %v1735 = vld [vmem:[#allocation2] sm:$0xff]
        %v1736 = vmul.f32 %v1735, 0.516129
        %v1737 = vld [vmem:[%s1309] sm:$0xff]
        %v1738 = vmul.f32 %v1737, 0.48387095
        %v1739 = vadd.f32 %v1736, %v1738
        %v1740 = vmax.f32 %v1739, 0.0
        %v1741 = vmul.f32 %v1740, %v1666
        %v1743 = vcombine.high %v1741, %v1741
        %v1745 = vunpack.c.l.s4 1966171168
        %v1746 = vunpack.c.0.s8 %v1745
        %v1747 = vlaneseq
        %v1748 = vshrl.u32 %v1747, 7
        %v1749 = vsub.s32 %v1746, %v1748
        %v1750 = vrot.slane %v1741, %v1749
        %v1752 = vunpack.c.l.s4 1966171168
        %v1753 = vunpack.c.0.s8 %v1752
        %v1754 = vlaneseq
        %v1755 = vshrl.u32 %v1754, 7
        %v1756 = vsub.s32 %v1753, %v1755
        %v1757 = vrot.slane %v1743, %v1756
        %v1758 = vcombine.high %v1750, %v1750
        %v1759 = vcombine.high %v1757, %v1757
        %v1761 = vunpack.c.l.s4 1966171168
        %v1762 = vunpack.c.0.s8 %v1761
        %v1763 = vlaneseq
        %v1764 = vshrl.u32 %v1763, 7
        %v1765 = vsub.s32 %v1762, %v1764
        %v1766 = vrot.slane %v1750, %v1765
        %v1768 = vunpack.c.l.s4 1966171168
        %v1769 = vunpack.c.0.s8 %v1768
        %v1770 = vlaneseq
        %v1771 = vshrl.u32 %v1770, 7
        %v1772 = vsub.s32 %v1769, %v1771
        %v1773 = vrot.slane %v1757, %v1772
        %v1775 = vunpack.c.l.s4 1966171168
        %v1776 = vunpack.c.0.s8 %v1775
        %v1777 = vlaneseq
        %v1778 = vshrl.u32 %v1777, 7
        %v1779 = vsub.s32 %v1776, %v1778
        %v1780 = vrot.slane %v1758, %v1779
        %v1782 = vunpack.c.l.s4 1966171168
        %v1783 = vunpack.c.0.s8 %v1782
        %v1784 = vlaneseq
        %v1785 = vshrl.u32 %v1784, 7
        %v1786 = vsub.s32 %v1783, %v1785
        %v1787 = vrot.slane %v1759, %v1786
        %v1788 = vcombine.high %v1766, %v1766
        %v1789 = vcombine.high %v1773, %v1773
        %v1790 = vcombine.high %v1780, %v1780
        %v1791 = vcombine.high %v1787, %v1787
        %1800 = vst.msk [vmem:[%s218 + $0x1] sm:$0x1] %vm1726, %v1766
        %1801 = vst.msk [vmem:[%s218 + $0x21] sm:$0x1] %vm1726, %v1780
        %1802 = vst.msk [vmem:[%s218 + $0x41] sm:$0x1] %vm1726, %v1788
        %1803 = vst.msk [vmem:[%s218 + $0x61] sm:$0x1] %vm1726, %v1790
        %1804 = vst.msk [vmem:[%s218 + $0x81] sm:$0x1] %vm1726, %v1773
        %1805 = vst.msk [vmem:[%s218 + $0xa1] sm:$0x1] %vm1726, %v1787
        %1806 = vst.msk [vmem:[%s218 + $0xc1] sm:$0x1] %vm1726, %v1789
        %1807 = vst.msk [vmem:[%s218 + $0xe1] sm:$0x1] %vm1726, %v1791
        %v1808 = vld [vmem:[#allocation2] sm:$0xff]
        %v1809 = vmul.f32 %v1808, 0.032258064
        %v1810 = vld [vmem:[%s1309] sm:$0xff]
        %v1811 = vmul.f32 %v1810, 0.9677419
        %v1812 = vadd.f32 %v1809, %v1811
        %v1813 = vmax.f32 %v1812, 0.0
        %v1814 = vmul.f32 %v1813, %v1666
        %v1816 = vcombine.high %v1814, %v1814
        %v1818 = vunpack.c.l.s4 1966171168
        %v1819 = vunpack.c.0.s8 %v1818
        %v1820 = vlaneseq
        %v1821 = vshrl.u32 %v1820, 7
        %v1822 = vsub.s32 %v1819, %v1821
        %v1823 = vrot.slane %v1814, %v1822
        %v1825 = vunpack.c.l.s4 1966171168
        %v1826 = vunpack.c.0.s8 %v1825
        %v1827 = vlaneseq
        %v1828 = vshrl.u32 %v1827, 7
        %v1829 = vsub.s32 %v1826, %v1828
        %v1830 = vrot.slane %v1816, %v1829
        %v1831 = vcombine.high %v1823, %v1823
        %v1832 = vcombine.high %v1830, %v1830
        %v1834 = vunpack.c.l.s4 1966171168
        %v1835 = vunpack.c.0.s8 %v1834
        %v1836 = vlaneseq
        %v1837 = vshrl.u32 %v1836, 7
        %v1838 = vsub.s32 %v1835, %v1837
        %v1839 = vrot.slane %v1823, %v1838
        %v1841 = vunpack.c.l.s4 1966171168
        %v1842 = vunpack.c.0.s8 %v1841
        %v1843 = vlaneseq
        %v1844 = vshrl.u32 %v1843, 7
        %v1845 = vsub.s32 %v1842, %v1844
        %v1846 = vrot.slane %v1830, %v1845
        %v1848 = vunpack.c.l.s4 1966171168
        %v1849 = vunpack.c.0.s8 %v1848
        %v1850 = vlaneseq
        %v1851 = vshrl.u32 %v1850, 7
        %v1852 = vsub.s32 %v1849, %v1851
        %v1853 = vrot.slane %v1831, %v1852
        %v1855 = vunpack.c.l.s4 1966171168
        %v1856 = vunpack.c.0.s8 %v1855
        %v1857 = vlaneseq
        %v1858 = vshrl.u32 %v1857, 7
        %v1859 = vsub.s32 %v1856, %v1858
        %v1860 = vrot.slane %v1832, %v1859
        %v1861 = vcombine.high %v1839, %v1839
        %v1862 = vcombine.high %v1846, %v1846
        %v1863 = vcombine.high %v1853, %v1853
        %v1864 = vcombine.high %v1860, %v1860
        %1873 = vst.msk [vmem:[%s218 + $0x2] sm:$0x1] %vm1726, %v1839
        %1874 = vst.msk [vmem:[%s218 + $0x22] sm:$0x1] %vm1726, %v1853
        %1875 = vst.msk [vmem:[%s218 + $0x42] sm:$0x1] %vm1726, %v1861
        %1876 = vst.msk [vmem:[%s218 + $0x62] sm:$0x1] %vm1726, %v1863
        %1877 = vst.msk [vmem:[%s218 + $0x82] sm:$0x1] %vm1726, %v1846
        %1878 = vst.msk [vmem:[%s218 + $0xa2] sm:$0x1] %vm1726, %v1860
        %1879 = vst.msk [vmem:[%s218 + $0xc2] sm:$0x1] %vm1726, %v1862
        %1880 = vst.msk [vmem:[%s218 + $0xe2] sm:$0x1] %vm1726, %v1864
        %v1881 = vld [vmem:[%s1309] sm:$0xff]
        %v1882 = vmul.f32 %v1881, 0.5483871
        %v1883 = vld [vmem:[%s1321] sm:$0xff]
        %v1884 = vmul.f32 %v1883, 0.4516129
        %v1885 = vadd.f32 %v1882, %v1884
        %v1886 = vmax.f32 %v1885, 0.0
        %v1887 = vmul.f32 %v1886, %v1666
        %v1889 = vcombine.high %v1887, %v1887
        %v1891 = vunpack.c.l.s4 1966171168
        %v1892 = vunpack.c.0.s8 %v1891
        %v1893 = vlaneseq
        %v1894 = vshrl.u32 %v1893, 7
        %v1895 = vsub.s32 %v1892, %v1894
        %v1896 = vrot.slane %v1887, %v1895
        %v1898 = vunpack.c.l.s4 1966171168
        %v1899 = vunpack.c.0.s8 %v1898
        %v1900 = vlaneseq
        %v1901 = vshrl.u32 %v1900, 7
        %v1902 = vsub.s32 %v1899, %v1901
        %v1903 = vrot.slane %v1889, %v1902
        %v1904 = vcombine.high %v1896, %v1896
        %v1905 = vcombine.high %v1903, %v1903
        %v1907 = vunpack.c.l.s4 1966171168
        %v1908 = vunpack.c.0.s8 %v1907
        %v1909 = vlaneseq
        %v1910 = vshrl.u32 %v1909, 7
        %v1911 = vsub.s32 %v1908, %v1910
        %v1912 = vrot.slane %v1896, %v1911
        %v1914 = vunpack.c.l.s4 1966171168
        %v1915 = vunpack.c.0.s8 %v1914
        %v1916 = vlaneseq
        %v1917 = vshrl.u32 %v1916, 7
        %v1918 = vsub.s32 %v1915, %v1917
        %v1919 = vrot.slane %v1903, %v1918
        %v1921 = vunpack.c.l.s4 1966171168
        %v1922 = vunpack.c.0.s8 %v1921
        %v1923 = vlaneseq
        %v1924 = vshrl.u32 %v1923, 7
        %v1925 = vsub.s32 %v1922, %v1924
        %v1926 = vrot.slane %v1904, %v1925
        %v1928 = vunpack.c.l.s4 1966171168
        %v1929 = vunpack.c.0.s8 %v1928
        %v1930 = vlaneseq
        %v1931 = vshrl.u32 %v1930, 7
        %v1932 = vsub.s32 %v1929, %v1931
        %v1933 = vrot.slane %v1905, %v1932
        %v1934 = vcombine.high %v1912, %v1912
        %v1935 = vcombine.high %v1919, %v1919
        %v1936 = vcombine.high %v1926, %v1926
        %v1937 = vcombine.high %v1933, %v1933
        %1946 = vst.msk [vmem:[%s218 + $0x3] sm:$0x1] %vm1726, %v1912
        %1947 = vst.msk [vmem:[%s218 + $0x23] sm:$0x1] %vm1726, %v1926
        %1948 = vst.msk [vmem:[%s218 + $0x43] sm:$0x1] %vm1726, %v1934
        %1949 = vst.msk [vmem:[%s218 + $0x63] sm:$0x1] %vm1726, %v1936
        %1950 = vst.msk [vmem:[%s218 + $0x83] sm:$0x1] %vm1726, %v1919
        %1951 = vst.msk [vmem:[%s218 + $0xa3] sm:$0x1] %vm1726, %v1933
        %1952 = vst.msk [vmem:[%s218 + $0xc3] sm:$0x1] %vm1726, %v1935
        %1953 = vst.msk [vmem:[%s218 + $0xe3] sm:$0x1] %vm1726, %v1937
        %v1954 = vld [vmem:[%s1309] sm:$0xff]
        %v1955 = vmul.f32 %v1954, 0.06451613
        %v1956 = vld [vmem:[%s1321] sm:$0xff]
        %v1957 = vmul.f32 %v1956, 0.9354839
        %v1958 = vadd.f32 %v1955, %v1957
        %v1959 = vmax.f32 %v1958, 0.0
        %v1960 = vmul.f32 %v1959, %v1666
        %v1962 = vcombine.high %v1960, %v1960
        %v1964 = vunpack.c.l.s4 1966171168
        %v1965 = vunpack.c.0.s8 %v1964
        %v1966 = vlaneseq
        %v1967 = vshrl.u32 %v1966, 7
        %v1968 = vsub.s32 %v1965, %v1967
        %v1969 = vrot.slane %v1960, %v1968
        %v1971 = vunpack.c.l.s4 1966171168
        %v1972 = vunpack.c.0.s8 %v1971
        %v1973 = vlaneseq
        %v1974 = vshrl.u32 %v1973, 7
        %v1975 = vsub.s32 %v1972, %v1974
        %v1976 = vrot.slane %v1962, %v1975
        %v1977 = vcombine.high %v1969, %v1969
        %v1978 = vcombine.high %v1976, %v1976
        %v1980 = vunpack.c.l.s4 1966171168
        %v1981 = vunpack.c.0.s8 %v1980
        %v1982 = vlaneseq
        %v1983 = vshrl.u32 %v1982, 7
        %v1984 = vsub.s32 %v1981, %v1983
        %v1985 = vrot.slane %v1969, %v1984
        %v1987 = vunpack.c.l.s4 1966171168
        %v1988 = vunpack.c.0.s8 %v1987
        %v1989 = vlaneseq
        %v1990 = vshrl.u32 %v1989, 7
        %v1991 = vsub.s32 %v1988, %v1990
        %v1992 = vrot.slane %v1976, %v1991
        %v1994 = vunpack.c.l.s4 1966171168
        %v1995 = vunpack.c.0.s8 %v1994
        %v1996 = vlaneseq
        %v1997 = vshrl.u32 %v1996, 7
        %v1998 = vsub.s32 %v1995, %v1997
        %v1999 = vrot.slane %v1977, %v1998
        %v2001 = vunpack.c.l.s4 1966171168
        %v2002 = vunpack.c.0.s8 %v2001
        %v2003 = vlaneseq
        %v2004 = vshrl.u32 %v2003, 7
        %v2005 = vsub.s32 %v2002, %v2004
        %v2006 = vrot.slane %v1978, %v2005
        %v2007 = vcombine.high %v1985, %v1985
        %v2008 = vcombine.high %v1992, %v1992
        %v2009 = vcombine.high %v1999, %v1999
        %v2010 = vcombine.high %v2006, %v2006
        %2019 = vst.msk [vmem:[%s218 + $0x4] sm:$0x1] %vm1726, %v1985
        %2020 = vst.msk [vmem:[%s218 + $0x24] sm:$0x1] %vm1726, %v1999
        %2021 = vst.msk [vmem:[%s218 + $0x44] sm:$0x1] %vm1726, %v2007
        %2022 = vst.msk [vmem:[%s218 + $0x64] sm:$0x1] %vm1726, %v2009
        %2023 = vst.msk [vmem:[%s218 + $0x84] sm:$0x1] %vm1726, %v1992
        %2024 = vst.msk [vmem:[%s218 + $0xa4] sm:$0x1] %vm1726, %v2006
        %2025 = vst.msk [vmem:[%s218 + $0xc4] sm:$0x1] %vm1726, %v2008
        %2026 = vst.msk [vmem:[%s218 + $0xe4] sm:$0x1] %vm1726, %v2010
        %v2027 = vld [vmem:[%s1321] sm:$0xff]
        %v2028 = vmul.f32 %v2027, 0.58064514
        %v2029 = vld [vmem:[%s1333] sm:$0xff]
        %v2030 = vmul.f32 %v2029, 0.41935483
        %v2031 = vadd.f32 %v2028, %v2030
        %v2032 = vmax.f32 %v2031, 0.0
        %v2033 = vmul.f32 %v2032, %v1666
        %v2035 = vcombine.high %v2033, %v2033
        %v2037 = vunpack.c.l.s4 1966171168
        %v2038 = vunpack.c.0.s8 %v2037
        %v2039 = vlaneseq
        %v2040 = vshrl.u32 %v2039, 7
        %v2041 = vsub.s32 %v2038, %v2040
        %v2042 = vrot.slane %v2033, %v2041
        %v2044 = vunpack.c.l.s4 1966171168
        %v2045 = vunpack.c.0.s8 %v2044
        %v2046 = vlaneseq
        %v2047 = vshrl.u32 %v2046, 7
        %v2048 = vsub.s32 %v2045, %v2047
        %v2049 = vrot.slane %v2035, %v2048
        %v2050 = vcombine.high %v2042, %v2042
        %v2051 = vcombine.high %v2049, %v2049
        %v2053 = vunpack.c.l.s4 1966171168
        %v2054 = vunpack.c.0.s8 %v2053
        %v2055 = vlaneseq
        %v2056 = vshrl.u32 %v2055, 7
        %v2057 = vsub.s32 %v2054, %v2056
        %v2058 = vrot.slane %v2042, %v2057
        %v2060 = vunpack.c.l.s4 1966171168
        %v2061 = vunpack.c.0.s8 %v2060
        %v2062 = vlaneseq
        %v2063 = vshrl.u32 %v2062, 7
        %v2064 = vsub.s32 %v2061, %v2063
        %v2065 = vrot.slane %v2049, %v2064
        %v2067 = vunpack.c.l.s4 1966171168
        %v2068 = vunpack.c.0.s8 %v2067
        %v2069 = vlaneseq
        %v2070 = vshrl.u32 %v2069, 7
        %v2071 = vsub.s32 %v2068, %v2070
        %v2072 = vrot.slane %v2050, %v2071
        %v2074 = vunpack.c.l.s4 1966171168
        %v2075 = vunpack.c.0.s8 %v2074
        %v2076 = vlaneseq
        %v2077 = vshrl.u32 %v2076, 7
        %v2078 = vsub.s32 %v2075, %v2077
        %v2079 = vrot.slane %v2051, %v2078
        %v2080 = vcombine.high %v2058, %v2058
        %v2081 = vcombine.high %v2065, %v2065
        %v2082 = vcombine.high %v2072, %v2072
        %v2083 = vcombine.high %v2079, %v2079
        %2092 = vst.msk [vmem:[%s218 + $0x5] sm:$0x1] %vm1726, %v2058
        %2093 = vst.msk [vmem:[%s218 + $0x25] sm:$0x1] %vm1726, %v2072
        %2094 = vst.msk [vmem:[%s218 + $0x45] sm:$0x1] %vm1726, %v2080
        %2095 = vst.msk [vmem:[%s218 + $0x65] sm:$0x1] %vm1726, %v2082
        %2096 = vst.msk [vmem:[%s218 + $0x85] sm:$0x1] %vm1726, %v2065
        %2097 = vst.msk [vmem:[%s218 + $0xa5] sm:$0x1] %vm1726, %v2079
        %2098 = vst.msk [vmem:[%s218 + $0xc5] sm:$0x1] %vm1726, %v2081
        %2099 = vst.msk [vmem:[%s218 + $0xe5] sm:$0x1] %vm1726, %v2083
        %v2100 = vld [vmem:[%s1321] sm:$0xff]
        %v2101 = vmul.f32 %v2100, 0.09677419
        %v2102 = vld [vmem:[%s1333] sm:$0xff]
        %v2103 = vmul.f32 %v2102, 0.9032258
        %v2104 = vadd.f32 %v2101, %v2103
        %v2105 = vmax.f32 %v2104, 0.0
        %v2106 = vmul.f32 %v2105, %v1666
        %v2108 = vcombine.high %v2106, %v2106
        %v2110 = vunpack.c.l.s4 1966171168
        %v2111 = vunpack.c.0.s8 %v2110
        %v2112 = vlaneseq
        %v2113 = vshrl.u32 %v2112, 7
        %v2114 = vsub.s32 %v2111, %v2113
        %v2115 = vrot.slane %v2106, %v2114
        %v2117 = vunpack.c.l.s4 1966171168
        %v2118 = vunpack.c.0.s8 %v2117
        %v2119 = vlaneseq
        %v2120 = vshrl.u32 %v2119, 7
        %v2121 = vsub.s32 %v2118, %v2120
        %v2122 = vrot.slane %v2108, %v2121
        %v2123 = vcombine.high %v2115, %v2115
        %v2124 = vcombine.high %v2122, %v2122
        %v2126 = vunpack.c.l.s4 1966171168
        %v2127 = vunpack.c.0.s8 %v2126
        %v2128 = vlaneseq
        %v2129 = vshrl.u32 %v2128, 7
        %v2130 = vsub.s32 %v2127, %v2129
        %v2131 = vrot.slane %v2115, %v2130
        %v2133 = vunpack.c.l.s4 1966171168
        %v2134 = vunpack.c.0.s8 %v2133
        %v2135 = vlaneseq
        %v2136 = vshrl.u32 %v2135, 7
        %v2137 = vsub.s32 %v2134, %v2136
        %v2138 = vrot.slane %v2122, %v2137
        %v2140 = vunpack.c.l.s4 1966171168
        %v2141 = vunpack.c.0.s8 %v2140
        %v2142 = vlaneseq
        %v2143 = vshrl.u32 %v2142, 7
        %v2144 = vsub.s32 %v2141, %v2143
        %v2145 = vrot.slane %v2123, %v2144
        %v2147 = vunpack.c.l.s4 1966171168
        %v2148 = vunpack.c.0.s8 %v2147
        %v2149 = vlaneseq
        %v2150 = vshrl.u32 %v2149, 7
        %v2151 = vsub.s32 %v2148, %v2150
        %v2152 = vrot.slane %v2124, %v2151
        %v2153 = vcombine.high %v2131, %v2131
        %v2154 = vcombine.high %v2138, %v2138
        %v2155 = vcombine.high %v2145, %v2145
        %v2156 = vcombine.high %v2152, %v2152
        %2165 = vst.msk [vmem:[%s218 + $0x6] sm:$0x1] %vm1726, %v2131
        %2166 = vst.msk [vmem:[%s218 + $0x26] sm:$0x1] %vm1726, %v2145
        %2167 = vst.msk [vmem:[%s218 + $0x46] sm:$0x1] %vm1726, %v2153
        %2168 = vst.msk [vmem:[%s218 + $0x66] sm:$0x1] %vm1726, %v2155
        %2169 = vst.msk [vmem:[%s218 + $0x86] sm:$0x1] %vm1726, %v2138
        %2170 = vst.msk [vmem:[%s218 + $0xa6] sm:$0x1] %vm1726, %v2152
        %2171 = vst.msk [vmem:[%s218 + $0xc6] sm:$0x1] %vm1726, %v2154
        %2172 = vst.msk [vmem:[%s218 + $0xe6] sm:$0x1] %vm1726, %v2156
        %v2173 = vld [vmem:[%s1333] sm:$0xff]
        %v2174 = vmul.f32 %v2173, 0.61290324
        %v2175 = vld [vmem:[%s1345] sm:$0xff]
        %v2176 = vmul.f32 %v2175, 0.38709676
        %v2177 = vadd.f32 %v2174, %v2176
        %v2178 = vmax.f32 %v2177, 0.0
        %v2179 = vmul.f32 %v2178, %v1666
        %v2181 = vcombine.high %v2179, %v2179
        %v2183 = vunpack.c.l.s4 1966171168
        %v2184 = vunpack.c.0.s8 %v2183
        %v2185 = vlaneseq
        %v2186 = vshrl.u32 %v2185, 7
        %v2187 = vsub.s32 %v2184, %v2186
        %v2188 = vrot.slane %v2179, %v2187
        %v2190 = vunpack.c.l.s4 1966171168
        %v2191 = vunpack.c.0.s8 %v2190
        %v2192 = vlaneseq
        %v2193 = vshrl.u32 %v2192, 7
        %v2194 = vsub.s32 %v2191, %v2193
        %v2195 = vrot.slane %v2181, %v2194
        %v2196 = vcombine.high %v2188, %v2188
        %v2197 = vcombine.high %v2195, %v2195
        %v2199 = vunpack.c.l.s4 1966171168
        %v2200 = vunpack.c.0.s8 %v2199
        %v2201 = vlaneseq
        %v2202 = vshrl.u32 %v2201, 7
        %v2203 = vsub.s32 %v2200, %v2202
        %v2204 = vrot.slane %v2188, %v2203
        %v2206 = vunpack.c.l.s4 1966171168
        %v2207 = vunpack.c.0.s8 %v2206
        %v2208 = vlaneseq
        %v2209 = vshrl.u32 %v2208, 7
        %v2210 = vsub.s32 %v2207, %v2209
        %v2211 = vrot.slane %v2195, %v2210
        %v2213 = vunpack.c.l.s4 1966171168
        %v2214 = vunpack.c.0.s8 %v2213
        %v2215 = vlaneseq
        %v2216 = vshrl.u32 %v2215, 7
        %v2217 = vsub.s32 %v2214, %v2216
        %v2218 = vrot.slane %v2196, %v2217
        %v2220 = vunpack.c.l.s4 1966171168
        %v2221 = vunpack.c.0.s8 %v2220
        %v2222 = vlaneseq
        %v2223 = vshrl.u32 %v2222, 7
        %v2224 = vsub.s32 %v2221, %v2223
        %v2225 = vrot.slane %v2197, %v2224
        %v2226 = vcombine.high %v2204, %v2204
        %v2227 = vcombine.high %v2211, %v2211
        %v2228 = vcombine.high %v2218, %v2218
        %v2229 = vcombine.high %v2225, %v2225
        %2238 = vst.msk [vmem:[%s218 + $0x7] sm:$0x1] %vm1726, %v2204
        %2239 = vst.msk [vmem:[%s218 + $0x27] sm:$0x1] %vm1726, %v2218
        %2240 = vst.msk [vmem:[%s218 + $0x47] sm:$0x1] %vm1726, %v2226
        %2241 = vst.msk [vmem:[%s218 + $0x67] sm:$0x1] %vm1726, %v2228
        %2242 = vst.msk [vmem:[%s218 + $0x87] sm:$0x1] %vm1726, %v2211
        %2243 = vst.msk [vmem:[%s218 + $0xa7] sm:$0x1] %vm1726, %v2225
        %2244 = vst.msk [vmem:[%s218 + $0xc7] sm:$0x1] %vm1726, %v2227
        %2245 = vst.msk [vmem:[%s218 + $0xe7] sm:$0x1] %vm1726, %v2229
        %v2246 = vld [vmem:[%s1333] sm:$0xff]
        %v2247 = vmul.f32 %v2246, 0.12903225
        %v2248 = vld [vmem:[%s1345] sm:$0xff]
        %v2249 = vmul.f32 %v2248, 0.87096775
        %v2250 = vadd.f32 %v2247, %v2249
        %v2251 = vmax.f32 %v2250, 0.0
        %v2252 = vmul.f32 %v2251, %v1666
        %v2254 = vcombine.high %v2252, %v2252
        %v2256 = vunpack.c.l.s4 1966171168
        %v2257 = vunpack.c.0.s8 %v2256
        %v2258 = vlaneseq
        %v2259 = vshrl.u32 %v2258, 7
        %v2260 = vsub.s32 %v2257, %v2259
        %v2261 = vrot.slane %v2252, %v2260
        %v2263 = vunpack.c.l.s4 1966171168
        %v2264 = vunpack.c.0.s8 %v2263
        %v2265 = vlaneseq
        %v2266 = vshrl.u32 %v2265, 7
        %v2267 = vsub.s32 %v2264, %v2266
        %v2268 = vrot.slane %v2254, %v2267
        %v2269 = vcombine.high %v2261, %v2261
        %v2270 = vcombine.high %v2268, %v2268
        %v2272 = vunpack.c.l.s4 1966171168
        %v2273 = vunpack.c.0.s8 %v2272
        %v2274 = vlaneseq
        %v2275 = vshrl.u32 %v2274, 7
        %v2276 = vsub.s32 %v2273, %v2275
        %v2277 = vrot.slane %v2261, %v2276
        %v2279 = vunpack.c.l.s4 1966171168
        %v2280 = vunpack.c.0.s8 %v2279
        %v2281 = vlaneseq
        %v2282 = vshrl.u32 %v2281, 7
        %v2283 = vsub.s32 %v2280, %v2282
        %v2284 = vrot.slane %v2268, %v2283
        %v2286 = vunpack.c.l.s4 1966171168
        %v2287 = vunpack.c.0.s8 %v2286
        %v2288 = vlaneseq
        %v2289 = vshrl.u32 %v2288, 7
        %v2290 = vsub.s32 %v2287, %v2289
        %v2291 = vrot.slane %v2269, %v2290
        %v2293 = vunpack.c.l.s4 1966171168
        %v2294 = vunpack.c.0.s8 %v2293
        %v2295 = vlaneseq
        %v2296 = vshrl.u32 %v2295, 7
        %v2297 = vsub.s32 %v2294, %v2296
        %v2298 = vrot.slane %v2270, %v2297
        %v2299 = vcombine.high %v2277, %v2277
        %v2300 = vcombine.high %v2284, %v2284
        %v2301 = vcombine.high %v2291, %v2291
        %v2302 = vcombine.high %v2298, %v2298
        %2311 = vst.msk [vmem:[%s218 + $0x8] sm:$0x1] %vm1726, %v2277
        %2312 = vst.msk [vmem:[%s218 + $0x28] sm:$0x1] %vm1726, %v2291
        %2313 = vst.msk [vmem:[%s218 + $0x48] sm:$0x1] %vm1726, %v2299
        %2314 = vst.msk [vmem:[%s218 + $0x68] sm:$0x1] %vm1726, %v2301
        %2315 = vst.msk [vmem:[%s218 + $0x88] sm:$0x1] %vm1726, %v2284
        %2316 = vst.msk [vmem:[%s218 + $0xa8] sm:$0x1] %vm1726, %v2298
        %2317 = vst.msk [vmem:[%s218 + $0xc8] sm:$0x1] %vm1726, %v2300
        %2318 = vst.msk [vmem:[%s218 + $0xe8] sm:$0x1] %vm1726, %v2302
        %v2319 = vld [vmem:[%s1345] sm:$0xff]
        %v2320 = vmul.f32 %v2319, 0.6451613
        %v2321 = vld [vmem:[%s1357] sm:$0xff]
        %v2322 = vmul.f32 %v2321, 0.3548387
        %v2323 = vadd.f32 %v2320, %v2322
        %v2324 = vmax.f32 %v2323, 0.0
        %v2325 = vmul.f32 %v2324, %v1666
        %v2327 = vcombine.high %v2325, %v2325
        %v2329 = vunpack.c.l.s4 1966171168
        %v2330 = vunpack.c.0.s8 %v2329
        %v2331 = vlaneseq
        %v2332 = vshrl.u32 %v2331, 7
        %v2333 = vsub.s32 %v2330, %v2332
        %v2334 = vrot.slane %v2325, %v2333
        %v2336 = vunpack.c.l.s4 1966171168
        %v2337 = vunpack.c.0.s8 %v2336
        %v2338 = vlaneseq
        %v2339 = vshrl.u32 %v2338, 7
        %v2340 = vsub.s32 %v2337, %v2339
        %v2341 = vrot.slane %v2327, %v2340
        %v2342 = vcombine.high %v2334, %v2334
        %v2343 = vcombine.high %v2341, %v2341
        %v2345 = vunpack.c.l.s4 1966171168
        %v2346 = vunpack.c.0.s8 %v2345
        %v2347 = vlaneseq
        %v2348 = vshrl.u32 %v2347, 7
        %v2349 = vsub.s32 %v2346, %v2348
        %v2350 = vrot.slane %v2334, %v2349
        %v2352 = vunpack.c.l.s4 1966171168
        %v2353 = vunpack.c.0.s8 %v2352
        %v2354 = vlaneseq
        %v2355 = vshrl.u32 %v2354, 7
        %v2356 = vsub.s32 %v2353, %v2355
        %v2357 = vrot.slane %v2341, %v2356
        %v2359 = vunpack.c.l.s4 1966171168
        %v2360 = vunpack.c.0.s8 %v2359
        %v2361 = vlaneseq
        %v2362 = vshrl.u32 %v2361, 7
        %v2363 = vsub.s32 %v2360, %v2362
        %v2364 = vrot.slane %v2342, %v2363
        %v2366 = vunpack.c.l.s4 1966171168
        %v2367 = vunpack.c.0.s8 %v2366
        %v2368 = vlaneseq
        %v2369 = vshrl.u32 %v2368, 7
        %v2370 = vsub.s32 %v2367, %v2369
        %v2371 = vrot.slane %v2343, %v2370
        %v2372 = vcombine.high %v2350, %v2350
        %v2373 = vcombine.high %v2357, %v2357
        %v2374 = vcombine.high %v2364, %v2364
        %v2375 = vcombine.high %v2371, %v2371
        %2384 = vst.msk [vmem:[%s218 + $0x9] sm:$0x1] %vm1726, %v2350
        %2385 = vst.msk [vmem:[%s218 + $0x29] sm:$0x1] %vm1726, %v2364
        %2386 = vst.msk [vmem:[%s218 + $0x49] sm:$0x1] %vm1726, %v2372
        %2387 = vst.msk [vmem:[%s218 + $0x69] sm:$0x1] %vm1726, %v2374
        %2388 = vst.msk [vmem:[%s218 + $0x89] sm:$0x1] %vm1726, %v2357
        %2389 = vst.msk [vmem:[%s218 + $0xa9] sm:$0x1] %vm1726, %v2371
        %2390 = vst.msk [vmem:[%s218 + $0xc9] sm:$0x1] %vm1726, %v2373
        %2391 = vst.msk [vmem:[%s218 + $0xe9] sm:$0x1] %vm1726, %v2375
        %v2392 = vld [vmem:[%s1345] sm:$0xff]
        %v2393 = vmul.f32 %v2392, 0.16129032
        %v2394 = vld [vmem:[%s1357] sm:$0xff]
        %v2395 = vmul.f32 %v2394, 0.83870965
        %v2396 = vadd.f32 %v2393, %v2395
        %v2397 = vmax.f32 %v2396, 0.0
        %v2398 = vmul.f32 %v2397, %v1666
        %v2400 = vcombine.high %v2398, %v2398
        %v2402 = vunpack.c.l.s4 1966171168
        %v2403 = vunpack.c.0.s8 %v2402
        %v2404 = vlaneseq
        %v2405 = vshrl.u32 %v2404, 7
        %v2406 = vsub.s32 %v2403, %v2405
        %v2407 = vrot.slane %v2398, %v2406
        %v2409 = vunpack.c.l.s4 1966171168
        %v2410 = vunpack.c.0.s8 %v2409
        %v2411 = vlaneseq
        %v2412 = vshrl.u32 %v2411, 7
        %v2413 = vsub.s32 %v2410, %v2412
        %v2414 = vrot.slane %v2400, %v2413
        %v2415 = vcombine.high %v2407, %v2407
        %v2416 = vcombine.high %v2414, %v2414
        %v2418 = vunpack.c.l.s4 1966171168
        %v2419 = vunpack.c.0.s8 %v2418
        %v2420 = vlaneseq
        %v2421 = vshrl.u32 %v2420, 7
        %v2422 = vsub.s32 %v2419, %v2421
        %v2423 = vrot.slane %v2407, %v2422
        %v2425 = vunpack.c.l.s4 1966171168
        %v2426 = vunpack.c.0.s8 %v2425
        %v2427 = vlaneseq
        %v2428 = vshrl.u32 %v2427, 7
        %v2429 = vsub.s32 %v2426, %v2428
        %v2430 = vrot.slane %v2414, %v2429
        %v2432 = vunpack.c.l.s4 1966171168
        %v2433 = vunpack.c.0.s8 %v2432
        %v2434 = vlaneseq
        %v2435 = vshrl.u32 %v2434, 7
        %v2436 = vsub.s32 %v2433, %v2435
        %v2437 = vrot.slane %v2415, %v2436
        %v2439 = vunpack.c.l.s4 1966171168
        %v2440 = vunpack.c.0.s8 %v2439
        %v2441 = vlaneseq
        %v2442 = vshrl.u32 %v2441, 7
        %v2443 = vsub.s32 %v2440, %v2442
        %v2444 = vrot.slane %v2416, %v2443
        %v2445 = vcombine.high %v2423, %v2423
        %v2446 = vcombine.high %v2430, %v2430
        %v2447 = vcombine.high %v2437, %v2437
        %v2448 = vcombine.high %v2444, %v2444
        %2457 = vst.msk [vmem:[%s218 + $0xa] sm:$0x1] %vm1726, %v2423
        %2458 = vst.msk [vmem:[%s218 + $0x2a] sm:$0x1] %vm1726, %v2437
        %2459 = vst.msk [vmem:[%s218 + $0x4a] sm:$0x1] %vm1726, %v2445
        %2460 = vst.msk [vmem:[%s218 + $0x6a] sm:$0x1] %vm1726, %v2447
        %2461 = vst.msk [vmem:[%s218 + $0x8a] sm:$0x1] %vm1726, %v2430
        %2462 = vst.msk [vmem:[%s218 + $0xaa] sm:$0x1] %vm1726, %v2444
        %2463 = vst.msk [vmem:[%s218 + $0xca] sm:$0x1] %vm1726, %v2446
        %2464 = vst.msk [vmem:[%s218 + $0xea] sm:$0x1] %vm1726, %v2448
        %v2465 = vld [vmem:[%s1357] sm:$0xff]
        %v2466 = vmul.f32 %v2465, 0.67741936
        %v2467 = vld [vmem:[%s1369] sm:$0xff]
        %v2468 = vmul.f32 %v2467, 0.32258064
        %v2469 = vadd.f32 %v2466, %v2468
        %v2470 = vmax.f32 %v2469, 0.0
        %v2471 = vmul.f32 %v2470, %v1666
        %v2473 = vcombine.high %v2471, %v2471
        %v2475 = vunpack.c.l.s4 1966171168
        %v2476 = vunpack.c.0.s8 %v2475
        %v2477 = vlaneseq
        %v2478 = vshrl.u32 %v2477, 7
        %v2479 = vsub.s32 %v2476, %v2478
        %v2480 = vrot.slane %v2471, %v2479
        %v2482 = vunpack.c.l.s4 1966171168
        %v2483 = vunpack.c.0.s8 %v2482
        %v2484 = vlaneseq
        %v2485 = vshrl.u32 %v2484, 7
        %v2486 = vsub.s32 %v2483, %v2485
        %v2487 = vrot.slane %v2473, %v2486
        %v2488 = vcombine.high %v2480, %v2480
        %v2489 = vcombine.high %v2487, %v2487
        %v2491 = vunpack.c.l.s4 1966171168
        %v2492 = vunpack.c.0.s8 %v2491
        %v2493 = vlaneseq
        %v2494 = vshrl.u32 %v2493, 7
        %v2495 = vsub.s32 %v2492, %v2494
        %v2496 = vrot.slane %v2480, %v2495
        %v2498 = vunpack.c.l.s4 1966171168
        %v2499 = vunpack.c.0.s8 %v2498
        %v2500 = vlaneseq
        %v2501 = vshrl.u32 %v2500, 7
        %v2502 = vsub.s32 %v2499, %v2501
        %v2503 = vrot.slane %v2487, %v2502
        %v2505 = vunpack.c.l.s4 1966171168
        %v2506 = vunpack.c.0.s8 %v2505
        %v2507 = vlaneseq
        %v2508 = vshrl.u32 %v2507, 7
        %v2509 = vsub.s32 %v2506, %v2508
        %v2510 = vrot.slane %v2488, %v2509
        %v2512 = vunpack.c.l.s4 1966171168
        %v2513 = vunpack.c.0.s8 %v2512
        %v2514 = vlaneseq
        %v2515 = vshrl.u32 %v2514, 7
        %v2516 = vsub.s32 %v2513, %v2515
        %v2517 = vrot.slane %v2489, %v2516
        %v2518 = vcombine.high %v2496, %v2496
        %v2519 = vcombine.high %v2503, %v2503
        %v2520 = vcombine.high %v2510, %v2510
        %v2521 = vcombine.high %v2517, %v2517
        %2530 = vst.msk [vmem:[%s218 + $0xb] sm:$0x1] %vm1726, %v2496
        %2531 = vst.msk [vmem:[%s218 + $0x2b] sm:$0x1] %vm1726, %v2510
        %2532 = vst.msk [vmem:[%s218 + $0x4b] sm:$0x1] %vm1726, %v2518
        %2533 = vst.msk [vmem:[%s218 + $0x6b] sm:$0x1] %vm1726, %v2520
        %2534 = vst.msk [vmem:[%s218 + $0x8b] sm:$0x1] %vm1726, %v2503
        %2535 = vst.msk [vmem:[%s218 + $0xab] sm:$0x1] %vm1726, %v2517
        %2536 = vst.msk [vmem:[%s218 + $0xcb] sm:$0x1] %vm1726, %v2519
        %2537 = vst.msk [vmem:[%s218 + $0xeb] sm:$0x1] %vm1726, %v2521
        %v2538 = vld [vmem:[%s1357] sm:$0xff]
        %v2539 = vmul.f32 %v2538, 0.19354838
        %v2540 = vld [vmem:[%s1369] sm:$0xff]
        %v2541 = vmul.f32 %v2540, 0.8064516
        %v2542 = vadd.f32 %v2539, %v2541
        %v2543 = vmax.f32 %v2542, 0.0
        %v2544 = vmul.f32 %v2543, %v1666
        %v2546 = vcombine.high %v2544, %v2544
        %v2548 = vunpack.c.l.s4 1966171168
        %v2549 = vunpack.c.0.s8 %v2548
        %v2550 = vlaneseq
        %v2551 = vshrl.u32 %v2550, 7
        %v2552 = vsub.s32 %v2549, %v2551
        %v2553 = vrot.slane %v2544, %v2552
        %v2555 = vunpack.c.l.s4 1966171168
        %v2556 = vunpack.c.0.s8 %v2555
        %v2557 = vlaneseq
        %v2558 = vshrl.u32 %v2557, 7
        %v2559 = vsub.s32 %v2556, %v2558
        %v2560 = vrot.slane %v2546, %v2559
        %v2561 = vcombine.high %v2553, %v2553
        %v2562 = vcombine.high %v2560, %v2560
        %v2564 = vunpack.c.l.s4 1966171168
        %v2565 = vunpack.c.0.s8 %v2564
        %v2566 = vlaneseq
        %v2567 = vshrl.u32 %v2566, 7
        %v2568 = vsub.s32 %v2565, %v2567
        %v2569 = vrot.slane %v2553, %v2568
        %v2571 = vunpack.c.l.s4 1966171168
        %v2572 = vunpack.c.0.s8 %v2571
        %v2573 = vlaneseq
        %v2574 = vshrl.u32 %v2573, 7
        %v2575 = vsub.s32 %v2572, %v2574
        %v2576 = vrot.slane %v2560, %v2575
        %v2578 = vunpack.c.l.s4 1966171168
        %v2579 = vunpack.c.0.s8 %v2578
        %v2580 = vlaneseq
        %v2581 = vshrl.u32 %v2580, 7
        %v2582 = vsub.s32 %v2579, %v2581
        %v2583 = vrot.slane %v2561, %v2582
        %v2585 = vunpack.c.l.s4 1966171168
        %v2586 = vunpack.c.0.s8 %v2585
        %v2587 = vlaneseq
        %v2588 = vshrl.u32 %v2587, 7
        %v2589 = vsub.s32 %v2586, %v2588
        %v2590 = vrot.slane %v2562, %v2589
        %v2591 = vcombine.high %v2569, %v2569
        %v2592 = vcombine.high %v2576, %v2576
        %v2593 = vcombine.high %v2583, %v2583
        %v2594 = vcombine.high %v2590, %v2590
        %2603 = vst.msk [vmem:[%s218 + $0xc] sm:$0x1] %vm1726, %v2569
        %2604 = vst.msk [vmem:[%s218 + $0x2c] sm:$0x1] %vm1726, %v2583
        %2605 = vst.msk [vmem:[%s218 + $0x4c] sm:$0x1] %vm1726, %v2591
        %2606 = vst.msk [vmem:[%s218 + $0x6c] sm:$0x1] %vm1726, %v2593
        %2607 = vst.msk [vmem:[%s218 + $0x8c] sm:$0x1] %vm1726, %v2576
        %2608 = vst.msk [vmem:[%s218 + $0xac] sm:$0x1] %vm1726, %v2590
        %2609 = vst.msk [vmem:[%s218 + $0xcc] sm:$0x1] %vm1726, %v2592
        %2610 = vst.msk [vmem:[%s218 + $0xec] sm:$0x1] %vm1726, %v2594
        %v2611 = vld [vmem:[%s1369] sm:$0xff]
        %v2612 = vmul.f32 %v2611, 0.7096774
        %v2613 = vld [vmem:[%s1381] sm:$0xff]
        %v2614 = vmul.f32 %v2613, 0.29032257
        %v2615 = vadd.f32 %v2612, %v2614
        %v2616 = vmax.f32 %v2615, 0.0
        %v2617 = vmul.f32 %v2616, %v1666
        %v2619 = vcombine.high %v2617, %v2617
        %v2621 = vunpack.c.l.s4 1966171168
        %v2622 = vunpack.c.0.s8 %v2621
        %v2623 = vlaneseq
        %v2624 = vshrl.u32 %v2623, 7
        %v2625 = vsub.s32 %v2622, %v2624
        %v2626 = vrot.slane %v2617, %v2625
        %v2628 = vunpack.c.l.s4 1966171168
        %v2629 = vunpack.c.0.s8 %v2628
        %v2630 = vlaneseq
        %v2631 = vshrl.u32 %v2630, 7
        %v2632 = vsub.s32 %v2629, %v2631
        %v2633 = vrot.slane %v2619, %v2632
        %v2634 = vcombine.high %v2626, %v2626
        %v2635 = vcombine.high %v2633, %v2633
        %v2637 = vunpack.c.l.s4 1966171168
        %v2638 = vunpack.c.0.s8 %v2637
        %v2639 = vlaneseq
        %v2640 = vshrl.u32 %v2639, 7
        %v2641 = vsub.s32 %v2638, %v2640
        %v2642 = vrot.slane %v2626, %v2641
        %v2644 = vunpack.c.l.s4 1966171168
        %v2645 = vunpack.c.0.s8 %v2644
        %v2646 = vlaneseq
        %v2647 = vshrl.u32 %v2646, 7
        %v2648 = vsub.s32 %v2645, %v2647
        %v2649 = vrot.slane %v2633, %v2648
        %v2651 = vunpack.c.l.s4 1966171168
        %v2652 = vunpack.c.0.s8 %v2651
        %v2653 = vlaneseq
        %v2654 = vshrl.u32 %v2653, 7
        %v2655 = vsub.s32 %v2652, %v2654
        %v2656 = vrot.slane %v2634, %v2655
        %v2658 = vunpack.c.l.s4 1966171168
        %v2659 = vunpack.c.0.s8 %v2658
        %v2660 = vlaneseq
        %v2661 = vshrl.u32 %v2660, 7
        %v2662 = vsub.s32 %v2659, %v2661
        %v2663 = vrot.slane %v2635, %v2662
        %v2664 = vcombine.high %v2642, %v2642
        %v2665 = vcombine.high %v2649, %v2649
        %v2666 = vcombine.high %v2656, %v2656
        %v2667 = vcombine.high %v2663, %v2663
        %2676 = vst.msk [vmem:[%s218 + $0xd] sm:$0x1] %vm1726, %v2642
        %2677 = vst.msk [vmem:[%s218 + $0x2d] sm:$0x1] %vm1726, %v2656
        %2678 = vst.msk [vmem:[%s218 + $0x4d] sm:$0x1] %vm1726, %v2664
        %2679 = vst.msk [vmem:[%s218 + $0x6d] sm:$0x1] %vm1726, %v2666
        %2680 = vst.msk [vmem:[%s218 + $0x8d] sm:$0x1] %vm1726, %v2649
        %2681 = vst.msk [vmem:[%s218 + $0xad] sm:$0x1] %vm1726, %v2663
        %2682 = vst.msk [vmem:[%s218 + $0xcd] sm:$0x1] %vm1726, %v2665
        %2683 = vst.msk [vmem:[%s218 + $0xed] sm:$0x1] %vm1726, %v2667
        %v2684 = vld [vmem:[%s1369] sm:$0xff]
        %v2685 = vmul.f32 %v2684, 0.22580644
        %v2686 = vld [vmem:[%s1381] sm:$0xff]
        %v2687 = vmul.f32 %v2686, 0.7741935
        %v2688 = vadd.f32 %v2685, %v2687
        %v2689 = vmax.f32 %v2688, 0.0
        %v2690 = vmul.f32 %v2689, %v1666
        %v2692 = vcombine.high %v2690, %v2690
        %v2694 = vunpack.c.l.s4 1966171168
        %v2695 = vunpack.c.0.s8 %v2694
        %v2696 = vlaneseq
        %v2697 = vshrl.u32 %v2696, 7
        %v2698 = vsub.s32 %v2695, %v2697
        %v2699 = vrot.slane %v2690, %v2698
        %v2701 = vunpack.c.l.s4 1966171168
        %v2702 = vunpack.c.0.s8 %v2701
        %v2703 = vlaneseq
        %v2704 = vshrl.u32 %v2703, 7
        %v2705 = vsub.s32 %v2702, %v2704
        %v2706 = vrot.slane %v2692, %v2705
        %v2707 = vcombine.high %v2699, %v2699
        %v2708 = vcombine.high %v2706, %v2706
        %v2710 = vunpack.c.l.s4 1966171168
        %v2711 = vunpack.c.0.s8 %v2710
        %v2712 = vlaneseq
        %v2713 = vshrl.u32 %v2712, 7
        %v2714 = vsub.s32 %v2711, %v2713
        %v2715 = vrot.slane %v2699, %v2714
        %v2717 = vunpack.c.l.s4 1966171168
        %v2718 = vunpack.c.0.s8 %v2717
        %v2719 = vlaneseq
        %v2720 = vshrl.u32 %v2719, 7
        %v2721 = vsub.s32 %v2718, %v2720
        %v2722 = vrot.slane %v2706, %v2721
        %v2724 = vunpack.c.l.s4 1966171168
        %v2725 = vunpack.c.0.s8 %v2724
        %v2726 = vlaneseq
        %v2727 = vshrl.u32 %v2726, 7
        %v2728 = vsub.s32 %v2725, %v2727
        %v2729 = vrot.slane %v2707, %v2728
        %v2731 = vunpack.c.l.s4 1966171168
        %v2732 = vunpack.c.0.s8 %v2731
        %v2733 = vlaneseq
        %v2734 = vshrl.u32 %v2733, 7
        %v2735 = vsub.s32 %v2732, %v2734
        %v2736 = vrot.slane %v2708, %v2735
        %v2737 = vcombine.high %v2715, %v2715
        %v2738 = vcombine.high %v2722, %v2722
        %v2739 = vcombine.high %v2729, %v2729
        %v2740 = vcombine.high %v2736, %v2736
        %2749 = vst.msk [vmem:[%s218 + $0xe] sm:$0x1] %vm1726, %v2715
        %2750 = vst.msk [vmem:[%s218 + $0x2e] sm:$0x1] %vm1726, %v2729
        %2751 = vst.msk [vmem:[%s218 + $0x4e] sm:$0x1] %vm1726, %v2737
        %2752 = vst.msk [vmem:[%s218 + $0x6e] sm:$0x1] %vm1726, %v2739
        %2753 = vst.msk [vmem:[%s218 + $0x8e] sm:$0x1] %vm1726, %v2722
        %2754 = vst.msk [vmem:[%s218 + $0xae] sm:$0x1] %vm1726, %v2736
        %2755 = vst.msk [vmem:[%s218 + $0xce] sm:$0x1] %vm1726, %v2738
        %2756 = vst.msk [vmem:[%s218 + $0xee] sm:$0x1] %vm1726, %v2740
        %v2757 = vld [vmem:[%s1381] sm:$0xff]
        %v2758 = vmul.f32 %v2757, 0.7419355
        %v2759 = vld [vmem:[%s1393] sm:$0xff]
        %v2760 = vmul.f32 %v2759, 0.2580645
        %v2761 = vadd.f32 %v2758, %v2760
        %v2762 = vmax.f32 %v2761, 0.0
        %v2763 = vmul.f32 %v2762, %v1666
        %v2765 = vcombine.high %v2763, %v2763
        %v2767 = vunpack.c.l.s4 1966171168
        %v2768 = vunpack.c.0.s8 %v2767
        %v2769 = vlaneseq
        %v2770 = vshrl.u32 %v2769, 7
        %v2771 = vsub.s32 %v2768, %v2770
        %v2772 = vrot.slane %v2763, %v2771
        %v2774 = vunpack.c.l.s4 1966171168
        %v2775 = vunpack.c.0.s8 %v2774
        %v2776 = vlaneseq
        %v2777 = vshrl.u32 %v2776, 7
        %v2778 = vsub.s32 %v2775, %v2777
        %v2779 = vrot.slane %v2765, %v2778
        %v2780 = vcombine.high %v2772, %v2772
        %v2781 = vcombine.high %v2779, %v2779
        %v2783 = vunpack.c.l.s4 1966171168
        %v2784 = vunpack.c.0.s8 %v2783
        %v2785 = vlaneseq
        %v2786 = vshrl.u32 %v2785, 7
        %v2787 = vsub.s32 %v2784, %v2786
        %v2788 = vrot.slane %v2772, %v2787
        %v2790 = vunpack.c.l.s4 1966171168
        %v2791 = vunpack.c.0.s8 %v2790
        %v2792 = vlaneseq
        %v2793 = vshrl.u32 %v2792, 7
        %v2794 = vsub.s32 %v2791, %v2793
        %v2795 = vrot.slane %v2779, %v2794
        %v2797 = vunpack.c.l.s4 1966171168
        %v2798 = vunpack.c.0.s8 %v2797
        %v2799 = vlaneseq
        %v2800 = vshrl.u32 %v2799, 7
        %v2801 = vsub.s32 %v2798, %v2800
        %v2802 = vrot.slane %v2780, %v2801
        %v2804 = vunpack.c.l.s4 1966171168
        %v2805 = vunpack.c.0.s8 %v2804
        %v2806 = vlaneseq
        %v2807 = vshrl.u32 %v2806, 7
        %v2808 = vsub.s32 %v2805, %v2807
        %v2809 = vrot.slane %v2781, %v2808
        %v2810 = vcombine.high %v2788, %v2788
        %v2811 = vcombine.high %v2795, %v2795
        %v2812 = vcombine.high %v2802, %v2802
        %v2813 = vcombine.high %v2809, %v2809
        %2822 = vst.msk [vmem:[%s218 + $0xf] sm:$0x1] %vm1726, %v2788
        %2823 = vst.msk [vmem:[%s218 + $0x2f] sm:$0x1] %vm1726, %v2802
        %2824 = vst.msk [vmem:[%s218 + $0x4f] sm:$0x1] %vm1726, %v2810
        %2825 = vst.msk [vmem:[%s218 + $0x6f] sm:$0x1] %vm1726, %v2812
        %2826 = vst.msk [vmem:[%s218 + $0x8f] sm:$0x1] %vm1726, %v2795
        %2827 = vst.msk [vmem:[%s218 + $0xaf] sm:$0x1] %vm1726, %v2809
        %2828 = vst.msk [vmem:[%s218 + $0xcf] sm:$0x1] %vm1726, %v2811
        %2829 = vst.msk [vmem:[%s218 + $0xef] sm:$0x1] %vm1726, %v2813
        %v2830 = vld [vmem:[%s1381] sm:$0xff]
        %v2831 = vmul.f32 %v2830, 0.2580645
        %v2832 = vld [vmem:[%s1393] sm:$0xff]
        %v2833 = vmul.f32 %v2832, 0.7419355
        %v2834 = vadd.f32 %v2831, %v2833
        %v2835 = vmax.f32 %v2834, 0.0
        %v2836 = vmul.f32 %v2835, %v1666
        %v2838 = vcombine.high %v2836, %v2836
        %v2840 = vunpack.c.l.s4 1966171168
        %v2841 = vunpack.c.0.s8 %v2840
        %v2842 = vlaneseq
        %v2843 = vshrl.u32 %v2842, 7
        %v2844 = vsub.s32 %v2841, %v2843
        %v2845 = vrot.slane %v2836, %v2844
        %v2847 = vunpack.c.l.s4 1966171168
        %v2848 = vunpack.c.0.s8 %v2847
        %v2849 = vlaneseq
        %v2850 = vshrl.u32 %v2849, 7
        %v2851 = vsub.s32 %v2848, %v2850
        %v2852 = vrot.slane %v2838, %v2851
        %v2853 = vcombine.high %v2845, %v2845
        %v2854 = vcombine.high %v2852, %v2852
        %v2856 = vunpack.c.l.s4 1966171168
        %v2857 = vunpack.c.0.s8 %v2856
        %v2858 = vlaneseq
        %v2859 = vshrl.u32 %v2858, 7
        %v2860 = vsub.s32 %v2857, %v2859
        %v2861 = vrot.slane %v2845, %v2860
        %v2863 = vunpack.c.l.s4 1966171168
        %v2864 = vunpack.c.0.s8 %v2863
        %v2865 = vlaneseq
        %v2866 = vshrl.u32 %v2865, 7
        %v2867 = vsub.s32 %v2864, %v2866
        %v2868 = vrot.slane %v2852, %v2867
        %v2870 = vunpack.c.l.s4 1966171168
        %v2871 = vunpack.c.0.s8 %v2870
        %v2872 = vlaneseq
        %v2873 = vshrl.u32 %v2872, 7
        %v2874 = vsub.s32 %v2871, %v2873
        %v2875 = vrot.slane %v2853, %v2874
        %v2877 = vunpack.c.l.s4 1966171168
        %v2878 = vunpack.c.0.s8 %v2877
        %v2879 = vlaneseq
        %v2880 = vshrl.u32 %v2879, 7
        %v2881 = vsub.s32 %v2878, %v2880
        %v2882 = vrot.slane %v2854, %v2881
        %v2883 = vcombine.high %v2861, %v2861
        %v2884 = vcombine.high %v2868, %v2868
        %v2885 = vcombine.high %v2875, %v2875
        %v2886 = vcombine.high %v2882, %v2882
        %2895 = vst.msk [vmem:[%s218 + $0x10] sm:$0x1] %vm1726, %v2861
        %2896 = vst.msk [vmem:[%s218 + $0x30] sm:$0x1] %vm1726, %v2875
        %2897 = vst.msk [vmem:[%s218 + $0x50] sm:$0x1] %vm1726, %v2883
        %2898 = vst.msk [vmem:[%s218 + $0x70] sm:$0x1] %vm1726, %v2885
        %2899 = vst.msk [vmem:[%s218 + $0x90] sm:$0x1] %vm1726, %v2868
        %2900 = vst.msk [vmem:[%s218 + $0xb0] sm:$0x1] %vm1726, %v2882
        %2901 = vst.msk [vmem:[%s218 + $0xd0] sm:$0x1] %vm1726, %v2884
        %2902 = vst.msk [vmem:[%s218 + $0xf0] sm:$0x1] %vm1726, %v2886
        %v2903 = vld [vmem:[%s1393] sm:$0xff]
        %v2904 = vmul.f32 %v2903, 0.7741935
        %v2905 = vld [vmem:[%s1405] sm:$0xff]
        %v2906 = vmul.f32 %v2905, 0.22580644
        %v2907 = vadd.f32 %v2904, %v2906
        %v2908 = vmax.f32 %v2907, 0.0
        %v2909 = vmul.f32 %v2908, %v1666
        %v2911 = vcombine.high %v2909, %v2909
        %v2913 = vunpack.c.l.s4 1966171168
        %v2914 = vunpack.c.0.s8 %v2913
        %v2915 = vlaneseq
        %v2916 = vshrl.u32 %v2915, 7
        %v2917 = vsub.s32 %v2914, %v2916
        %v2918 = vrot.slane %v2909, %v2917
        %v2920 = vunpack.c.l.s4 1966171168
        %v2921 = vunpack.c.0.s8 %v2920
        %v2922 = vlaneseq
        %v2923 = vshrl.u32 %v2922, 7
        %v2924 = vsub.s32 %v2921, %v2923
        %v2925 = vrot.slane %v2911, %v2924
        %v2926 = vcombine.high %v2918, %v2918
        %v2927 = vcombine.high %v2925, %v2925
        %v2929 = vunpack.c.l.s4 1966171168
        %v2930 = vunpack.c.0.s8 %v2929
        %v2931 = vlaneseq
        %v2932 = vshrl.u32 %v2931, 7
        %v2933 = vsub.s32 %v2930, %v2932
        %v2934 = vrot.slane %v2918, %v2933
        %v2936 = vunpack.c.l.s4 1966171168
        %v2937 = vunpack.c.0.s8 %v2936
        %v2938 = vlaneseq
        %v2939 = vshrl.u32 %v2938, 7
        %v2940 = vsub.s32 %v2937, %v2939
        %v2941 = vrot.slane %v2925, %v2940
        %v2943 = vunpack.c.l.s4 1966171168
        %v2944 = vunpack.c.0.s8 %v2943
        %v2945 = vlaneseq
        %v2946 = vshrl.u32 %v2945, 7
        %v2947 = vsub.s32 %v2944, %v2946
        %v2948 = vrot.slane %v2926, %v2947
        %v2950 = vunpack.c.l.s4 1966171168
        %v2951 = vunpack.c.0.s8 %v2950
        %v2952 = vlaneseq
        %v2953 = vshrl.u32 %v2952, 7
        %v2954 = vsub.s32 %v2951, %v2953
        %v2955 = vrot.slane %v2927, %v2954
        %v2956 = vcombine.high %v2934, %v2934
        %v2957 = vcombine.high %v2941, %v2941
        %v2958 = vcombine.high %v2948, %v2948
        %v2959 = vcombine.high %v2955, %v2955
        %2968 = vst.msk [vmem:[%s218 + $0x11] sm:$0x1] %vm1726, %v2934
        %2969 = vst.msk [vmem:[%s218 + $0x31] sm:$0x1] %vm1726, %v2948
        %2970 = vst.msk [vmem:[%s218 + $0x51] sm:$0x1] %vm1726, %v2956
        %2971 = vst.msk [vmem:[%s218 + $0x71] sm:$0x1] %vm1726, %v2958
        %2972 = vst.msk [vmem:[%s218 + $0x91] sm:$0x1] %vm1726, %v2941
        %2973 = vst.msk [vmem:[%s218 + $0xb1] sm:$0x1] %vm1726, %v2955
        %2974 = vst.msk [vmem:[%s218 + $0xd1] sm:$0x1] %vm1726, %v2957
        %2975 = vst.msk [vmem:[%s218 + $0xf1] sm:$0x1] %vm1726, %v2959
        %v2976 = vld [vmem:[%s1393] sm:$0xff]
        %v2977 = vmul.f32 %v2976, 0.29032257
        %v2978 = vld [vmem:[%s1405] sm:$0xff]
        %v2979 = vmul.f32 %v2978, 0.7096774
        %v2980 = vadd.f32 %v2977, %v2979
        %v2981 = vmax.f32 %v2980, 0.0
        %v2982 = vmul.f32 %v2981, %v1666
        %v2984 = vcombine.high %v2982, %v2982
        %v2986 = vunpack.c.l.s4 1966171168
        %v2987 = vunpack.c.0.s8 %v2986
        %v2988 = vlaneseq
        %v2989 = vshrl.u32 %v2988, 7
        %v2990 = vsub.s32 %v2987, %v2989
        %v2991 = vrot.slane %v2982, %v2990
        %v2993 = vunpack.c.l.s4 1966171168
        %v2994 = vunpack.c.0.s8 %v2993
        %v2995 = vlaneseq
        %v2996 = vshrl.u32 %v2995, 7
        %v2997 = vsub.s32 %v2994, %v2996
        %v2998 = vrot.slane %v2984, %v2997
        %v2999 = vcombine.high %v2991, %v2991
        %v3000 = vcombine.high %v2998, %v2998
        %v3002 = vunpack.c.l.s4 1966171168
        %v3003 = vunpack.c.0.s8 %v3002
        %v3004 = vlaneseq
        %v3005 = vshrl.u32 %v3004, 7
        %v3006 = vsub.s32 %v3003, %v3005
        %v3007 = vrot.slane %v2991, %v3006
        %v3009 = vunpack.c.l.s4 1966171168
        %v3010 = vunpack.c.0.s8 %v3009
        %v3011 = vlaneseq
        %v3012 = vshrl.u32 %v3011, 7
        %v3013 = vsub.s32 %v3010, %v3012
        %v3014 = vrot.slane %v2998, %v3013
        %v3016 = vunpack.c.l.s4 1966171168
        %v3017 = vunpack.c.0.s8 %v3016
        %v3018 = vlaneseq
        %v3019 = vshrl.u32 %v3018, 7
        %v3020 = vsub.s32 %v3017, %v3019
        %v3021 = vrot.slane %v2999, %v3020
        %v3023 = vunpack.c.l.s4 1966171168
        %v3024 = vunpack.c.0.s8 %v3023
        %v3025 = vlaneseq
        %v3026 = vshrl.u32 %v3025, 7
        %v3027 = vsub.s32 %v3024, %v3026
        %v3028 = vrot.slane %v3000, %v3027
        %v3029 = vcombine.high %v3007, %v3007
        %v3030 = vcombine.high %v3014, %v3014
        %v3031 = vcombine.high %v3021, %v3021
        %v3032 = vcombine.high %v3028, %v3028
        %3041 = vst.msk [vmem:[%s218 + $0x12] sm:$0x1] %vm1726, %v3007
        %3042 = vst.msk [vmem:[%s218 + $0x32] sm:$0x1] %vm1726, %v3021
        %3043 = vst.msk [vmem:[%s218 + $0x52] sm:$0x1] %vm1726, %v3029
        %3044 = vst.msk [vmem:[%s218 + $0x72] sm:$0x1] %vm1726, %v3031
        %3045 = vst.msk [vmem:[%s218 + $0x92] sm:$0x1] %vm1726, %v3014
        %3046 = vst.msk [vmem:[%s218 + $0xb2] sm:$0x1] %vm1726, %v3028
        %3047 = vst.msk [vmem:[%s218 + $0xd2] sm:$0x1] %vm1726, %v3030
        %3048 = vst.msk [vmem:[%s218 + $0xf2] sm:$0x1] %vm1726, %v3032
        %v3049 = vld [vmem:[%s1405] sm:$0xff]
        %v3050 = vmul.f32 %v3049, 0.8064516
        %v3051 = vld [vmem:[%s1417] sm:$0xff]
        %v3052 = vmul.f32 %v3051, 0.19354838
        %v3053 = vadd.f32 %v3050, %v3052
        %v3054 = vmax.f32 %v3053, 0.0
        %v3055 = vmul.f32 %v3054, %v1666
        %v3057 = vcombine.high %v3055, %v3055
        %v3059 = vunpack.c.l.s4 1966171168
        %v3060 = vunpack.c.0.s8 %v3059
        %v3061 = vlaneseq
        %v3062 = vshrl.u32 %v3061, 7
        %v3063 = vsub.s32 %v3060, %v3062
        %v3064 = vrot.slane %v3055, %v3063
        %v3066 = vunpack.c.l.s4 1966171168
        %v3067 = vunpack.c.0.s8 %v3066
        %v3068 = vlaneseq
        %v3069 = vshrl.u32 %v3068, 7
        %v3070 = vsub.s32 %v3067, %v3069
        %v3071 = vrot.slane %v3057, %v3070
        %v3072 = vcombine.high %v3064, %v3064
        %v3073 = vcombine.high %v3071, %v3071
        %v3075 = vunpack.c.l.s4 1966171168
        %v3076 = vunpack.c.0.s8 %v3075
        %v3077 = vlaneseq
        %v3078 = vshrl.u32 %v3077, 7
        %v3079 = vsub.s32 %v3076, %v3078
        %v3080 = vrot.slane %v3064, %v3079
        %v3082 = vunpack.c.l.s4 1966171168
        %v3083 = vunpack.c.0.s8 %v3082
        %v3084 = vlaneseq
        %v3085 = vshrl.u32 %v3084, 7
        %v3086 = vsub.s32 %v3083, %v3085
        %v3087 = vrot.slane %v3071, %v3086
        %v3089 = vunpack.c.l.s4 1966171168
        %v3090 = vunpack.c.0.s8 %v3089
        %v3091 = vlaneseq
        %v3092 = vshrl.u32 %v3091, 7
        %v3093 = vsub.s32 %v3090, %v3092
        %v3094 = vrot.slane %v3072, %v3093
        %v3096 = vunpack.c.l.s4 1966171168
        %v3097 = vunpack.c.0.s8 %v3096
        %v3098 = vlaneseq
        %v3099 = vshrl.u32 %v3098, 7
        %v3100 = vsub.s32 %v3097, %v3099
        %v3101 = vrot.slane %v3073, %v3100
        %v3102 = vcombine.high %v3080, %v3080
        %v3103 = vcombine.high %v3087, %v3087
        %v3104 = vcombine.high %v3094, %v3094
        %v3105 = vcombine.high %v3101, %v3101
        %3114 = vst.msk [vmem:[%s218 + $0x13] sm:$0x1] %vm1726, %v3080
        %3115 = vst.msk [vmem:[%s218 + $0x33] sm:$0x1] %vm1726, %v3094
        %3116 = vst.msk [vmem:[%s218 + $0x53] sm:$0x1] %vm1726, %v3102
        %3117 = vst.msk [vmem:[%s218 + $0x73] sm:$0x1] %vm1726, %v3104
        %3118 = vst.msk [vmem:[%s218 + $0x93] sm:$0x1] %vm1726, %v3087
        %3119 = vst.msk [vmem:[%s218 + $0xb3] sm:$0x1] %vm1726, %v3101
        %3120 = vst.msk [vmem:[%s218 + $0xd3] sm:$0x1] %vm1726, %v3103
        %3121 = vst.msk [vmem:[%s218 + $0xf3] sm:$0x1] %vm1726, %v3105
        %v3122 = vld [vmem:[%s1405] sm:$0xff]
        %v3123 = vmul.f32 %v3122, 0.32258064
        %v3124 = vld [vmem:[%s1417] sm:$0xff]
        %v3125 = vmul.f32 %v3124, 0.67741936
        %v3126 = vadd.f32 %v3123, %v3125
        %v3127 = vmax.f32 %v3126, 0.0
        %v3128 = vmul.f32 %v3127, %v1666
        %v3130 = vcombine.high %v3128, %v3128
        %v3132 = vunpack.c.l.s4 1966171168
        %v3133 = vunpack.c.0.s8 %v3132
        %v3134 = vlaneseq
        %v3135 = vshrl.u32 %v3134, 7
        %v3136 = vsub.s32 %v3133, %v3135
        %v3137 = vrot.slane %v3128, %v3136
        %v3139 = vunpack.c.l.s4 1966171168
        %v3140 = vunpack.c.0.s8 %v3139
        %v3141 = vlaneseq
        %v3142 = vshrl.u32 %v3141, 7
        %v3143 = vsub.s32 %v3140, %v3142
        %v3144 = vrot.slane %v3130, %v3143
        %v3145 = vcombine.high %v3137, %v3137
        %v3146 = vcombine.high %v3144, %v3144
        %v3148 = vunpack.c.l.s4 1966171168
        %v3149 = vunpack.c.0.s8 %v3148
        %v3150 = vlaneseq
        %v3151 = vshrl.u32 %v3150, 7
        %v3152 = vsub.s32 %v3149, %v3151
        %v3153 = vrot.slane %v3137, %v3152
        %v3155 = vunpack.c.l.s4 1966171168
        %v3156 = vunpack.c.0.s8 %v3155
        %v3157 = vlaneseq
        %v3158 = vshrl.u32 %v3157, 7
        %v3159 = vsub.s32 %v3156, %v3158
        %v3160 = vrot.slane %v3144, %v3159
        %v3162 = vunpack.c.l.s4 1966171168
        %v3163 = vunpack.c.0.s8 %v3162
        %v3164 = vlaneseq
        %v3165 = vshrl.u32 %v3164, 7
        %v3166 = vsub.s32 %v3163, %v3165
        %v3167 = vrot.slane %v3145, %v3166
        %v3169 = vunpack.c.l.s4 1966171168
        %v3170 = vunpack.c.0.s8 %v3169
        %v3171 = vlaneseq
        %v3172 = vshrl.u32 %v3171, 7
        %v3173 = vsub.s32 %v3170, %v3172
        %v3174 = vrot.slane %v3146, %v3173
        %v3175 = vcombine.high %v3153, %v3153
        %v3176 = vcombine.high %v3160, %v3160
        %v3177 = vcombine.high %v3167, %v3167
        %v3178 = vcombine.high %v3174, %v3174
        %3187 = vst.msk [vmem:[%s218 + $0x14] sm:$0x1] %vm1726, %v3153
        %3188 = vst.msk [vmem:[%s218 + $0x34] sm:$0x1] %vm1726, %v3167
        %3189 = vst.msk [vmem:[%s218 + $0x54] sm:$0x1] %vm1726, %v3175
        %3190 = vst.msk [vmem:[%s218 + $0x74] sm:$0x1] %vm1726, %v3177
        %3191 = vst.msk [vmem:[%s218 + $0x94] sm:$0x1] %vm1726, %v3160
        %3192 = vst.msk [vmem:[%s218 + $0xb4] sm:$0x1] %vm1726, %v3174
        %3193 = vst.msk [vmem:[%s218 + $0xd4] sm:$0x1] %vm1726, %v3176
        %3194 = vst.msk [vmem:[%s218 + $0xf4] sm:$0x1] %vm1726, %v3178
        %v3195 = vld [vmem:[%s1417] sm:$0xff]
        %v3196 = vmul.f32 %v3195, 0.83870965
        %v3197 = vld [vmem:[%s1429] sm:$0xff]
        %v3198 = vmul.f32 %v3197, 0.16129032
        %v3199 = vadd.f32 %v3196, %v3198
        %v3200 = vmax.f32 %v3199, 0.0
        %v3201 = vmul.f32 %v3200, %v1666
        %v3203 = vcombine.high %v3201, %v3201
        %v3205 = vunpack.c.l.s4 1966171168
        %v3206 = vunpack.c.0.s8 %v3205
        %v3207 = vlaneseq
        %v3208 = vshrl.u32 %v3207, 7
        %v3209 = vsub.s32 %v3206, %v3208
        %v3210 = vrot.slane %v3201, %v3209
        %v3212 = vunpack.c.l.s4 1966171168
        %v3213 = vunpack.c.0.s8 %v3212
        %v3214 = vlaneseq
        %v3215 = vshrl.u32 %v3214, 7
        %v3216 = vsub.s32 %v3213, %v3215
        %v3217 = vrot.slane %v3203, %v3216
        %v3218 = vcombine.high %v3210, %v3210
        %v3219 = vcombine.high %v3217, %v3217
        %v3221 = vunpack.c.l.s4 1966171168
        %v3222 = vunpack.c.0.s8 %v3221
        %v3223 = vlaneseq
        %v3224 = vshrl.u32 %v3223, 7
        %v3225 = vsub.s32 %v3222, %v3224
        %v3226 = vrot.slane %v3210, %v3225
        %v3228 = vunpack.c.l.s4 1966171168
        %v3229 = vunpack.c.0.s8 %v3228
        %v3230 = vlaneseq
        %v3231 = vshrl.u32 %v3230, 7
        %v3232 = vsub.s32 %v3229, %v3231
        %v3233 = vrot.slane %v3217, %v3232
        %v3235 = vunpack.c.l.s4 1966171168
        %v3236 = vunpack.c.0.s8 %v3235
        %v3237 = vlaneseq
        %v3238 = vshrl.u32 %v3237, 7
        %v3239 = vsub.s32 %v3236, %v3238
        %v3240 = vrot.slane %v3218, %v3239
        %v3242 = vunpack.c.l.s4 1966171168
        %v3243 = vunpack.c.0.s8 %v3242
        %v3244 = vlaneseq
        %v3245 = vshrl.u32 %v3244, 7
        %v3246 = vsub.s32 %v3243, %v3245
        %v3247 = vrot.slane %v3219, %v3246
        %v3248 = vcombine.high %v3226, %v3226
        %v3249 = vcombine.high %v3233, %v3233
        %v3250 = vcombine.high %v3240, %v3240
        %v3251 = vcombine.high %v3247, %v3247
        %3260 = vst.msk [vmem:[%s218 + $0x15] sm:$0x1] %vm1726, %v3226
        %3261 = vst.msk [vmem:[%s218 + $0x35] sm:$0x1] %vm1726, %v3240
        %3262 = vst.msk [vmem:[%s218 + $0x55] sm:$0x1] %vm1726, %v3248
        %3263 = vst.msk [vmem:[%s218 + $0x75] sm:$0x1] %vm1726, %v3250
        %3264 = vst.msk [vmem:[%s218 + $0x95] sm:$0x1] %vm1726, %v3233
        %3265 = vst.msk [vmem:[%s218 + $0xb5] sm:$0x1] %vm1726, %v3247
        %3266 = vst.msk [vmem:[%s218 + $0xd5] sm:$0x1] %vm1726, %v3249
        %3267 = vst.msk [vmem:[%s218 + $0xf5] sm:$0x1] %vm1726, %v3251
        %v3268 = vld [vmem:[%s1417] sm:$0xff]
        %v3269 = vmul.f32 %v3268, 0.3548387
        %v3270 = vld [vmem:[%s1429] sm:$0xff]
        %v3271 = vmul.f32 %v3270, 0.6451613
        %v3272 = vadd.f32 %v3269, %v3271
        %v3273 = vmax.f32 %v3272, 0.0
        %v3274 = vmul.f32 %v3273, %v1666
        %v3276 = vcombine.high %v3274, %v3274
        %v3278 = vunpack.c.l.s4 1966171168
        %v3279 = vunpack.c.0.s8 %v3278
        %v3280 = vlaneseq
        %v3281 = vshrl.u32 %v3280, 7
        %v3282 = vsub.s32 %v3279, %v3281
        %v3283 = vrot.slane %v3274, %v3282
        %v3285 = vunpack.c.l.s4 1966171168
        %v3286 = vunpack.c.0.s8 %v3285
        %v3287 = vlaneseq
        %v3288 = vshrl.u32 %v3287, 7
        %v3289 = vsub.s32 %v3286, %v3288
        %v3290 = vrot.slane %v3276, %v3289
        %v3291 = vcombine.high %v3283, %v3283
        %v3292 = vcombine.high %v3290, %v3290
        %v3294 = vunpack.c.l.s4 1966171168
        %v3295 = vunpack.c.0.s8 %v3294
        %v3296 = vlaneseq
        %v3297 = vshrl.u32 %v3296, 7
        %v3298 = vsub.s32 %v3295, %v3297
        %v3299 = vrot.slane %v3283, %v3298
        %v3301 = vunpack.c.l.s4 1966171168
        %v3302 = vunpack.c.0.s8 %v3301
        %v3303 = vlaneseq
        %v3304 = vshrl.u32 %v3303, 7
        %v3305 = vsub.s32 %v3302, %v3304
        %v3306 = vrot.slane %v3290, %v3305
        %v3308 = vunpack.c.l.s4 1966171168
        %v3309 = vunpack.c.0.s8 %v3308
        %v3310 = vlaneseq
        %v3311 = vshrl.u32 %v3310, 7
        %v3312 = vsub.s32 %v3309, %v3311
        %v3313 = vrot.slane %v3291, %v3312
        %v3315 = vunpack.c.l.s4 1966171168
        %v3316 = vunpack.c.0.s8 %v3315
        %v3317 = vlaneseq
        %v3318 = vshrl.u32 %v3317, 7
        %v3319 = vsub.s32 %v3316, %v3318
        %v3320 = vrot.slane %v3292, %v3319
        %v3321 = vcombine.high %v3299, %v3299
        %v3322 = vcombine.high %v3306, %v3306
        %v3323 = vcombine.high %v3313, %v3313
        %v3324 = vcombine.high %v3320, %v3320
        %3333 = vst.msk [vmem:[%s218 + $0x16] sm:$0x1] %vm1726, %v3299
        %3334 = vst.msk [vmem:[%s218 + $0x36] sm:$0x1] %vm1726, %v3313
        %3335 = vst.msk [vmem:[%s218 + $0x56] sm:$0x1] %vm1726, %v3321
        %3336 = vst.msk [vmem:[%s218 + $0x76] sm:$0x1] %vm1726, %v3323
        %3337 = vst.msk [vmem:[%s218 + $0x96] sm:$0x1] %vm1726, %v3306
        %3338 = vst.msk [vmem:[%s218 + $0xb6] sm:$0x1] %vm1726, %v3320
        %3339 = vst.msk [vmem:[%s218 + $0xd6] sm:$0x1] %vm1726, %v3322
        %3340 = vst.msk [vmem:[%s218 + $0xf6] sm:$0x1] %vm1726, %v3324
        %v3341 = vld [vmem:[%s1429] sm:$0xff]
        %v3342 = vmul.f32 %v3341, 0.87096775
        %v3343 = vld [vmem:[%s1441] sm:$0xff]
        %v3344 = vmul.f32 %v3343, 0.12903225
        %v3345 = vadd.f32 %v3342, %v3344
        %v3346 = vmax.f32 %v3345, 0.0
        %v3347 = vmul.f32 %v3346, %v1666
        %v3349 = vcombine.high %v3347, %v3347
        %v3351 = vunpack.c.l.s4 1966171168
        %v3352 = vunpack.c.0.s8 %v3351
        %v3353 = vlaneseq
        %v3354 = vshrl.u32 %v3353, 7
        %v3355 = vsub.s32 %v3352, %v3354
        %v3356 = vrot.slane %v3347, %v3355
        %v3358 = vunpack.c.l.s4 1966171168
        %v3359 = vunpack.c.0.s8 %v3358
        %v3360 = vlaneseq
        %v3361 = vshrl.u32 %v3360, 7
        %v3362 = vsub.s32 %v3359, %v3361
        %v3363 = vrot.slane %v3349, %v3362
        %v3364 = vcombine.high %v3356, %v3356
        %v3365 = vcombine.high %v3363, %v3363
        %v3367 = vunpack.c.l.s4 1966171168
        %v3368 = vunpack.c.0.s8 %v3367
        %v3369 = vlaneseq
        %v3370 = vshrl.u32 %v3369, 7
        %v3371 = vsub.s32 %v3368, %v3370
        %v3372 = vrot.slane %v3356, %v3371
        %v3374 = vunpack.c.l.s4 1966171168
        %v3375 = vunpack.c.0.s8 %v3374
        %v3376 = vlaneseq
        %v3377 = vshrl.u32 %v3376, 7
        %v3378 = vsub.s32 %v3375, %v3377
        %v3379 = vrot.slane %v3363, %v3378
        %v3381 = vunpack.c.l.s4 1966171168
        %v3382 = vunpack.c.0.s8 %v3381
        %v3383 = vlaneseq
        %v3384 = vshrl.u32 %v3383, 7
        %v3385 = vsub.s32 %v3382, %v3384
        %v3386 = vrot.slane %v3364, %v3385
        %v3388 = vunpack.c.l.s4 1966171168
        %v3389 = vunpack.c.0.s8 %v3388
        %v3390 = vlaneseq
        %v3391 = vshrl.u32 %v3390, 7
        %v3392 = vsub.s32 %v3389, %v3391
        %v3393 = vrot.slane %v3365, %v3392
        %v3394 = vcombine.high %v3372, %v3372
        %v3395 = vcombine.high %v3379, %v3379
        %v3396 = vcombine.high %v3386, %v3386
        %v3397 = vcombine.high %v3393, %v3393
        %3406 = vst.msk [vmem:[%s218 + $0x17] sm:$0x1] %vm1726, %v3372
        %3407 = vst.msk [vmem:[%s218 + $0x37] sm:$0x1] %vm1726, %v3386
        %3408 = vst.msk [vmem:[%s218 + $0x57] sm:$0x1] %vm1726, %v3394
        %3409 = vst.msk [vmem:[%s218 + $0x77] sm:$0x1] %vm1726, %v3396
        %3410 = vst.msk [vmem:[%s218 + $0x97] sm:$0x1] %vm1726, %v3379
        %3411 = vst.msk [vmem:[%s218 + $0xb7] sm:$0x1] %vm1726, %v3393
        %3412 = vst.msk [vmem:[%s218 + $0xd7] sm:$0x1] %vm1726, %v3395
        %3413 = vst.msk [vmem:[%s218 + $0xf7] sm:$0x1] %vm1726, %v3397
        %v3414 = vld [vmem:[%s1429] sm:$0xff]
        %v3415 = vmul.f32 %v3414, 0.38709676
        %v3416 = vld [vmem:[%s1441] sm:$0xff]
        %v3417 = vmul.f32 %v3416, 0.61290324
        %v3418 = vadd.f32 %v3415, %v3417
        %v3419 = vmax.f32 %v3418, 0.0
        %v3420 = vmul.f32 %v3419, %v1666
        %v3422 = vcombine.high %v3420, %v3420
        %v3424 = vunpack.c.l.s4 1966171168
        %v3425 = vunpack.c.0.s8 %v3424
        %v3426 = vlaneseq
        %v3427 = vshrl.u32 %v3426, 7
        %v3428 = vsub.s32 %v3425, %v3427
        %v3429 = vrot.slane %v3420, %v3428
        %v3431 = vunpack.c.l.s4 1966171168
        %v3432 = vunpack.c.0.s8 %v3431
        %v3433 = vlaneseq
        %v3434 = vshrl.u32 %v3433, 7
        %v3435 = vsub.s32 %v3432, %v3434
        %v3436 = vrot.slane %v3422, %v3435
        %v3437 = vcombine.high %v3429, %v3429
        %v3438 = vcombine.high %v3436, %v3436
        %v3440 = vunpack.c.l.s4 1966171168
        %v3441 = vunpack.c.0.s8 %v3440
        %v3442 = vlaneseq
        %v3443 = vshrl.u32 %v3442, 7
        %v3444 = vsub.s32 %v3441, %v3443
        %v3445 = vrot.slane %v3429, %v3444
        %v3447 = vunpack.c.l.s4 1966171168
        %v3448 = vunpack.c.0.s8 %v3447
        %v3449 = vlaneseq
        %v3450 = vshrl.u32 %v3449, 7
        %v3451 = vsub.s32 %v3448, %v3450
        %v3452 = vrot.slane %v3436, %v3451
        %v3454 = vunpack.c.l.s4 1966171168
        %v3455 = vunpack.c.0.s8 %v3454
        %v3456 = vlaneseq
        %v3457 = vshrl.u32 %v3456, 7
        %v3458 = vsub.s32 %v3455, %v3457
        %v3459 = vrot.slane %v3437, %v3458
        %v3461 = vunpack.c.l.s4 1966171168
        %v3462 = vunpack.c.0.s8 %v3461
        %v3463 = vlaneseq
        %v3464 = vshrl.u32 %v3463, 7
        %v3465 = vsub.s32 %v3462, %v3464
        %v3466 = vrot.slane %v3438, %v3465
        %v3467 = vcombine.high %v3445, %v3445
        %v3468 = vcombine.high %v3452, %v3452
        %v3469 = vcombine.high %v3459, %v3459
        %v3470 = vcombine.high %v3466, %v3466
        %3479 = vst.msk [vmem:[%s218 + $0x18] sm:$0x1] %vm1726, %v3445
        %3480 = vst.msk [vmem:[%s218 + $0x38] sm:$0x1] %vm1726, %v3459
        %3481 = vst.msk [vmem:[%s218 + $0x58] sm:$0x1] %vm1726, %v3467
        %3482 = vst.msk [vmem:[%s218 + $0x78] sm:$0x1] %vm1726, %v3469
        %3483 = vst.msk [vmem:[%s218 + $0x98] sm:$0x1] %vm1726, %v3452
        %3484 = vst.msk [vmem:[%s218 + $0xb8] sm:$0x1] %vm1726, %v3466
        %3485 = vst.msk [vmem:[%s218 + $0xd8] sm:$0x1] %vm1726, %v3468
        %3486 = vst.msk [vmem:[%s218 + $0xf8] sm:$0x1] %vm1726, %v3470
        %v3487 = vld [vmem:[%s1441] sm:$0xff]
        %v3488 = vmul.f32 %v3487, 0.9032258
        %v3489 = vld [vmem:[%s1453] sm:$0xff]
        %v3490 = vmul.f32 %v3489, 0.09677419
        %v3491 = vadd.f32 %v3488, %v3490
        %v3492 = vmax.f32 %v3491, 0.0
        %v3493 = vmul.f32 %v3492, %v1666
        %v3495 = vcombine.high %v3493, %v3493
        %v3497 = vunpack.c.l.s4 1966171168
        %v3498 = vunpack.c.0.s8 %v3497
        %v3499 = vlaneseq
        %v3500 = vshrl.u32 %v3499, 7
        %v3501 = vsub.s32 %v3498, %v3500
        %v3502 = vrot.slane %v3493, %v3501
        %v3504 = vunpack.c.l.s4 1966171168
        %v3505 = vunpack.c.0.s8 %v3504
        %v3506 = vlaneseq
        %v3507 = vshrl.u32 %v3506, 7
        %v3508 = vsub.s32 %v3505, %v3507
        %v3509 = vrot.slane %v3495, %v3508
        %v3510 = vcombine.high %v3502, %v3502
        %v3511 = vcombine.high %v3509, %v3509
        %v3513 = vunpack.c.l.s4 1966171168
        %v3514 = vunpack.c.0.s8 %v3513
        %v3515 = vlaneseq
        %v3516 = vshrl.u32 %v3515, 7
        %v3517 = vsub.s32 %v3514, %v3516
        %v3518 = vrot.slane %v3502, %v3517
        %v3520 = vunpack.c.l.s4 1966171168
        %v3521 = vunpack.c.0.s8 %v3520
        %v3522 = vlaneseq
        %v3523 = vshrl.u32 %v3522, 7
        %v3524 = vsub.s32 %v3521, %v3523
        %v3525 = vrot.slane %v3509, %v3524
        %v3527 = vunpack.c.l.s4 1966171168
        %v3528 = vunpack.c.0.s8 %v3527
        %v3529 = vlaneseq
        %v3530 = vshrl.u32 %v3529, 7
        %v3531 = vsub.s32 %v3528, %v3530
        %v3532 = vrot.slane %v3510, %v3531
        %v3534 = vunpack.c.l.s4 1966171168
        %v3535 = vunpack.c.0.s8 %v3534
        %v3536 = vlaneseq
        %v3537 = vshrl.u32 %v3536, 7
        %v3538 = vsub.s32 %v3535, %v3537
        %v3539 = vrot.slane %v3511, %v3538
        %v3540 = vcombine.high %v3518, %v3518
        %v3541 = vcombine.high %v3525, %v3525
        %v3542 = vcombine.high %v3532, %v3532
        %v3543 = vcombine.high %v3539, %v3539
        %3552 = vst.msk [vmem:[%s218 + $0x19] sm:$0x1] %vm1726, %v3518
        %3553 = vst.msk [vmem:[%s218 + $0x39] sm:$0x1] %vm1726, %v3532
        %3554 = vst.msk [vmem:[%s218 + $0x59] sm:$0x1] %vm1726, %v3540
        %3555 = vst.msk [vmem:[%s218 + $0x79] sm:$0x1] %vm1726, %v3542
        %3556 = vst.msk [vmem:[%s218 + $0x99] sm:$0x1] %vm1726, %v3525
        %3557 = vst.msk [vmem:[%s218 + $0xb9] sm:$0x1] %vm1726, %v3539
        %3558 = vst.msk [vmem:[%s218 + $0xd9] sm:$0x1] %vm1726, %v3541
        %3559 = vst.msk [vmem:[%s218 + $0xf9] sm:$0x1] %vm1726, %v3543
        %v3560 = vld [vmem:[%s1441] sm:$0xff]
        %v3561 = vmul.f32 %v3560, 0.41935483
        %v3562 = vld [vmem:[%s1453] sm:$0xff]
        %v3563 = vmul.f32 %v3562, 0.58064514
        %v3564 = vadd.f32 %v3561, %v3563
        %v3565 = vmax.f32 %v3564, 0.0
        %v3566 = vmul.f32 %v3565, %v1666
        %v3568 = vcombine.high %v3566, %v3566
        %v3570 = vunpack.c.l.s4 1966171168
        %v3571 = vunpack.c.0.s8 %v3570
        %v3572 = vlaneseq
        %v3573 = vshrl.u32 %v3572, 7
        %v3574 = vsub.s32 %v3571, %v3573
        %v3575 = vrot.slane %v3566, %v3574
        %v3577 = vunpack.c.l.s4 1966171168
        %v3578 = vunpack.c.0.s8 %v3577
        %v3579 = vlaneseq
        %v3580 = vshrl.u32 %v3579, 7
        %v3581 = vsub.s32 %v3578, %v3580
        %v3582 = vrot.slane %v3568, %v3581
        %v3583 = vcombine.high %v3575, %v3575
        %v3584 = vcombine.high %v3582, %v3582
        %v3586 = vunpack.c.l.s4 1966171168
        %v3587 = vunpack.c.0.s8 %v3586
        %v3588 = vlaneseq
        %v3589 = vshrl.u32 %v3588, 7
        %v3590 = vsub.s32 %v3587, %v3589
        %v3591 = vrot.slane %v3575, %v3590
        %v3593 = vunpack.c.l.s4 1966171168
        %v3594 = vunpack.c.0.s8 %v3593
        %v3595 = vlaneseq
        %v3596 = vshrl.u32 %v3595, 7
        %v3597 = vsub.s32 %v3594, %v3596
        %v3598 = vrot.slane %v3582, %v3597
        %v3600 = vunpack.c.l.s4 1966171168
        %v3601 = vunpack.c.0.s8 %v3600
        %v3602 = vlaneseq
        %v3603 = vshrl.u32 %v3602, 7
        %v3604 = vsub.s32 %v3601, %v3603
        %v3605 = vrot.slane %v3583, %v3604
        %v3607 = vunpack.c.l.s4 1966171168
        %v3608 = vunpack.c.0.s8 %v3607
        %v3609 = vlaneseq
        %v3610 = vshrl.u32 %v3609, 7
        %v3611 = vsub.s32 %v3608, %v3610
        %v3612 = vrot.slane %v3584, %v3611
        %v3613 = vcombine.high %v3591, %v3591
        %v3614 = vcombine.high %v3598, %v3598
        %v3615 = vcombine.high %v3605, %v3605
        %v3616 = vcombine.high %v3612, %v3612
        %3625 = vst.msk [vmem:[%s218 + $0x1a] sm:$0x1] %vm1726, %v3591
        %3626 = vst.msk [vmem:[%s218 + $0x3a] sm:$0x1] %vm1726, %v3605
        %3627 = vst.msk [vmem:[%s218 + $0x5a] sm:$0x1] %vm1726, %v3613
        %3628 = vst.msk [vmem:[%s218 + $0x7a] sm:$0x1] %vm1726, %v3615
        %3629 = vst.msk [vmem:[%s218 + $0x9a] sm:$0x1] %vm1726, %v3598
        %3630 = vst.msk [vmem:[%s218 + $0xba] sm:$0x1] %vm1726, %v3612
        %3631 = vst.msk [vmem:[%s218 + $0xda] sm:$0x1] %vm1726, %v3614
        %3632 = vst.msk [vmem:[%s218 + $0xfa] sm:$0x1] %vm1726, %v3616
        %v3633 = vld [vmem:[%s1453] sm:$0xff]
        %v3634 = vmul.f32 %v3633, 0.9354839
        %v3635 = vld [vmem:[%s1465] sm:$0xff]
        %v3636 = vmul.f32 %v3635, 0.06451613
        %v3637 = vadd.f32 %v3634, %v3636
        %v3638 = vmax.f32 %v3637, 0.0
        %v3639 = vmul.f32 %v3638, %v1666
        %v3641 = vcombine.high %v3639, %v3639
        %v3643 = vunpack.c.l.s4 1966171168
        %v3644 = vunpack.c.0.s8 %v3643
        %v3645 = vlaneseq
        %v3646 = vshrl.u32 %v3645, 7
        %v3647 = vsub.s32 %v3644, %v3646
        %v3648 = vrot.slane %v3639, %v3647
        %v3650 = vunpack.c.l.s4 1966171168
        %v3651 = vunpack.c.0.s8 %v3650
        %v3652 = vlaneseq
        %v3653 = vshrl.u32 %v3652, 7
        %v3654 = vsub.s32 %v3651, %v3653
        %v3655 = vrot.slane %v3641, %v3654
        %v3656 = vcombine.high %v3648, %v3648
        %v3657 = vcombine.high %v3655, %v3655
        %v3659 = vunpack.c.l.s4 1966171168
        %v3660 = vunpack.c.0.s8 %v3659
        %v3661 = vlaneseq
        %v3662 = vshrl.u32 %v3661, 7
        %v3663 = vsub.s32 %v3660, %v3662
        %v3664 = vrot.slane %v3648, %v3663
        %v3666 = vunpack.c.l.s4 1966171168
        %v3667 = vunpack.c.0.s8 %v3666
        %v3668 = vlaneseq
        %v3669 = vshrl.u32 %v3668, 7
        %v3670 = vsub.s32 %v3667, %v3669
        %v3671 = vrot.slane %v3655, %v3670
        %v3673 = vunpack.c.l.s4 1966171168
        %v3674 = vunpack.c.0.s8 %v3673
        %v3675 = vlaneseq
        %v3676 = vshrl.u32 %v3675, 7
        %v3677 = vsub.s32 %v3674, %v3676
        %v3678 = vrot.slane %v3656, %v3677
        %v3680 = vunpack.c.l.s4 1966171168
        %v3681 = vunpack.c.0.s8 %v3680
        %v3682 = vlaneseq
        %v3683 = vshrl.u32 %v3682, 7
        %v3684 = vsub.s32 %v3681, %v3683
        %v3685 = vrot.slane %v3657, %v3684
        %v3686 = vcombine.high %v3664, %v3664
        %v3687 = vcombine.high %v3671, %v3671
        %v3688 = vcombine.high %v3678, %v3678
        %v3689 = vcombine.high %v3685, %v3685
        %3698 = vst.msk [vmem:[%s218 + $0x1b] sm:$0x1] %vm1726, %v3664
        %3699 = vst.msk [vmem:[%s218 + $0x3b] sm:$0x1] %vm1726, %v3678
        %3700 = vst.msk [vmem:[%s218 + $0x5b] sm:$0x1] %vm1726, %v3686
        %3701 = vst.msk [vmem:[%s218 + $0x7b] sm:$0x1] %vm1726, %v3688
        %3702 = vst.msk [vmem:[%s218 + $0x9b] sm:$0x1] %vm1726, %v3671
        %3703 = vst.msk [vmem:[%s218 + $0xbb] sm:$0x1] %vm1726, %v3685
        %3704 = vst.msk [vmem:[%s218 + $0xdb] sm:$0x1] %vm1726, %v3687
        %3705 = vst.msk [vmem:[%s218 + $0xfb] sm:$0x1] %vm1726, %v3689
        %v3706 = vld [vmem:[%s1453] sm:$0xff]
        %v3707 = vmul.f32 %v3706, 0.4516129
        %v3708 = vld [vmem:[%s1465] sm:$0xff]
        %v3709 = vmul.f32 %v3708, 0.5483871
        %v3710 = vadd.f32 %v3707, %v3709
        %v3711 = vmax.f32 %v3710, 0.0
        %v3712 = vmul.f32 %v3711, %v1666
        %v3714 = vcombine.high %v3712, %v3712
        %v3716 = vunpack.c.l.s4 1966171168
        %v3717 = vunpack.c.0.s8 %v3716
        %v3718 = vlaneseq
        %v3719 = vshrl.u32 %v3718, 7
        %v3720 = vsub.s32 %v3717, %v3719
        %v3721 = vrot.slane %v3712, %v3720
        %v3723 = vunpack.c.l.s4 1966171168
        %v3724 = vunpack.c.0.s8 %v3723
        %v3725 = vlaneseq
        %v3726 = vshrl.u32 %v3725, 7
        %v3727 = vsub.s32 %v3724, %v3726
        %v3728 = vrot.slane %v3714, %v3727
        %v3729 = vcombine.high %v3721, %v3721
        %v3730 = vcombine.high %v3728, %v3728
        %v3732 = vunpack.c.l.s4 1966171168
        %v3733 = vunpack.c.0.s8 %v3732
        %v3734 = vlaneseq
        %v3735 = vshrl.u32 %v3734, 7
        %v3736 = vsub.s32 %v3733, %v3735
        %v3737 = vrot.slane %v3721, %v3736
        %v3739 = vunpack.c.l.s4 1966171168
        %v3740 = vunpack.c.0.s8 %v3739
        %v3741 = vlaneseq
        %v3742 = vshrl.u32 %v3741, 7
        %v3743 = vsub.s32 %v3740, %v3742
        %v3744 = vrot.slane %v3728, %v3743
        %v3746 = vunpack.c.l.s4 1966171168
        %v3747 = vunpack.c.0.s8 %v3746
        %v3748 = vlaneseq
        %v3749 = vshrl.u32 %v3748, 7
        %v3750 = vsub.s32 %v3747, %v3749
        %v3751 = vrot.slane %v3729, %v3750
        %v3753 = vunpack.c.l.s4 1966171168
        %v3754 = vunpack.c.0.s8 %v3753
        %v3755 = vlaneseq
        %v3756 = vshrl.u32 %v3755, 7
        %v3757 = vsub.s32 %v3754, %v3756
        %v3758 = vrot.slane %v3730, %v3757
        %v3759 = vcombine.high %v3737, %v3737
        %v3760 = vcombine.high %v3744, %v3744
        %v3761 = vcombine.high %v3751, %v3751
        %v3762 = vcombine.high %v3758, %v3758
        %3771 = vst.msk [vmem:[%s218 + $0x1c] sm:$0x1] %vm1726, %v3737
        %3772 = vst.msk [vmem:[%s218 + $0x3c] sm:$0x1] %vm1726, %v3751
        %3773 = vst.msk [vmem:[%s218 + $0x5c] sm:$0x1] %vm1726, %v3759
        %3774 = vst.msk [vmem:[%s218 + $0x7c] sm:$0x1] %vm1726, %v3761
        %3775 = vst.msk [vmem:[%s218 + $0x9c] sm:$0x1] %vm1726, %v3744
        %3776 = vst.msk [vmem:[%s218 + $0xbc] sm:$0x1] %vm1726, %v3758
        %3777 = vst.msk [vmem:[%s218 + $0xdc] sm:$0x1] %vm1726, %v3760
        %3778 = vst.msk [vmem:[%s218 + $0xfc] sm:$0x1] %vm1726, %v3762
        %v3779 = vld [vmem:[%s1465] sm:$0xff]
        %v3780 = vmul.f32 %v3779, 0.9677419
        %v3781 = vld [vmem:[%s1477] sm:$0xff]
        %v3782 = vmul.f32 %v3781, 0.032258064
        %v3783 = vadd.f32 %v3780, %v3782
        %v3784 = vmax.f32 %v3783, 0.0
        %v3785 = vmul.f32 %v3784, %v1666
        %v3787 = vcombine.high %v3785, %v3785
        %v3789 = vunpack.c.l.s4 1966171168
        %v3790 = vunpack.c.0.s8 %v3789
        %v3791 = vlaneseq
        %v3792 = vshrl.u32 %v3791, 7
        %v3793 = vsub.s32 %v3790, %v3792
        %v3794 = vrot.slane %v3785, %v3793
        %v3796 = vunpack.c.l.s4 1966171168
        %v3797 = vunpack.c.0.s8 %v3796
        %v3798 = vlaneseq
        %v3799 = vshrl.u32 %v3798, 7
        %v3800 = vsub.s32 %v3797, %v3799
        %v3801 = vrot.slane %v3787, %v3800
        %v3802 = vcombine.high %v3794, %v3794
        %v3803 = vcombine.high %v3801, %v3801
        %v3805 = vunpack.c.l.s4 1966171168
        %v3806 = vunpack.c.0.s8 %v3805
        %v3807 = vlaneseq
        %v3808 = vshrl.u32 %v3807, 7
        %v3809 = vsub.s32 %v3806, %v3808
        %v3810 = vrot.slane %v3794, %v3809
        %v3812 = vunpack.c.l.s4 1966171168
        %v3813 = vunpack.c.0.s8 %v3812
        %v3814 = vlaneseq
        %v3815 = vshrl.u32 %v3814, 7
        %v3816 = vsub.s32 %v3813, %v3815
        %v3817 = vrot.slane %v3801, %v3816
        %v3819 = vunpack.c.l.s4 1966171168
        %v3820 = vunpack.c.0.s8 %v3819
        %v3821 = vlaneseq
        %v3822 = vshrl.u32 %v3821, 7
        %v3823 = vsub.s32 %v3820, %v3822
        %v3824 = vrot.slane %v3802, %v3823
        %v3826 = vunpack.c.l.s4 1966171168
        %v3827 = vunpack.c.0.s8 %v3826
        %v3828 = vlaneseq
        %v3829 = vshrl.u32 %v3828, 7
        %v3830 = vsub.s32 %v3827, %v3829
        %v3831 = vrot.slane %v3803, %v3830
        %v3832 = vcombine.high %v3810, %v3810
        %v3833 = vcombine.high %v3817, %v3817
        %v3834 = vcombine.high %v3824, %v3824
        %v3835 = vcombine.high %v3831, %v3831
        %3844 = vst.msk [vmem:[%s218 + $0x1d] sm:$0x1] %vm1726, %v3810
        %3845 = vst.msk [vmem:[%s218 + $0x3d] sm:$0x1] %vm1726, %v3824
        %3846 = vst.msk [vmem:[%s218 + $0x5d] sm:$0x1] %vm1726, %v3832
        %3847 = vst.msk [vmem:[%s218 + $0x7d] sm:$0x1] %vm1726, %v3834
        %3848 = vst.msk [vmem:[%s218 + $0x9d] sm:$0x1] %vm1726, %v3817
        %3849 = vst.msk [vmem:[%s218 + $0xbd] sm:$0x1] %vm1726, %v3831
        %3850 = vst.msk [vmem:[%s218 + $0xdd] sm:$0x1] %vm1726, %v3833
        %3851 = vst.msk [vmem:[%s218 + $0xfd] sm:$0x1] %vm1726, %v3835
        %v3852 = vld [vmem:[%s1465] sm:$0xff]
        %v3853 = vmul.f32 %v3852, 0.48387095
        %v3854 = vld [vmem:[%s1477] sm:$0xff]
        %v3855 = vmul.f32 %v3854, 0.516129
        %v3856 = vadd.f32 %v3853, %v3855
        %v3857 = vmax.f32 %v3856, 0.0
        %v3858 = vmul.f32 %v3857, %v1666
        %v3860 = vcombine.high %v3858, %v3858
        %v3862 = vunpack.c.l.s4 1966171168
        %v3863 = vunpack.c.0.s8 %v3862
        %v3864 = vlaneseq
        %v3865 = vshrl.u32 %v3864, 7
        %v3866 = vsub.s32 %v3863, %v3865
        %v3867 = vrot.slane %v3858, %v3866
        %v3869 = vunpack.c.l.s4 1966171168
        %v3870 = vunpack.c.0.s8 %v3869
        %v3871 = vlaneseq
        %v3872 = vshrl.u32 %v3871, 7
        %v3873 = vsub.s32 %v3870, %v3872
        %v3874 = vrot.slane %v3860, %v3873
        %v3875 = vcombine.high %v3867, %v3867
        %v3876 = vcombine.high %v3874, %v3874
        %v3878 = vunpack.c.l.s4 1966171168
        %v3879 = vunpack.c.0.s8 %v3878
        %v3880 = vlaneseq
        %v3881 = vshrl.u32 %v3880, 7
        %v3882 = vsub.s32 %v3879, %v3881
        %v3883 = vrot.slane %v3867, %v3882
        %v3885 = vunpack.c.l.s4 1966171168
        %v3886 = vunpack.c.0.s8 %v3885
        %v3887 = vlaneseq
        %v3888 = vshrl.u32 %v3887, 7
        %v3889 = vsub.s32 %v3886, %v3888
        %v3890 = vrot.slane %v3874, %v3889
        %v3892 = vunpack.c.l.s4 1966171168
        %v3893 = vunpack.c.0.s8 %v3892
        %v3894 = vlaneseq
        %v3895 = vshrl.u32 %v3894, 7
        %v3896 = vsub.s32 %v3893, %v3895
        %v3897 = vrot.slane %v3875, %v3896
        %v3899 = vunpack.c.l.s4 1966171168
        %v3900 = vunpack.c.0.s8 %v3899
        %v3901 = vlaneseq
        %v3902 = vshrl.u32 %v3901, 7
        %v3903 = vsub.s32 %v3900, %v3902
        %v3904 = vrot.slane %v3876, %v3903
        %v3905 = vcombine.high %v3883, %v3883
        %v3906 = vcombine.high %v3890, %v3890
        %v3907 = vcombine.high %v3897, %v3897
        %v3908 = vcombine.high %v3904, %v3904
        %3917 = vst.msk [vmem:[%s218 + $0x1e] sm:$0x1] %vm1726, %v3883
        %3918 = vst.msk [vmem:[%s218 + $0x3e] sm:$0x1] %vm1726, %v3897
        %3919 = vst.msk [vmem:[%s218 + $0x5e] sm:$0x1] %vm1726, %v3905
        %3920 = vst.msk [vmem:[%s218 + $0x7e] sm:$0x1] %vm1726, %v3907
        %3921 = vst.msk [vmem:[%s218 + $0x9e] sm:$0x1] %vm1726, %v3890
        %3922 = vst.msk [vmem:[%s218 + $0xbe] sm:$0x1] %vm1726, %v3904
        %3923 = vst.msk [vmem:[%s218 + $0xde] sm:$0x1] %vm1726, %v3906
        %3924 = vst.msk [vmem:[%s218 + $0xfe] sm:$0x1] %vm1726, %v3908
        %v3925 = vld [vmem:[%s1477] sm:$0xff]
        %v3926 = vmax.f32 %v3925, 0.0
        %v3927 = vmul.f32 %v3926, %v1666
        %v3929 = vcombine.high %v3927, %v3927
        %v3931 = vunpack.c.l.s4 1966171168
        %v3932 = vunpack.c.0.s8 %v3931
        %v3933 = vlaneseq
        %v3934 = vshrl.u32 %v3933, 7
        %v3935 = vsub.s32 %v3932, %v3934
        %v3936 = vrot.slane %v3927, %v3935
        %v3938 = vunpack.c.l.s4 1966171168
        %v3939 = vunpack.c.0.s8 %v3938
        %v3940 = vlaneseq
        %v3941 = vshrl.u32 %v3940, 7
        %v3942 = vsub.s32 %v3939, %v3941
        %v3943 = vrot.slane %v3929, %v3942
        %v3944 = vcombine.high %v3936, %v3936
        %v3945 = vcombine.high %v3943, %v3943
        %v3947 = vunpack.c.l.s4 1966171168
        %v3948 = vunpack.c.0.s8 %v3947
        %v3949 = vlaneseq
        %v3950 = vshrl.u32 %v3949, 7
        %v3951 = vsub.s32 %v3948, %v3950
        %v3952 = vrot.slane %v3936, %v3951
        %v3954 = vunpack.c.l.s4 1966171168
        %v3955 = vunpack.c.0.s8 %v3954
        %v3956 = vlaneseq
        %v3957 = vshrl.u32 %v3956, 7
        %v3958 = vsub.s32 %v3955, %v3957
        %v3959 = vrot.slane %v3943, %v3958
        %v3961 = vunpack.c.l.s4 1966171168
        %v3962 = vunpack.c.0.s8 %v3961
        %v3963 = vlaneseq
        %v3964 = vshrl.u32 %v3963, 7
        %v3965 = vsub.s32 %v3962, %v3964
        %v3966 = vrot.slane %v3944, %v3965
        %v3968 = vunpack.c.l.s4 1966171168
        %v3969 = vunpack.c.0.s8 %v3968
        %v3970 = vlaneseq
        %v3971 = vshrl.u32 %v3970, 7
        %v3972 = vsub.s32 %v3969, %v3971
        %v3973 = vrot.slane %v3945, %v3972
        %v3974 = vcombine.high %v3952, %v3952
        %v3975 = vcombine.high %v3959, %v3959
        %v3976 = vcombine.high %v3966, %v3966
        %v3977 = vcombine.high %v3973, %v3973
        %3986 = vst.msk [vmem:[%s218 + $0x1f] sm:$0x1] %vm1726, %v3952
        %3987 = vst.msk [vmem:[%s218 + $0x3f] sm:$0x1] %vm1726, %v3966
        %3988 = vst.msk [vmem:[%s218 + $0x5f] sm:$0x1] %vm1726, %v3974
        %3989 = vst.msk [vmem:[%s218 + $0x7f] sm:$0x1] %vm1726, %v3976
        %3990 = vst.msk [vmem:[%s218 + $0x9f] sm:$0x1] %vm1726, %v3959
        %3991 = vst.msk [vmem:[%s218 + $0xbf] sm:$0x1] %vm1726, %v3973
        %3992 = vst.msk [vmem:[%s218 + $0xdf] sm:$0x1] %vm1726, %v3975
        %3993 = vst.msk [vmem:[%s218 + $0xff] sm:$0x1] %vm1726, %v3977
        %s3994 = sand.u32 %s137, 1
        %s3995 = scalar_lea.sflag [#allocation4], %s3994
        %s3996 = sand.u32 %s137, 1
        %s3997 = smul.addr %s3996, 256
        %s3998 = scalar_lea.vmem [#allocation3], %s3997
        // Predicated region
        $region41: #{tpu_custom_call.1} parent=39 // pred_check
          %p3999 = pneg %p147
        $region42: #{tpu_custom_call.1} parent=39 // pred_check_branch
          %4001 = sbr.rel (%p3999) target = $region44
        $region43: #{tpu_custom_call.1} parent=39 // pred_region
          %s4003 = ssub.s32 4096, 4096
          %4004 = vsyncadd %s3995, %s4003
          %s4005 = smul.addr %s19, 32
          %s4006 = smul.addr %s4005, 128
          %s4007 = scalar_lea.hbm %s5, %s4006
          %s4008 = sshll.u32 %s3998, 4
          %s4009 = int_to_ptr.vmem [resolvable:$true] %s4008
          %4014 = dma.vmem_to_hbm [thread:$0]  %s4009, 4096, %s4007, %s3995, 128, 128, 8
        $region44: #{tpu_custom_call.1} parent=39 // pred_fallthru
          _
      $region40: #{tpu_custom_call.1} parent=5 // pred_fallthru
        _
      %p4015 = scmp.le.s32.totalorder 2, %s14
      // Predicated region
      $region45: #{tpu_custom_call.1} parent=5 // pred_check
        %p4016 = pneg %p4015
      $region46: #{tpu_custom_call.1} parent=5 // pred_check_branch
        %4018 = sbr.rel (%p4016) target = $region48
      $region47: #{tpu_custom_call.1} parent=5 // pred_region
        %s4019 = ssub.s32 %s14, 2
        // Predicated region
        $region49: #{tpu_custom_call.1} parent=47 // pred_check
          %p4020 = pneg %p153
        $region50: #{tpu_custom_call.1} parent=47 // pred_check_branch
          %4022 = sbr.rel (%p4020) target = $region52
        $region51: #{tpu_custom_call.1} parent=47 // pred_region
          %s4023 = sand.u32 %s138, 1
          %s4024 = scalar_lea.sflag [#allocation4], %s4023
          %s4025 = sand.u32 %s138, 1
          %s4026 = smul.addr %s4025, 256
          %s4027 = scalar_lea.vmem [#allocation3], %s4026
          %4028 = dma.done %s4024, 4096
        $region52: #{tpu_custom_call.1} parent=47 // pred_fallthru
          _
      $region48: #{tpu_custom_call.1} parent=5 // pred_fallthru
        _
    $region6: #{tpu_custom_call.1} parent=1 // loop_footer
      %s18 = sadd.s32 1, %s14
    $region7: #{tpu_custom_call.1} parent=1 // loop_footer_branch
      %13 = sbr.rel target = $region3
    $region8: #{tpu_custom_call.1} parent=1 // loop_exit
      _
    %4029 = vsyncpa [#allocation4], 1
    %s4030 = scalar_lea.sflag [#allocation4], 1
    %4031 = vsyncpa %s4030, 1

</llo_original>
